<compile_context>
chip_gen: v7x
topology: tpu7x:2x2x1
jax: 0.10.0
libtpu: 0.0.40
codegen_flags: <defaults>
</compile_context>

<pallas_src>
import functools

import jax
import jax.numpy as jnp
from jax.experimental import pallas as pl
from jax.experimental.pallas import tpu as pltpu


def classifier_kernel(x_ref,
                      w1_ref, b1_ref,
                      w2_ref, b2_ref,
                      w3_ref, b3_ref,
                      w__ref, b__ref,
                      w4_ref, b4_ref,
                      o_ref, *, groups, group_batch):
    # x_ref: (TILE_M, in_dim) f32 tile = `groups` independent sample groups of
    # `group_batch` rows each.  Weights (bf16) / biases (f32) are VMEM-resident
    # across the whole grid (constant index_maps).
    h = x_ref[...].astype(jnp.bfloat16)

    def dense(h_bf16, w_ref, b_ref):
        # bf16 x bf16 MXU matmul, f32 accumulation; f32 bias.
        return jnp.dot(h_bf16, w_ref[...],
                       preferred_element_type=jnp.float32) + b_ref[...]

    def dense_relu(h_bf16, w_ref, b_ref):
        # Keep inter-layer activations in bf16 (single cast per layer).
        return jnp.maximum(dense(h_bf16, w_ref, b_ref), 0.0).astype(jnp.bfloat16)

    h = dense_relu(h, w1_ref, b1_ref)
    h = dense_relu(h, w2_ref, b2_ref)
    h = dense_relu(h, w3_ref, b3_ref)
    h = dense_relu(h, w__ref, b__ref)
    logits = dense(h, w4_ref, b4_ref)          # (TILE_M, OUT_PAD) f32

    # softmax over dim=0 of each original (group_batch, out) forward call.
    out_pad = logits.shape[-1]
    lg = logits.reshape(groups, group_batch, out_pad)
    m = jnp.max(lg, axis=1, keepdims=True)
    e = jnp.exp(lg - m)
    denom = jnp.sum(e, axis=1, keepdims=True)
    probs = e / denom                          # exact divide: rows sum to 1
    o_ref[...] = probs.reshape(logits.shape).astype(o_ref.dtype)


def classifier_forward_batched(xs, params, groups_per_step=32):
    """xs: (N, B, input_size).  Runs the classifier independently on each
    (B, input_size) group (softmax over that group's dim 0).  Weights are
    DMA'd once and stay VMEM-resident; up to `groups_per_step` groups are
    processed per grid step (TILE_M = G*B rows through the MXU)."""
    (w1, b1, w2, b2, w3, b3, w_, b_, w4, b4) = params
    N, B, in_dim = xs.shape
    out_dim = w4.shape[1]

    # --- lane-dense final layer: zero-pad fc4 to a multiple of 128 columns ---
    OUT_PAD = max(128, ((out_dim + 127) // 128) * 128)
    w4p = jnp.pad(w4, ((0, 0), (0, OUT_PAD - out_dim)))
    b4p = jnp.pad(b4, ((0, 0), (0, OUT_PAD - out_dim)))

    # --- choose groups per step (TILE_M = G*B; 256 rows fills the v6e/v7x MXU) ---
    G = max(1, min(groups_per_step, N))
    if (G * B) % 8 != 0:
        G = N                      # fall back to a single full-extent tile
    N_pad = pl.cdiv(N, G) * G
    if N_pad != N:                 # pad with dummy groups (discarded below)
        xs = jnp.concatenate(
            [xs, jnp.zeros((N_pad - N, B, in_dim), xs.dtype)], axis=0)
    TILE_M = G * B
    M_total = N_pad * B
    num_tiles = N_pad // G
    x_flat = xs.reshape(M_total, in_dim)

    weights = (w1, b1, w2, b2, w3, b3, w_, b_, w4p, b4p)
    # Full-array weight blocks with constant index_map -> fetched once, resident.
    weight_specs = [pl.BlockSpec(tuple(p.shape), lambda i: (0, 0)) for p in weights]
    x_spec = pl.BlockSpec((TILE_M, in_dim), lambda i: (i, 0))
    o_spec = pl.BlockSpec((TILE_M, OUT_PAD), lambda i: (i, 0))

    flops = 2 * M_total * (in_dim * 256 + 256 * 1024 + 1024 * 1024
                           + 1024 * 256 + 256 * OUT_PAD)
    weight_bytes = sum(int(p.size) * p.dtype.itemsize for p in weights)
    io_bytes = int(x_flat.size) * x_flat.dtype.itemsize + M_total * OUT_PAD * 4
    cost = pl.CostEstimate(
        flops=int(flops),
        transcendentals=int(M_total * OUT_PAD),
        bytes_accessed=int(weight_bytes + io_bytes),
    )

    kernel = functools.partial(classifier_kernel, groups=G, group_batch=B)
    out_flat = pl.pallas_call(
        kernel,
        out_shape=jax.ShapeDtypeStruct((M_total, OUT_PAD), jnp.float32),
        grid=(num_tiles,),
        in_specs=[x_spec] + weight_specs,
        out_specs=o_spec,
        compiler_params=pltpu.CompilerParams(
            dimension_semantics=("parallel",)),
        cost_estimate=cost,
    )(x_flat, *weights)

    return out_flat.reshape(N_pad, B, OUT_PAD)[:N, :, :out_dim]


def classifier_forward(x, params):
    """Exact module semantics: x is (batch, input_size), softmax over dim=0."""
    return classifier_forward_batched(x[None], params)[0]


def init_params(key, input_size, output_size, weight_dtype=jnp.bfloat16):
    # Weights in bf16 (HBM-traffic optimization; results differ from an f32
    # nn.Linear stack at ~1e-3 relative), biases in f32.
    dims = [(input_size, 256), (256, 1024), (1024, 1024), (1024, 256),
            (256, output_size)]
    params = []
    for fan_in, fan_out in dims:
        kw, kb, key = jax.random.split(key, 3)
        bound = float(1.0 / (fan_in ** 0.5))
        w = jax.random.uniform(kw, (fan_in, fan_out), jnp.float32,
                               -bound, bound).astype(weight_dtype)
        b = jax.random.uniform(kb, (1, fan_out), jnp.float32, -bound, bound)
        params += [w, b]
    return tuple(params)


def reference_forward(x, params):
    # Pure-JAX reference mirroring the same bf16-weight / f32-accumulate compute.
    (w1, b1, w2, b2, w3, b3, w_, b_, w4, b4) = params

    def dense(h, w, b):
        return jnp.dot(h.astype(w.dtype), w,
                       preferred_element_type=jnp.float32) + b

    h = jax.nn.relu(dense(x, w1, b1))
    h = jax.nn.relu(dense(h, w2, b2))
    h = jax.nn.relu(dense(h, w3, b3))
    h = jax.nn.relu(dense(h, w_, b_))
    return jax.nn.softmax(dense(h, w4, b4), axis=0)


if __name__ == "__main__":
    key = jax.random.PRNGKey(0)
    input_size, output_size, batch = 32, 8, 8
    n_groups = 48   # not a multiple of groups_per_step -> exercises padding + multi-tile grid

    kx, kxs, kp = jax.random.split(key, 3)
    x = jax.random.normal(kx, (batch, input_size), jnp.float32)
    xs = jax.random.normal(kxs, (n_groups, batch, input_size), jnp.float32)
    params = init_params(kp, input_size, output_size)

    # Single-call path (exact module semantics: softmax over dim=0).
    out = jax.block_until_ready(classifier_forward(x, params))
    ref = reference_forward(x, params)
    assert out.shape == (batch, output_size)
    assert bool(jnp.allclose(out, ref, atol=2e-3, rtol=2e-2)), "single-call mismatch"
    assert bool(jnp.allclose(jnp.sum(out, axis=0), 1.0, atol=1e-4)), \
        "softmax not normalized over dim=0"

    # Batched-grid path: 32 groups per step (TILE_M=256), weights resident in VMEM.
    outs = jax.block_until_ready(classifier_forward_batched(xs, params))
    refs = jax.vmap(reference_forward, in_axes=(0, None))(xs, params)
    assert outs.shape == (n_groups, batch, output_size)
    assert bool(jnp.allclose(outs, refs, atol=2e-3, rtol=2e-2)), "batched mismatch"

    print("KERNEL_OK")
</pallas_src>

<mosaic_0001>
module attributes {stable_mosaic.version = 11 : i64} {
  func.func @classifier_kernel(%arg0: i32, %arg1: memref<8x32xf32, #tpu.memory_space<vmem>>, %arg2: memref<32x256xbf16, #tpu.memory_space<vmem>>, %arg3: memref<1x256xf32, #tpu.memory_space<vmem>>, %arg4: memref<256x1024xbf16, #tpu.memory_space<vmem>>, %arg5: memref<1x1024xf32, #tpu.memory_space<vmem>>, %arg6: memref<1024x1024xbf16, #tpu.memory_space<vmem>>, %arg7: memref<1x1024xf32, #tpu.memory_space<vmem>>, %arg8: memref<1024x256xbf16, #tpu.memory_space<vmem>>, %arg9: memref<1x256xf32, #tpu.memory_space<vmem>>, %arg10: memref<256x128xbf16, #tpu.memory_space<vmem>>, %arg11: memref<1x128xf32, #tpu.memory_space<vmem>>, %arg12: memref<8x128xf32, #tpu.memory_space<vmem>>) attributes {dimension_semantics = [#tpu.dimension_semantics<parallel>], iteration_bounds = array<i64: 1>, scalar_prefetch = 0 : i64, scratch_operands = 0 : i64, tpu.core_type = #tpu.core_type<tc>, window_params = [{transform_indices = @transform_0, window_bounds = array<i64: 8, 32>}, {pipeline_mode = #tpu.pipeline_mode<synchronous>, transform_indices = @transform_1, window_bounds = array<i64: 32, 256>}, {pipeline_mode = #tpu.pipeline_mode<synchronous>, transform_indices = @transform_2, window_bounds = array<i64: 1, 256>}, {pipeline_mode = #tpu.pipeline_mode<synchronous>, transform_indices = @transform_3, window_bounds = array<i64: 256, 1024>}, {pipeline_mode = #tpu.pipeline_mode<synchronous>, transform_indices = @transform_4, window_bounds = array<i64: 1, 1024>}, {pipeline_mode = #tpu.pipeline_mode<synchronous>, transform_indices = @transform_5, window_bounds = array<i64: 1024, 1024>}, {pipeline_mode = #tpu.pipeline_mode<synchronous>, transform_indices = @transform_6, window_bounds = array<i64: 1, 1024>}, {pipeline_mode = #tpu.pipeline_mode<synchronous>, transform_indices = @transform_7, window_bounds = array<i64: 1024, 256>}, {pipeline_mode = #tpu.pipeline_mode<synchronous>, transform_indices = @transform_8, window_bounds = array<i64: 1, 256>}, {pipeline_mode = #tpu.pipeline_mode<synchronous>, transform_indices = @transform_9, window_bounds = array<i64: 256, 128>}, {pipeline_mode = #tpu.pipeline_mode<synchronous>, transform_indices = @transform_10, window_bounds = array<i64: 1, 128>}, {transform_indices = @transform_11, window_bounds = array<i64: 8, 128>}]} {
    %c0 = arith.constant 0 : index
    %c0_0 = arith.constant 0 : index
    %0 = vector.load %arg1[%c0, %c0_0] : memref<8x32xf32, #tpu.memory_space<vmem>>, vector<8x32xf32>
    %1 = arith.truncf %0 : vector<8x32xf32> to vector<8x32xbf16>
    %c0_1 = arith.constant 0 : index
    %c0_2 = arith.constant 0 : index
    %2 = vector.load %arg2[%c0_1, %c0_2] : memref<32x256xbf16, #tpu.memory_space<vmem>>, vector<32x256xbf16>
    %cst = arith.constant dense<0.000000e+00> : vector<8x256xf32>
    %3 = tpu.matmul %1, %2, %cst {dimension_numbers = #tpu.dot_dimension_numbers<[1], [0], [0], [1], [0, 0, 1, 1], [], []>} : vector<8x32xbf16>, vector<32x256xbf16>, vector<8x256xf32> -> vector<8x256xf32>
    %c0_3 = arith.constant 0 : index
    %c0_4 = arith.constant 0 : index
    %4 = vector.load %arg3[%c0_3, %c0_4] : memref<1x256xf32, #tpu.memory_space<vmem>>, vector<1x256xf32>
    %5 = vector.broadcast %4 : vector<1x256xf32> to vector<8x256xf32>
    %6 = arith.addf %3, %5 : vector<8x256xf32>
    %cst_5 = arith.constant 0.000000e+00 : f32
    %7 = vector.broadcast %cst_5 : f32 to vector<8x256xf32>
    %8 = arith.maximumf %6, %7 : vector<8x256xf32>
    %9 = arith.truncf %8 : vector<8x256xf32> to vector<8x256xbf16>
    %c0_6 = arith.constant 0 : index
    %c0_7 = arith.constant 0 : index
    %10 = vector.load %arg4[%c0_6, %c0_7] : memref<256x1024xbf16, #tpu.memory_space<vmem>>, vector<256x1024xbf16>
    %cst_8 = arith.constant dense<0.000000e+00> : vector<8x1024xf32>
    %11 = tpu.matmul %9, %10, %cst_8 {dimension_numbers = #tpu.dot_dimension_numbers<[1], [0], [0], [1], [0, 0, 1, 1], [], []>} : vector<8x256xbf16>, vector<256x1024xbf16>, vector<8x1024xf32> -> vector<8x1024xf32>
    %c0_9 = arith.constant 0 : index
    %c0_10 = arith.constant 0 : index
    %12 = vector.load %arg5[%c0_9, %c0_10] : memref<1x1024xf32, #tpu.memory_space<vmem>>, vector<1x1024xf32>
    %13 = vector.broadcast %12 : vector<1x1024xf32> to vector<8x1024xf32>
    %14 = arith.addf %11, %13 : vector<8x1024xf32>
    %cst_11 = arith.constant 0.000000e+00 : f32
    %15 = vector.broadcast %cst_11 : f32 to vector<8x1024xf32>
    %16 = arith.maximumf %14, %15 : vector<8x1024xf32>
    %17 = arith.truncf %16 : vector<8x1024xf32> to vector<8x1024xbf16>
    %c0_12 = arith.constant 0 : index
    %c0_13 = arith.constant 0 : index
    %18 = vector.load %arg6[%c0_12, %c0_13] : memref<1024x1024xbf16, #tpu.memory_space<vmem>>, vector<1024x1024xbf16>
    %cst_14 = arith.constant dense<0.000000e+00> : vector<8x1024xf32>
    %19 = tpu.matmul %17, %18, %cst_14 {dimension_numbers = #tpu.dot_dimension_numbers<[1], [0], [0], [1], [0, 0, 1, 1], [], []>} : vector<8x1024xbf16>, vector<1024x1024xbf16>, vector<8x1024xf32> -> vector<8x1024xf32>
    %c0_15 = arith.constant 0 : index
    %c0_16 = arith.constant 0 : index
    %20 = vector.load %arg7[%c0_15, %c0_16] : memref<1x1024xf32, #tpu.memory_space<vmem>>, vector<1x1024xf32>
    %21 = vector.broadcast %20 : vector<1x1024xf32> to vector<8x1024xf32>
    %22 = arith.addf %19, %21 : vector<8x1024xf32>
    %cst_17 = arith.constant 0.000000e+00 : f32
    %23 = vector.broadcast %cst_17 : f32 to vector<8x1024xf32>
    %24 = arith.maximumf %22, %23 : vector<8x1024xf32>
    %25 = arith.truncf %24 : vector<8x1024xf32> to vector<8x1024xbf16>
    %c0_18 = arith.constant 0 : index
    %c0_19 = arith.constant 0 : index
    %26 = vector.load %arg8[%c0_18, %c0_19] : memref<1024x256xbf16, #tpu.memory_space<vmem>>, vector<1024x256xbf16>
    %cst_20 = arith.constant dense<0.000000e+00> : vector<8x256xf32>
    %27 = tpu.matmul %25, %26, %cst_20 {dimension_numbers = #tpu.dot_dimension_numbers<[1], [0], [0], [1], [0, 0, 1, 1], [], []>} : vector<8x1024xbf16>, vector<1024x256xbf16>, vector<8x256xf32> -> vector<8x256xf32>
    %c0_21 = arith.constant 0 : index
    %c0_22 = arith.constant 0 : index
    %28 = vector.load %arg9[%c0_21, %c0_22] : memref<1x256xf32, #tpu.memory_space<vmem>>, vector<1x256xf32>
    %29 = vector.broadcast %28 : vector<1x256xf32> to vector<8x256xf32>
    %30 = arith.addf %27, %29 : vector<8x256xf32>
    %cst_23 = arith.constant 0.000000e+00 : f32
    %31 = vector.broadcast %cst_23 : f32 to vector<8x256xf32>
    %32 = arith.maximumf %30, %31 : vector<8x256xf32>
    %33 = arith.truncf %32 : vector<8x256xf32> to vector<8x256xbf16>
    %c0_24 = arith.constant 0 : index
    %c0_25 = arith.constant 0 : index
    %34 = vector.load %arg10[%c0_24, %c0_25] : memref<256x128xbf16, #tpu.memory_space<vmem>>, vector<256x128xbf16>
    %cst_26 = arith.constant dense<0.000000e+00> : vector<8x128xf32>
    %35 = tpu.matmul %33, %34, %cst_26 {dimension_numbers = #tpu.dot_dimension_numbers<[1], [0], [0], [1], [0, 0, 1, 1], [], []>} : vector<8x256xbf16>, vector<256x128xbf16>, vector<8x128xf32> -> vector<8x128xf32>
    %c0_27 = arith.constant 0 : index
    %c0_28 = arith.constant 0 : index
    %36 = vector.load %arg11[%c0_27, %c0_28] : memref<1x128xf32, #tpu.memory_space<vmem>>, vector<1x128xf32>
    %37 = vector.broadcast %36 : vector<1x128xf32> to vector<8x128xf32>
    %38 = arith.addf %35, %37 : vector<8x128xf32>
    %39 = vector.shape_cast %38 : vector<8x128xf32> to vector<1x8x128xf32>
    %cst_29 = arith.constant dense<0xFF800000> : vector<1x128xf32>
    %40 = vector.multi_reduction <maximumf>, %39, %cst_29 [1] : vector<1x8x128xf32> to vector<1x128xf32>
    %41 = vector.shape_cast %40 : vector<1x128xf32> to vector<1x1x128xf32>
    %42 = vector.broadcast %41 : vector<1x1x128xf32> to vector<1x8x128xf32>
    %43 = arith.subf %39, %42 : vector<1x8x128xf32>
    %44 = math.exp %43 : vector<1x8x128xf32>
    %cst_30 = arith.constant dense<0.000000e+00> : vector<1x128xf32>
    %45 = vector.multi_reduction <add>, %44, %cst_30 [1] : vector<1x8x128xf32> to vector<1x128xf32>
    %46 = vector.shape_cast %45 : vector<1x128xf32> to vector<1x1x128xf32>
    %47 = vector.broadcast %46 : vector<1x1x128xf32> to vector<1x8x128xf32>
    %48 = arith.divf %44, %47 : vector<1x8x128xf32>
    %49 = vector.shape_cast %48 : vector<1x8x128xf32> to vector<8x128xf32>
    %c0_31 = arith.constant 0 : index
    %c0_32 = arith.constant 0 : index
    %50 = vector.load %arg12[%c0_31, %c0_32] : memref<8x128xf32, #tpu.memory_space<vmem>>, vector<8x128xf32>
    tpu.vector_store %arg12[%c0_31, %c0_32], %49 {strides = array<i32>} : memref<8x128xf32, #tpu.memory_space<vmem>>, vector<8x128xf32>,
    return
  }
  func.func @transform_0(%arg0: i32) -> (i32, i32) {
    %c0_i32 = arith.constant 0 : i32
    %c0_i32_0 = arith.constant 0 : i32
    return %arg0, %c0_i32 : i32, i32
  }
  func.func @transform_1(%arg0: i32) -> (i32, i32) {
    %c0_i32 = arith.constant 0 : i32
    %c0_i32_0 = arith.constant 0 : i32
    %c0_i32_1 = arith.constant 0 : i32
    return %c0_i32, %c0_i32_0 : i32, i32
  }
  func.func @transform_2(%arg0: i32) -> (i32, i32) {
    %c0_i32 = arith.constant 0 : i32
    %c0_i32_0 = arith.constant 0 : i32
    %c0_i32_1 = arith.constant 0 : i32
    return %c0_i32, %c0_i32_0 : i32, i32
  }
  func.func @transform_3(%arg0: i32) -> (i32, i32) {
    %c0_i32 = arith.constant 0 : i32
    %c0_i32_0 = arith.constant 0 : i32
    %c0_i32_1 = arith.constant 0 : i32
    return %c0_i32, %c0_i32_0 : i32, i32
  }
  func.func @transform_4(%arg0: i32) -> (i32, i32) {
    %c0_i32 = arith.constant 0 : i32
    %c0_i32_0 = arith.constant 0 : i32
    %c0_i32_1 = arith.constant 0 : i32
    return %c0_i32, %c0_i32_0 : i32, i32
  }
  func.func @transform_5(%arg0: i32) -> (i32, i32) {
    %c0_i32 = arith.constant 0 : i32
    %c0_i32_0 = arith.constant 0 : i32
    %c0_i32_1 = arith.constant 0 : i32
    return %c0_i32, %c0_i32_0 : i32, i32
  }
  func.func @transform_6(%arg0: i32) -> (i32, i32) {
    %c0_i32 = arith.constant 0 : i32
    %c0_i32_0 = arith.constant 0 : i32
    %c0_i32_1 = arith.constant 0 : i32
    return %c0_i32, %c0_i32_0 : i32, i32
  }
  func.func @transform_7(%arg0: i32) -> (i32, i32) {
    %c0_i32 = arith.constant 0 : i32
    %c0_i32_0 = arith.constant 0 : i32
    %c0_i32_1 = arith.constant 0 : i32
    return %c0_i32, %c0_i32_0 : i32, i32
  }
  func.func @transform_8(%arg0: i32) -> (i32, i32) {
    %c0_i32 = arith.constant 0 : i32
    %c0_i32_0 = arith.constant 0 : i32
    %c0_i32_1 = arith.constant 0 : i32
    return %c0_i32, %c0_i32_0 : i32, i32
  }
  func.func @transform_9(%arg0: i32) -> (i32, i32) {
    %c0_i32 = arith.constant 0 : i32
    %c0_i32_0 = arith.constant 0 : i32
    %c0_i32_1 = arith.constant 0 : i32
    return %c0_i32, %c0_i32_0 : i32, i32
  }
  func.func @transform_10(%arg0: i32) -> (i32, i32) {
    %c0_i32 = arith.constant 0 : i32
    %c0_i32_0 = arith.constant 0 : i32
    %c0_i32_1 = arith.constant 0 : i32
    return %c0_i32, %c0_i32_0 : i32, i32
  }
  func.func @transform_11(%arg0: i32) -> (i32, i32) {
    %c0_i32 = arith.constant 0 : i32
    %c0_i32_0 = arith.constant 0 : i32
    return %arg0, %c0_i32 : i32, i32
  }
}

</mosaic_0001>

<llo_original>
// kernel: tpu_custom_call.1
$region0: #{tpu_custom_call.1}
  #allocation0 [shape = 'u32[]', space=smem, size = 0x4, offset = 0x4, fixed_abs, tag = 'smem constant byte address 0x4 - core index']
  #allocation1 [shape = 'u32[144,128]{1,0:T(1,128)}', space=vmem, size = 0x12000, scoped, tag = 'internal scratch']
  %s0 = inlined_call_operand.hbm [shape: f32[8,32], index: 0, kind: input, shape index: {}]
  %s1 = inlined_call_operand.hbm [shape: bf16[32,256], index: 1, kind: input, shape index: {}]
  %s2 = inlined_call_operand.hbm [shape: f32[1,256], index: 2, kind: input, shape index: {}]
  %s3 = inlined_call_operand.hbm [shape: bf16[256,1024], index: 3, kind: input, shape index: {}]
  %s4 = inlined_call_operand.hbm [shape: f32[1,1024], index: 4, kind: input, shape index: {}]
  %s5 = inlined_call_operand.hbm [shape: bf16[1024,1024], index: 5, kind: input, shape index: {}]
  %s6 = inlined_call_operand.hbm [shape: f32[1,1024], index: 6, kind: input, shape index: {}]
  %s7 = inlined_call_operand.hbm [shape: bf16[1024,256], index: 7, kind: input, shape index: {}]
  %s8 = inlined_call_operand.hbm [shape: f32[1,256], index: 8, kind: input, shape index: {}]
  %s9 = inlined_call_operand.hbm [shape: bf16[256,128], index: 9, kind: input, shape index: {}]
  %s10 = inlined_call_operand.hbm [shape: f32[1,128], index: 10, kind: input, shape index: {}]
  %s11 = inlined_call_operand.hbm [shape: f32[8,128], index: 11, kind: output, shape index: {}]
  %s12 = sld [smem:[#allocation0]]
  $region98: #{tpu_custom_call.1} parent=0
    _
  %s14 = ssub.s32 1, %s12
  %s15 = scalar_select 0, %s14, %s12
  $region1: #{tpu_custom_call.1} parent=0
    #allocation2 [shape = 'u8[4096]{0}', space=vmem, size = 0x1000, scoped, tag = 'input window, operand 0, single buffered']
    #allocation3 [shape = 's32[1]{0}', space=sflag, size = 0x4, scoped, tag = 'scoped memory for tpu_custom_call.1']
    #allocation4 [shape = 's32[1]{0}', space=sflag, size = 0x4, scoped, tag = 'scoped memory for tpu_custom_call.1']
    #allocation5 [shape = 'u8[16384]{0}', space=vmem, size = 0x4000, scoped, tag = 'input window, operand 1, single buffered']
    #allocation6 [shape = 's32[1]{0}', space=sflag, size = 0x4, scoped, tag = 'scoped memory for tpu_custom_call.1']
    #allocation7 [shape = 'u8[1024]{0}', space=vmem, size = 0x400, scoped, tag = 'input window, operand 2, single buffered']
    #allocation8 [shape = 'u8[524288]{0}', space=vmem, size = 0x80000, scoped, tag = 'input window, operand 3, single buffered']
    #allocation9 [shape = 's32[1]{0}', space=sflag, size = 0x4, scoped, tag = 'scoped memory for tpu_custom_call.1']
    #allocation10 [shape = 'u8[4096]{0}', space=vmem, size = 0x1000, scoped, tag = 'input window, operand 4, single buffered']
    #allocation11 [shape = 'u8[2097152]{0}', space=vmem, size = 0x200000, scoped, tag = 'input window, operand 5, single buffered']
    #allocation12 [shape = 's32[1]{0}', space=sflag, size = 0x4, scoped, tag = 'scoped memory for tpu_custom_call.1']
    #allocation13 [shape = 'u8[4096]{0}', space=vmem, size = 0x1000, scoped, tag = 'input window, operand 6, single buffered']
    #allocation14 [shape = 'u8[524288]{0}', space=vmem, size = 0x80000, scoped, tag = 'input window, operand 7, single buffered']
    #allocation15 [shape = 's32[1]{0}', space=sflag, size = 0x4, scoped, tag = 'scoped memory for tpu_custom_call.1']
    #allocation16 [shape = 'u8[1024]{0}', space=vmem, size = 0x400, scoped, tag = 'input window, operand 8, single buffered']
    #allocation17 [shape = 'u8[65536]{0}', space=vmem, size = 0x10000, scoped, tag = 'input window, operand 9, single buffered']
    #allocation18 [shape = 's32[1]{0}', space=sflag, size = 0x4, scoped, tag = 'scoped memory for tpu_custom_call.1']
    #allocation19 [shape = 'u8[512]{0}', space=vmem, size = 0x400, scoped, tag = 'input window, operand 10, single buffered']
    #allocation20 [shape = 'u8[4096]{0}', space=vmem, size = 0x1000, scoped, tag = 'output window, operand 0, single buffered']
    %16 = vsyncpa [#allocation3], 0
    %17 = vsyncpa [#allocation6], 0
    %18 = vsyncpa [#allocation9], 0
    %19 = vsyncpa [#allocation12], 0
    %20 = vsyncpa [#allocation15], 0
    %21 = vsyncpa [#allocation18], 0
    %22 = vsyncpa [#allocation4], 0
    // Predicated region
    $region2: #{tpu_custom_call.1} parent=1 // pred_check
      _
    $region3: #{tpu_custom_call.1} parent=1 // pred_check_branch
      %24 = sbr.rel (0) target = $region5
    $region4: #{tpu_custom_call.1} parent=1 // pred_region
      %s26 = ssub.s32 128, 128
      %27 = vsyncadd [#allocation3], %s26
      %s29 = sshll.u32 [#allocation2], 4
      %s30 = int_to_ptr.vmem [resolvable:$true] %s29
      %32 = dma.hbm_to_vmem [thread:$0]  %s0, 128, %s30, [#allocation3]
    $region5: #{tpu_custom_call.1} parent=1 // pred_fallthru
      _
    // Predicated region
    $region6: #{tpu_custom_call.1} parent=1 // pred_check
      _
    $region7: #{tpu_custom_call.1} parent=1 // pred_check_branch
      %34 = sbr.rel (0) target = $region9
    $region8: #{tpu_custom_call.1} parent=1 // pred_region
      %s36 = ssub.s32 512, 512
      %37 = vsyncadd [#allocation6], %s36
      %s38 = sshll.u32 [#allocation5], 4
      %s39 = int_to_ptr.vmem [resolvable:$true] %s38
      %44 = dma.hbm_to_vmem [thread:$0]  %s1, 512, %s39, [#allocation6], 128, 128, 8
    $region9: #{tpu_custom_call.1} parent=1 // pred_fallthru
      _
    // Predicated region
    $region10: #{tpu_custom_call.1} parent=1 // pred_check
      _
    $region11: #{tpu_custom_call.1} parent=1 // pred_check_branch
      %46 = sbr.rel (0) target = $region13
    $region12: #{tpu_custom_call.1} parent=1 // pred_region
      %s48 = ssub.s32 32, 32
      %49 = vsyncadd [#allocation6], %s48
      %s51 = sshll.u32 [#allocation7], 4
      %s52 = int_to_ptr.vmem [resolvable:$true] %s51
      %54 = dma.hbm_to_vmem [thread:$0]  %s2, 32, %s52, [#allocation6]
    $region13: #{tpu_custom_call.1} parent=1 // pred_fallthru
      _
    // Predicated region
    $region14: #{tpu_custom_call.1} parent=1 // pred_check
      _
    $region15: #{tpu_custom_call.1} parent=1 // pred_check_branch
      %56 = sbr.rel (0) target = $region17
    $region16: #{tpu_custom_call.1} parent=1 // pred_region
      %s58 = ssub.s32 16384, 16384
      %59 = vsyncadd [#allocation9], %s58
      %s60 = sshll.u32 [#allocation8], 4
      %s61 = int_to_ptr.vmem [resolvable:$true] %s60
      %66 = dma.hbm_to_vmem [thread:$0]  %s3, 16384, %s61, [#allocation9], 512, 512, 32
    $region17: #{tpu_custom_call.1} parent=1 // pred_fallthru
      _
    // Predicated region
    $region18: #{tpu_custom_call.1} parent=1 // pred_check
      _
    $region19: #{tpu_custom_call.1} parent=1 // pred_check_branch
      %68 = sbr.rel (0) target = $region21
    $region20: #{tpu_custom_call.1} parent=1 // pred_region
      %s70 = ssub.s32 128, 128
      %71 = vsyncadd [#allocation9], %s70
      %s73 = sshll.u32 [#allocation10], 4
      %s74 = int_to_ptr.vmem [resolvable:$true] %s73
      %76 = dma.hbm_to_vmem [thread:$0]  %s4, 128, %s74, [#allocation9]
    $region21: #{tpu_custom_call.1} parent=1 // pred_fallthru
      _
    // Predicated region
    $region22: #{tpu_custom_call.1} parent=1 // pred_check
      _
    $region23: #{tpu_custom_call.1} parent=1 // pred_check_branch
      %78 = sbr.rel (0) target = $region25
    $region24: #{tpu_custom_call.1} parent=1 // pred_region
      %s80 = ssub.s32 65536, 65536
      %81 = vsyncadd [#allocation12], %s80
      %s82 = sshll.u32 [#allocation11], 4
      %s83 = int_to_ptr.vmem [resolvable:$true] %s82
      %88 = dma.hbm_to_vmem [thread:$0]  %s5, 65536, %s83, [#allocation12], 512, 512, 32
    $region25: #{tpu_custom_call.1} parent=1 // pred_fallthru
      _
    // Predicated region
    $region26: #{tpu_custom_call.1} parent=1 // pred_check
      _
    $region27: #{tpu_custom_call.1} parent=1 // pred_check_branch
      %90 = sbr.rel (0) target = $region29
    $region28: #{tpu_custom_call.1} parent=1 // pred_region
      %s92 = ssub.s32 128, 128
      %93 = vsyncadd [#allocation12], %s92
      %s95 = sshll.u32 [#allocation13], 4
      %s96 = int_to_ptr.vmem [resolvable:$true] %s95
      %98 = dma.hbm_to_vmem [thread:$0]  %s6, 128, %s96, [#allocation12]
    $region29: #{tpu_custom_call.1} parent=1 // pred_fallthru
      _
    // Predicated region
    $region30: #{tpu_custom_call.1} parent=1 // pred_check
      _
    $region31: #{tpu_custom_call.1} parent=1 // pred_check_branch
      %100 = sbr.rel (0) target = $region33
    $region32: #{tpu_custom_call.1} parent=1 // pred_region
      %s102 = ssub.s32 16384, 16384
      %103 = vsyncadd [#allocation15], %s102
      %s104 = sshll.u32 [#allocation14], 4
      %s105 = int_to_ptr.vmem [resolvable:$true] %s104
      %110 = dma.hbm_to_vmem [thread:$0]  %s7, 16384, %s105, [#allocation15], 128, 128, 8
    $region33: #{tpu_custom_call.1} parent=1 // pred_fallthru
      _
    // Predicated region
    $region34: #{tpu_custom_call.1} parent=1 // pred_check
      _
    $region35: #{tpu_custom_call.1} parent=1 // pred_check_branch
      %112 = sbr.rel (0) target = $region37
    $region36: #{tpu_custom_call.1} parent=1 // pred_region
      %s114 = ssub.s32 32, 32
      %115 = vsyncadd [#allocation15], %s114
      %s117 = sshll.u32 [#allocation16], 4
      %s118 = int_to_ptr.vmem [resolvable:$true] %s117
      %120 = dma.hbm_to_vmem [thread:$0]  %s8, 32, %s118, [#allocation15]
    $region37: #{tpu_custom_call.1} parent=1 // pred_fallthru
      _
    // Predicated region
    $region38: #{tpu_custom_call.1} parent=1 // pred_check
      _
    $region39: #{tpu_custom_call.1} parent=1 // pred_check_branch
      %122 = sbr.rel (0) target = $region41
    $region40: #{tpu_custom_call.1} parent=1 // pred_region
      %s124 = ssub.s32 2048, 2048
      %125 = vsyncadd [#allocation18], %s124
      %s126 = sshll.u32 [#allocation17], 4
      %s127 = int_to_ptr.vmem [resolvable:$true] %s126
      %132 = dma.hbm_to_vmem [thread:$0]  %s9, 2048, %s127, [#allocation18], 64, 64, 4
    $region41: #{tpu_custom_call.1} parent=1 // pred_fallthru
      _
    // Predicated region
    $region42: #{tpu_custom_call.1} parent=1 // pred_check
      _
    $region43: #{tpu_custom_call.1} parent=1 // pred_check_branch
      %134 = sbr.rel (0) target = $region45
    $region44: #{tpu_custom_call.1} parent=1 // pred_region
      %s136 = ssub.s32 16, 16
      %137 = vsyncadd [#allocation18], %s136
      %s139 = sshll.u32 [#allocation19], 4
      %s140 = int_to_ptr.vmem [resolvable:$true] %s139
      %142 = dma.hbm_to_vmem [thread:$0]  %s10, 16, %s140, [#allocation18]
    $region45: #{tpu_custom_call.1} parent=1 // pred_fallthru
      _
    // Predicated region
    $region46: #{tpu_custom_call.1} parent=1 // pred_check
      _
    $region47: #{tpu_custom_call.1} parent=1 // pred_check_branch
      %144 = sbr.rel (0) target = $region49
    $region48: #{tpu_custom_call.1} parent=1 // pred_region
      %145 = dma.done [#allocation3], 128
    $region49: #{tpu_custom_call.1} parent=1 // pred_fallthru
      _
    // Predicated region
    $region50: #{tpu_custom_call.1} parent=1 // pred_check
      _
    $region51: #{tpu_custom_call.1} parent=1 // pred_check_branch
      %147 = sbr.rel (0) target = $region53
    $region52: #{tpu_custom_call.1} parent=1 // pred_region
      %148 = dma.done [#allocation6], 512
    $region53: #{tpu_custom_call.1} parent=1 // pred_fallthru
      _
    // Predicated region
    $region54: #{tpu_custom_call.1} parent=1 // pred_check
      _
    $region55: #{tpu_custom_call.1} parent=1 // pred_check_branch
      %150 = sbr.rel (0) target = $region57
    $region56: #{tpu_custom_call.1} parent=1 // pred_region
      %151 = dma.done [#allocation6], 32
    $region57: #{tpu_custom_call.1} parent=1 // pred_fallthru
      _
    // Predicated region
    $region58: #{tpu_custom_call.1} parent=1 // pred_check
      _
    $region59: #{tpu_custom_call.1} parent=1 // pred_check_branch
      %153 = sbr.rel (0) target = $region61
    $region60: #{tpu_custom_call.1} parent=1 // pred_region
      %154 = dma.done [#allocation9], 16384
    $region61: #{tpu_custom_call.1} parent=1 // pred_fallthru
      _
    // Predicated region
    $region62: #{tpu_custom_call.1} parent=1 // pred_check
      _
    $region63: #{tpu_custom_call.1} parent=1 // pred_check_branch
      %156 = sbr.rel (0) target = $region65
    $region64: #{tpu_custom_call.1} parent=1 // pred_region
      %157 = dma.done [#allocation9], 128
    $region65: #{tpu_custom_call.1} parent=1 // pred_fallthru
      _
    // Predicated region
    $region66: #{tpu_custom_call.1} parent=1 // pred_check
      _
    $region67: #{tpu_custom_call.1} parent=1 // pred_check_branch
      %159 = sbr.rel (0) target = $region69
    $region68: #{tpu_custom_call.1} parent=1 // pred_region
      %160 = dma.done [#allocation12], 65536
    $region69: #{tpu_custom_call.1} parent=1 // pred_fallthru
      _
    // Predicated region
    $region70: #{tpu_custom_call.1} parent=1 // pred_check
      _
    $region71: #{tpu_custom_call.1} parent=1 // pred_check_branch
      %162 = sbr.rel (0) target = $region73
    $region72: #{tpu_custom_call.1} parent=1 // pred_region
      %163 = dma.done [#allocation12], 128
    $region73: #{tpu_custom_call.1} parent=1 // pred_fallthru
      _
    // Predicated region
    $region74: #{tpu_custom_call.1} parent=1 // pred_check
      _
    $region75: #{tpu_custom_call.1} parent=1 // pred_check_branch
      %165 = sbr.rel (0) target = $region77
    $region76: #{tpu_custom_call.1} parent=1 // pred_region
      %166 = dma.done [#allocation15], 16384
    $region77: #{tpu_custom_call.1} parent=1 // pred_fallthru
      _
    // Predicated region
    $region78: #{tpu_custom_call.1} parent=1 // pred_check
      _
    $region79: #{tpu_custom_call.1} parent=1 // pred_check_branch
      %168 = sbr.rel (0) target = $region81
    $region80: #{tpu_custom_call.1} parent=1 // pred_region
      %169 = dma.done [#allocation15], 32
    $region81: #{tpu_custom_call.1} parent=1 // pred_fallthru
      _
    // Predicated region
    $region82: #{tpu_custom_call.1} parent=1 // pred_check
      _
    $region83: #{tpu_custom_call.1} parent=1 // pred_check_branch
      %171 = sbr.rel (0) target = $region85
    $region84: #{tpu_custom_call.1} parent=1 // pred_region
      %172 = dma.done [#allocation18], 2048
    $region85: #{tpu_custom_call.1} parent=1 // pred_fallthru
      _
    // Predicated region
    $region86: #{tpu_custom_call.1} parent=1 // pred_check
      _
    $region87: #{tpu_custom_call.1} parent=1 // pred_check_branch
      %174 = sbr.rel (0) target = $region89
    $region88: #{tpu_custom_call.1} parent=1 // pred_region
      %175 = dma.done [#allocation18], 16
    $region89: #{tpu_custom_call.1} parent=1 // pred_fallthru
      _
    %v177 = vld [vmem:[#allocation2] sm:$0xff]
    %v178 = vpack.c.bf16 %v177, %v177
    %v179 = vld [vmem:[#allocation5] sm:$0xff]
    %v180 = vld [vmem:[#allocation5 + $0x8] sm:$0xff]
    %v181 = vld [vmem:[#allocation5 + $0x10] sm:$0xff]
    %v182 = vld [vmem:[#allocation5 + $0x18] sm:$0xff]
    %v183 = vld [vmem:[#allocation7] sm:$0x3]
    %v185 = vlaneseq
    %v186 = vshrl.u32 %v185, 7
    %v187 = vsub.s32 0, %v186
    %v188 = vrot.slane %v183, %v187
    %v189 = vlaneseq
    %v190 = vshrl.u32 %v189, 7
    %v191 = vsub.s32 1, %v190
    %v192 = vrot.slane %v183, %v191
    %v199 = vunpack.c.l.b16 %v179
    %v200 = vunpack.c.h.b16 %v179
    %v201 = vunpack.c.l.b16 %v180
    %v202 = vunpack.c.h.b16 %v180
    %v203 = vunpack.c.l.b16 %v181
    %v204 = vunpack.c.h.b16 %v181
    %v205 = vunpack.c.l.b16 %v182
    %v206 = vunpack.c.h.b16 %v182
    %v207 = vpack.c.b16 %v201, %v199
    %v208 = vpack.c.b16 %v202, %v200
    %v209 = vpack.c.b16 %v205, %v203
    %v210 = vpack.c.b16 %v206, %v204
    %vm215 = vcmask 261120
    %v217 = vsel %vm215, %v178, 0
    %219 = vmatprep.subr.bf16.mxu0 %v208
    %220 = vmatpush1.bf16.msra.mxu0 %v207
    %221 = vmatprep.subr.bf16.mxu0 %v210
    %222 = vmatpush1.bf16.msra.mxu0 %v209
    %223 = vmatprep.subr.bf16.mxu0 0
    %224 = vmatpush1.bf16.msra.mxu0 0
    %225 = vmatprep.subr.bf16.mxu0 0
    %226 = vmatpush1.bf16.msra.mxu0 0
    %227 = vmatprep.subr.bf16.mxu0 0
    %228 = vmatpush1.bf16.msra.mxu0 0
    %229 = vmatprep.subr.bf16.mxu0 0
    %230 = vmatpush1.bf16.msra.mxu0 0
    %231 = vmatprep.subr.bf16.mxu0 0
    %232 = vmatpush1.bf16.msra.mxu0 0
    %233 = vmatprep.subr.bf16.mxu0 0
    %234 = vmatpush1.bf16.msra.mxu0 0
    %235 = vmatprep.subr.bf16.mxu0 0
    %236 = vmatpush1.bf16.msra.mxu0 0
    %237 = vmatprep.subr.bf16.mxu0 0
    %238 = vmatpush1.bf16.msra.mxu0 0
    %239 = vmatprep.subr.bf16.mxu0 0
    %240 = vmatpush1.bf16.msra.mxu0 0
    %241 = vmatprep.subr.bf16.mxu0 0
    %242 = vmatpush1.bf16.msra.mxu0 0
    %243 = vmatprep.subr.bf16.mxu0 0
    %244 = vmatpush1.bf16.msra.mxu0 0
    %245 = vmatprep.subr.bf16.mxu0 0
    %246 = vmatpush1.bf16.msra.mxu0 0
    %247 = vmatprep.subr.bf16.mxu0 0
    %248 = vmatpush1.bf16.msra.mxu0 0
    %249 = vmatprep.subr.bf16.mxu0 0
    %250 = vmatpush1.bf16.msra.mxu0 0
    %251 = vmatprep.mubr.bf16.mxu0 0
    %252 = vmatmul.mubr.bf16.gmra.mrb[0].mxu0 %v217
    %v253 = vpop.f32.mrb[0].mxu0
    %v254 = vadd.f32 %v188, %v253
    %v255 = vpop.f32.mrb[0].mxu0
    %v256 = vadd.f32 %v192, %v255
    %v257 = vpop.f32.mrb[0].mxu0
    %v258 = vpop.f32.mrb[0].mxu0
    %259 = vdwg.mxu0
    %v260 = vmax.f32 %v254, 0.0
    %v261 = vmax.f32 %v256, 0.0
    %v262 = vpack.c.bf16 %v260, %v260
    %v263 = vpack.c.bf16 %v261, %v261
    %v264 = vld [vmem:[#allocation8] sm:$0xff]
    %v265 = vld [vmem:[#allocation8 + $0x8] sm:$0xff]
    %v266 = vld [vmem:[#allocation8 + $0x10] sm:$0xff]
    %v267 = vld [vmem:[#allocation8 + $0x18] sm:$0xff]
    %v268 = vld [vmem:[#allocation8 + $0x20] sm:$0xff]
    %v269 = vld [vmem:[#allocation8 + $0x28] sm:$0xff]
    %v270 = vld [vmem:[#allocation8 + $0x30] sm:$0xff]
    %v271 = vld [vmem:[#allocation8 + $0x38] sm:$0xff]
    %v272 = vld [vmem:[#allocation8 + $0x40] sm:$0xff]
    %v273 = vld [vmem:[#allocation8 + $0x48] sm:$0xff]
    %v274 = vld [vmem:[#allocation8 + $0x50] sm:$0xff]
    %v275 = vld [vmem:[#allocation8 + $0x58] sm:$0xff]
    %v276 = vld [vmem:[#allocation8 + $0x60] sm:$0xff]
    %v277 = vld [vmem:[#allocation8 + $0x68] sm:$0xff]
    %v278 = vld [vmem:[#allocation8 + $0x70] sm:$0xff]
    %v279 = vld [vmem:[#allocation8 + $0x78] sm:$0xff]
    %v280 = vld [vmem:[#allocation8 + $0x80] sm:$0xff]
    %v281 = vld [vmem:[#allocation8 + $0x88] sm:$0xff]
    %v282 = vld [vmem:[#allocation8 + $0x90] sm:$0xff]
    %v283 = vld [vmem:[#allocation8 + $0x98] sm:$0xff]
    %v284 = vld [vmem:[#allocation8 + $0xa0] sm:$0xff]
    %v285 = vld [vmem:[#allocation8 + $0xa8] sm:$0xff]
    %v286 = vld [vmem:[#allocation8 + $0xb0] sm:$0xff]
    %v287 = vld [vmem:[#allocation8 + $0xb8] sm:$0xff]
    %v288 = vld [vmem:[#allocation8 + $0xc0] sm:$0xff]
    %v289 = vld [vmem:[#allocation8 + $0xc8] sm:$0xff]
    %v290 = vld [vmem:[#allocation8 + $0xd0] sm:$0xff]
    %v291 = vld [vmem:[#allocation8 + $0xd8] sm:$0xff]
    %v292 = vld [vmem:[#allocation8 + $0xe0] sm:$0xff]
    %v293 = vld [vmem:[#allocation8 + $0xe8] sm:$0xff]
    %v294 = vld [vmem:[#allocation8 + $0xf0] sm:$0xff]
    %v295 = vld [vmem:[#allocation8 + $0xf8] sm:$0xff]
    %v296 = vld [vmem:[#allocation8 + $0x100] sm:$0xff]
    %v297 = vld [vmem:[#allocation8 + $0x108] sm:$0xff]
    %v298 = vld [vmem:[#allocation8 + $0x110] sm:$0xff]
    %v299 = vld [vmem:[#allocation8 + $0x118] sm:$0xff]
    %v300 = vld [vmem:[#allocation8 + $0x120] sm:$0xff]
    %v301 = vld [vmem:[#allocation8 + $0x128] sm:$0xff]
    %v302 = vld [vmem:[#allocation8 + $0x130] sm:$0xff]
    %v303 = vld [vmem:[#allocation8 + $0x138] sm:$0xff]
    %v304 = vld [vmem:[#allocation8 + $0x140] sm:$0xff]
    %v305 = vld [vmem:[#allocation8 + $0x148] sm:$0xff]
    %v306 = vld [vmem:[#allocation8 + $0x150] sm:$0xff]
    %v307 = vld [vmem:[#allocation8 + $0x158] sm:$0xff]
    %v308 = vld [vmem:[#allocation8 + $0x160] sm:$0xff]
    %v309 = vld [vmem:[#allocation8 + $0x168] sm:$0xff]
    %v310 = vld [vmem:[#allocation8 + $0x170] sm:$0xff]
    %v311 = vld [vmem:[#allocation8 + $0x178] sm:$0xff]
    %v312 = vld [vmem:[#allocation8 + $0x180] sm:$0xff]
    %v313 = vld [vmem:[#allocation8 + $0x188] sm:$0xff]
    %v314 = vld [vmem:[#allocation8 + $0x190] sm:$0xff]
    %v315 = vld [vmem:[#allocation8 + $0x198] sm:$0xff]
    %v316 = vld [vmem:[#allocation8 + $0x1a0] sm:$0xff]
    %v317 = vld [vmem:[#allocation8 + $0x1a8] sm:$0xff]
    %v318 = vld [vmem:[#allocation8 + $0x1b0] sm:$0xff]
    %v319 = vld [vmem:[#allocation8 + $0x1b8] sm:$0xff]
    %v320 = vld [vmem:[#allocation8 + $0x1c0] sm:$0xff]
    %v321 = vld [vmem:[#allocation8 + $0x1c8] sm:$0xff]
    %v322 = vld [vmem:[#allocation8 + $0x1d0] sm:$0xff]
    %v323 = vld [vmem:[#allocation8 + $0x1d8] sm:$0xff]
    %v324 = vld [vmem:[#allocation8 + $0x1e0] sm:$0xff]
    %v325 = vld [vmem:[#allocation8 + $0x1e8] sm:$0xff]
    %v326 = vld [vmem:[#allocation8 + $0x1f0] sm:$0xff]
    %v327 = vld [vmem:[#allocation8 + $0x1f8] sm:$0xff]
    %v328 = vld [vmem:[#allocation8 + $0x200] sm:$0xff]
    %v329 = vld [vmem:[#allocation8 + $0x208] sm:$0xff]
    %v330 = vld [vmem:[#allocation8 + $0x210] sm:$0xff]
    %v331 = vld [vmem:[#allocation8 + $0x218] sm:$0xff]
    %v332 = vld [vmem:[#allocation8 + $0x220] sm:$0xff]
    %v333 = vld [vmem:[#allocation8 + $0x228] sm:$0xff]
    %v334 = vld [vmem:[#allocation8 + $0x230] sm:$0xff]
    %v335 = vld [vmem:[#allocation8 + $0x238] sm:$0xff]
    %v336 = vld [vmem:[#allocation8 + $0x240] sm:$0xff]
    %v337 = vld [vmem:[#allocation8 + $0x248] sm:$0xff]
    %v338 = vld [vmem:[#allocation8 + $0x250] sm:$0xff]
    %v339 = vld [vmem:[#allocation8 + $0x258] sm:$0xff]
    %v340 = vld [vmem:[#allocation8 + $0x260] sm:$0xff]
    %v341 = vld [vmem:[#allocation8 + $0x268] sm:$0xff]
    %v342 = vld [vmem:[#allocation8 + $0x270] sm:$0xff]
    %v343 = vld [vmem:[#allocation8 + $0x278] sm:$0xff]
    %v344 = vld [vmem:[#allocation8 + $0x280] sm:$0xff]
    %v345 = vld [vmem:[#allocation8 + $0x288] sm:$0xff]
    %v346 = vld [vmem:[#allocation8 + $0x290] sm:$0xff]
    %v347 = vld [vmem:[#allocation8 + $0x298] sm:$0xff]
    %v348 = vld [vmem:[#allocation8 + $0x2a0] sm:$0xff]
    %v349 = vld [vmem:[#allocation8 + $0x2a8] sm:$0xff]
    %v350 = vld [vmem:[#allocation8 + $0x2b0] sm:$0xff]
    %v351 = vld [vmem:[#allocation8 + $0x2b8] sm:$0xff]
    %v352 = vld [vmem:[#allocation8 + $0x2c0] sm:$0xff]
    %v353 = vld [vmem:[#allocation8 + $0x2c8] sm:$0xff]
    %v354 = vld [vmem:[#allocation8 + $0x2d0] sm:$0xff]
    %v355 = vld [vmem:[#allocation8 + $0x2d8] sm:$0xff]
    %v356 = vld [vmem:[#allocation8 + $0x2e0] sm:$0xff]
    %v357 = vld [vmem:[#allocation8 + $0x2e8] sm:$0xff]
    %v358 = vld [vmem:[#allocation8 + $0x2f0] sm:$0xff]
    %v359 = vld [vmem:[#allocation8 + $0x2f8] sm:$0xff]
    %v360 = vld [vmem:[#allocation8 + $0x300] sm:$0xff]
    %v361 = vld [vmem:[#allocation8 + $0x308] sm:$0xff]
    %v362 = vld [vmem:[#allocation8 + $0x310] sm:$0xff]
    %v363 = vld [vmem:[#allocation8 + $0x318] sm:$0xff]
    %v364 = vld [vmem:[#allocation8 + $0x320] sm:$0xff]
    %v365 = vld [vmem:[#allocation8 + $0x328] sm:$0xff]
    %v366 = vld [vmem:[#allocation8 + $0x330] sm:$0xff]
    %v367 = vld [vmem:[#allocation8 + $0x338] sm:$0xff]
    %v368 = vld [vmem:[#allocation8 + $0x340] sm:$0xff]
    %v369 = vld [vmem:[#allocation8 + $0x348] sm:$0xff]
    %v370 = vld [vmem:[#allocation8 + $0x350] sm:$0xff]
    %v371 = vld [vmem:[#allocation8 + $0x358] sm:$0xff]
    %v372 = vld [vmem:[#allocation8 + $0x360] sm:$0xff]
    %v373 = vld [vmem:[#allocation8 + $0x368] sm:$0xff]
    %v374 = vld [vmem:[#allocation8 + $0x370] sm:$0xff]
    %v375 = vld [vmem:[#allocation8 + $0x378] sm:$0xff]
    %v376 = vld [vmem:[#allocation8 + $0x380] sm:$0xff]
    %v377 = vld [vmem:[#allocation8 + $0x388] sm:$0xff]
    %v378 = vld [vmem:[#allocation8 + $0x390] sm:$0xff]
    %v379 = vld [vmem:[#allocation8 + $0x398] sm:$0xff]
    %v380 = vld [vmem:[#allocation8 + $0x3a0] sm:$0xff]
    %v381 = vld [vmem:[#allocation8 + $0x3a8] sm:$0xff]
    %v382 = vld [vmem:[#allocation8 + $0x3b0] sm:$0xff]
    %v383 = vld [vmem:[#allocation8 + $0x3b8] sm:$0xff]
    %v384 = vld [vmem:[#allocation8 + $0x3c0] sm:$0xff]
    %v385 = vld [vmem:[#allocation8 + $0x3c8] sm:$0xff]
    %v386 = vld [vmem:[#allocation8 + $0x3d0] sm:$0xff]
    %v387 = vld [vmem:[#allocation8 + $0x3d8] sm:$0xff]
    %v388 = vld [vmem:[#allocation8 + $0x3e0] sm:$0xff]
    %v389 = vld [vmem:[#allocation8 + $0x3e8] sm:$0xff]
    %v390 = vld [vmem:[#allocation8 + $0x3f0] sm:$0xff]
    %v391 = vld [vmem:[#allocation8 + $0x3f8] sm:$0xff]
    %v392 = vld [vmem:[#allocation10] sm:$0xff]
    %v394 = vlaneseq
    %v395 = vshrl.u32 %v394, 7
    %v396 = vsub.s32 0, %v395
    %v397 = vrot.slane %v392, %v396
    %v398 = vlaneseq
    %v399 = vshrl.u32 %v398, 7
    %v400 = vsub.s32 1, %v399
    %v401 = vrot.slane %v392, %v400
    %v402 = vlaneseq
    %v403 = vshrl.u32 %v402, 7
    %v404 = vsub.s32 2, %v403
    %v405 = vrot.slane %v392, %v404
    %v406 = vlaneseq
    %v407 = vshrl.u32 %v406, 7
    %v408 = vsub.s32 3, %v407
    %v409 = vrot.slane %v392, %v408
    %v410 = vlaneseq
    %v411 = vshrl.u32 %v410, 7
    %v412 = vsub.s32 4, %v411
    %v413 = vrot.slane %v392, %v412
    %v414 = vlaneseq
    %v415 = vshrl.u32 %v414, 7
    %v416 = vsub.s32 5, %v415
    %v417 = vrot.slane %v392, %v416
    %v418 = vlaneseq
    %v419 = vshrl.u32 %v418, 7
    %v420 = vsub.s32 6, %v419
    %v421 = vrot.slane %v392, %v420
    %v422 = vlaneseq
    %v423 = vshrl.u32 %v422, 7
    %v424 = vsub.s32 7, %v423
    %v425 = vrot.slane %v392, %v424
    %v562 = vunpack.c.l.b16 %v264
    %v563 = vunpack.c.h.b16 %v264
    %v564 = vunpack.c.l.b16 %v265
    %v565 = vunpack.c.h.b16 %v265
    %v566 = vunpack.c.l.b16 %v266
    %v567 = vunpack.c.h.b16 %v266
    %v568 = vunpack.c.l.b16 %v267
    %v569 = vunpack.c.h.b16 %v267
    %v570 = vunpack.c.l.b16 %v268
    %v571 = vunpack.c.h.b16 %v268
    %v572 = vunpack.c.l.b16 %v269
    %v573 = vunpack.c.h.b16 %v269
    %v574 = vunpack.c.l.b16 %v270
    %v575 = vunpack.c.h.b16 %v270
    %v576 = vunpack.c.l.b16 %v271
    %v577 = vunpack.c.h.b16 %v271
    %v578 = vunpack.c.l.b16 %v272
    %v579 = vunpack.c.h.b16 %v272
    %v580 = vunpack.c.l.b16 %v273
    %v581 = vunpack.c.h.b16 %v273
    %v582 = vunpack.c.l.b16 %v274
    %v583 = vunpack.c.h.b16 %v274
    %v584 = vunpack.c.l.b16 %v275
    %v585 = vunpack.c.h.b16 %v275
    %v586 = vunpack.c.l.b16 %v276
    %v587 = vunpack.c.h.b16 %v276
    %v588 = vunpack.c.l.b16 %v277
    %v589 = vunpack.c.h.b16 %v277
    %v590 = vunpack.c.l.b16 %v278
    %v591 = vunpack.c.h.b16 %v278
    %v592 = vunpack.c.l.b16 %v279
    %v593 = vunpack.c.h.b16 %v279
    %v594 = vunpack.c.l.b16 %v280
    %v595 = vunpack.c.h.b16 %v280
    %v596 = vunpack.c.l.b16 %v281
    %v597 = vunpack.c.h.b16 %v281
    %v598 = vunpack.c.l.b16 %v282
    %v599 = vunpack.c.h.b16 %v282
    %v600 = vunpack.c.l.b16 %v283
    %v601 = vunpack.c.h.b16 %v283
    %v602 = vunpack.c.l.b16 %v284
    %v603 = vunpack.c.h.b16 %v284
    %v604 = vunpack.c.l.b16 %v285
    %v605 = vunpack.c.h.b16 %v285
    %v606 = vunpack.c.l.b16 %v286
    %v607 = vunpack.c.h.b16 %v286
    %v608 = vunpack.c.l.b16 %v287
    %v609 = vunpack.c.h.b16 %v287
    %v610 = vunpack.c.l.b16 %v288
    %v611 = vunpack.c.h.b16 %v288
    %v612 = vunpack.c.l.b16 %v289
    %v613 = vunpack.c.h.b16 %v289
    %v614 = vunpack.c.l.b16 %v290
    %v615 = vunpack.c.h.b16 %v290
    %v616 = vunpack.c.l.b16 %v291
    %v617 = vunpack.c.h.b16 %v291
    %v618 = vunpack.c.l.b16 %v292
    %v619 = vunpack.c.h.b16 %v292
    %v620 = vunpack.c.l.b16 %v293
    %v621 = vunpack.c.h.b16 %v293
    %v622 = vunpack.c.l.b16 %v294
    %v623 = vunpack.c.h.b16 %v294
    %v624 = vunpack.c.l.b16 %v295
    %v625 = vunpack.c.h.b16 %v295
    %v626 = vunpack.c.l.b16 %v296
    %v627 = vunpack.c.h.b16 %v296
    %v628 = vunpack.c.l.b16 %v297
    %v629 = vunpack.c.h.b16 %v297
    %v630 = vunpack.c.l.b16 %v298
    %v631 = vunpack.c.h.b16 %v298
    %v632 = vunpack.c.l.b16 %v299
    %v633 = vunpack.c.h.b16 %v299
    %v634 = vunpack.c.l.b16 %v300
    %v635 = vunpack.c.h.b16 %v300
    %v636 = vunpack.c.l.b16 %v301
    %v637 = vunpack.c.h.b16 %v301
    %v638 = vunpack.c.l.b16 %v302
    %v639 = vunpack.c.h.b16 %v302
    %v640 = vunpack.c.l.b16 %v303
    %v641 = vunpack.c.h.b16 %v303
    %v642 = vunpack.c.l.b16 %v304
    %v643 = vunpack.c.h.b16 %v304
    %v644 = vunpack.c.l.b16 %v305
    %v645 = vunpack.c.h.b16 %v305
    %v646 = vunpack.c.l.b16 %v306
    %v647 = vunpack.c.h.b16 %v306
    %v648 = vunpack.c.l.b16 %v307
    %v649 = vunpack.c.h.b16 %v307
    %v650 = vunpack.c.l.b16 %v308
    %v651 = vunpack.c.h.b16 %v308
    %v652 = vunpack.c.l.b16 %v309
    %v653 = vunpack.c.h.b16 %v309
    %v654 = vunpack.c.l.b16 %v310
    %v655 = vunpack.c.h.b16 %v310
    %v656 = vunpack.c.l.b16 %v311
    %v657 = vunpack.c.h.b16 %v311
    %v658 = vunpack.c.l.b16 %v312
    %v659 = vunpack.c.h.b16 %v312
    %v660 = vunpack.c.l.b16 %v313
    %v661 = vunpack.c.h.b16 %v313
    %v662 = vunpack.c.l.b16 %v314
    %v663 = vunpack.c.h.b16 %v314
    %v664 = vunpack.c.l.b16 %v315
    %v665 = vunpack.c.h.b16 %v315
    %v666 = vunpack.c.l.b16 %v316
    %v667 = vunpack.c.h.b16 %v316
    %v668 = vunpack.c.l.b16 %v317
    %v669 = vunpack.c.h.b16 %v317
    %v670 = vunpack.c.l.b16 %v318
    %v671 = vunpack.c.h.b16 %v318
    %v672 = vunpack.c.l.b16 %v319
    %v673 = vunpack.c.h.b16 %v319
    %v674 = vunpack.c.l.b16 %v320
    %v675 = vunpack.c.h.b16 %v320
    %v676 = vunpack.c.l.b16 %v321
    %v677 = vunpack.c.h.b16 %v321
    %v678 = vunpack.c.l.b16 %v322
    %v679 = vunpack.c.h.b16 %v322
    %v680 = vunpack.c.l.b16 %v323
    %v681 = vunpack.c.h.b16 %v323
    %v682 = vunpack.c.l.b16 %v324
    %v683 = vunpack.c.h.b16 %v324
    %v684 = vunpack.c.l.b16 %v325
    %v685 = vunpack.c.h.b16 %v325
    %v686 = vunpack.c.l.b16 %v326
    %v687 = vunpack.c.h.b16 %v326
    %v688 = vunpack.c.l.b16 %v327
    %v689 = vunpack.c.h.b16 %v327
    %v690 = vunpack.c.l.b16 %v328
    %v691 = vunpack.c.h.b16 %v328
    %v692 = vunpack.c.l.b16 %v329
    %v693 = vunpack.c.h.b16 %v329
    %v694 = vunpack.c.l.b16 %v330
    %v695 = vunpack.c.h.b16 %v330
    %v696 = vunpack.c.l.b16 %v331
    %v697 = vunpack.c.h.b16 %v331
    %v698 = vunpack.c.l.b16 %v332
    %v699 = vunpack.c.h.b16 %v332
    %v700 = vunpack.c.l.b16 %v333
    %v701 = vunpack.c.h.b16 %v333
    %v702 = vunpack.c.l.b16 %v334
    %v703 = vunpack.c.h.b16 %v334
    %v704 = vunpack.c.l.b16 %v335
    %v705 = vunpack.c.h.b16 %v335
    %v706 = vunpack.c.l.b16 %v336
    %v707 = vunpack.c.h.b16 %v336
    %v708 = vunpack.c.l.b16 %v337
    %v709 = vunpack.c.h.b16 %v337
    %v710 = vunpack.c.l.b16 %v338
    %v711 = vunpack.c.h.b16 %v338
    %v712 = vunpack.c.l.b16 %v339
    %v713 = vunpack.c.h.b16 %v339
    %v714 = vunpack.c.l.b16 %v340
    %v715 = vunpack.c.h.b16 %v340
    %v716 = vunpack.c.l.b16 %v341
    %v717 = vunpack.c.h.b16 %v341
    %v718 = vunpack.c.l.b16 %v342
    %v719 = vunpack.c.h.b16 %v342
    %v720 = vunpack.c.l.b16 %v343
    %v721 = vunpack.c.h.b16 %v343
    %v722 = vunpack.c.l.b16 %v344
    %v723 = vunpack.c.h.b16 %v344
    %v724 = vunpack.c.l.b16 %v345
    %v725 = vunpack.c.h.b16 %v345
    %v726 = vunpack.c.l.b16 %v346
    %v727 = vunpack.c.h.b16 %v346
    %v728 = vunpack.c.l.b16 %v347
    %v729 = vunpack.c.h.b16 %v347
    %v730 = vunpack.c.l.b16 %v348
    %v731 = vunpack.c.h.b16 %v348
    %v732 = vunpack.c.l.b16 %v349
    %v733 = vunpack.c.h.b16 %v349
    %v734 = vunpack.c.l.b16 %v350
    %v735 = vunpack.c.h.b16 %v350
    %v736 = vunpack.c.l.b16 %v351
    %v737 = vunpack.c.h.b16 %v351
    %v738 = vunpack.c.l.b16 %v352
    %v739 = vunpack.c.h.b16 %v352
    %v740 = vunpack.c.l.b16 %v353
    %v741 = vunpack.c.h.b16 %v353
    %v742 = vunpack.c.l.b16 %v354
    %v743 = vunpack.c.h.b16 %v354
    %v744 = vunpack.c.l.b16 %v355
    %v745 = vunpack.c.h.b16 %v355
    %v746 = vunpack.c.l.b16 %v356
    %v747 = vunpack.c.h.b16 %v356
    %v748 = vunpack.c.l.b16 %v357
    %v749 = vunpack.c.h.b16 %v357
    %v750 = vunpack.c.l.b16 %v358
    %v751 = vunpack.c.h.b16 %v358
    %v752 = vunpack.c.l.b16 %v359
    %v753 = vunpack.c.h.b16 %v359
    %v754 = vunpack.c.l.b16 %v360
    %v755 = vunpack.c.h.b16 %v360
    %v756 = vunpack.c.l.b16 %v361
    %v757 = vunpack.c.h.b16 %v361
    %v758 = vunpack.c.l.b16 %v362
    %v759 = vunpack.c.h.b16 %v362
    %v760 = vunpack.c.l.b16 %v363
    %v761 = vunpack.c.h.b16 %v363
    %v762 = vunpack.c.l.b16 %v364
    %v763 = vunpack.c.h.b16 %v364
    %v764 = vunpack.c.l.b16 %v365
    %v765 = vunpack.c.h.b16 %v365
    %v766 = vunpack.c.l.b16 %v366
    %v767 = vunpack.c.h.b16 %v366
    %v768 = vunpack.c.l.b16 %v367
    %v769 = vunpack.c.h.b16 %v367
    %v770 = vunpack.c.l.b16 %v368
    %v771 = vunpack.c.h.b16 %v368
    %v772 = vunpack.c.l.b16 %v369
    %v773 = vunpack.c.h.b16 %v369
    %v774 = vunpack.c.l.b16 %v370
    %v775 = vunpack.c.h.b16 %v370
    %v776 = vunpack.c.l.b16 %v371
    %v777 = vunpack.c.h.b16 %v371
    %v778 = vunpack.c.l.b16 %v372
    %v779 = vunpack.c.h.b16 %v372
    %v780 = vunpack.c.l.b16 %v373
    %v781 = vunpack.c.h.b16 %v373
    %v782 = vunpack.c.l.b16 %v374
    %v783 = vunpack.c.h.b16 %v374
    %v784 = vunpack.c.l.b16 %v375
    %v785 = vunpack.c.h.b16 %v375
    %v786 = vunpack.c.l.b16 %v376
    %v787 = vunpack.c.h.b16 %v376
    %v788 = vunpack.c.l.b16 %v377
    %v789 = vunpack.c.h.b16 %v377
    %v790 = vunpack.c.l.b16 %v378
    %v791 = vunpack.c.h.b16 %v378
    %v792 = vunpack.c.l.b16 %v379
    %v793 = vunpack.c.h.b16 %v379
    %v794 = vunpack.c.l.b16 %v380
    %v795 = vunpack.c.h.b16 %v380
    %v796 = vunpack.c.l.b16 %v381
    %v797 = vunpack.c.h.b16 %v381
    %v798 = vunpack.c.l.b16 %v382
    %v799 = vunpack.c.h.b16 %v382
    %v800 = vunpack.c.l.b16 %v383
    %v801 = vunpack.c.h.b16 %v383
    %v802 = vunpack.c.l.b16 %v384
    %v803 = vunpack.c.h.b16 %v384
    %v804 = vunpack.c.l.b16 %v385
    %v805 = vunpack.c.h.b16 %v385
    %v806 = vunpack.c.l.b16 %v386
    %v807 = vunpack.c.h.b16 %v386
    %v808 = vunpack.c.l.b16 %v387
    %v809 = vunpack.c.h.b16 %v387
    %v810 = vunpack.c.l.b16 %v388
    %v811 = vunpack.c.h.b16 %v388
    %v812 = vunpack.c.l.b16 %v389
    %v813 = vunpack.c.h.b16 %v389
    %v814 = vunpack.c.l.b16 %v390
    %v815 = vunpack.c.h.b16 %v390
    %v816 = vunpack.c.l.b16 %v391
    %v817 = vunpack.c.h.b16 %v391
    %v818 = vpack.c.b16 %v570, %v562
    %v819 = vpack.c.b16 %v571, %v563
    %v820 = vpack.c.b16 %v572, %v564
    %v821 = vpack.c.b16 %v573, %v565
    %v822 = vpack.c.b16 %v574, %v566
    %v823 = vpack.c.b16 %v575, %v567
    %v824 = vpack.c.b16 %v576, %v568
    %v825 = vpack.c.b16 %v577, %v569
    %v826 = vpack.c.b16 %v586, %v578
    %v827 = vpack.c.b16 %v587, %v579
    %v828 = vpack.c.b16 %v588, %v580
    %v829 = vpack.c.b16 %v589, %v581
    %v830 = vpack.c.b16 %v590, %v582
    %v831 = vpack.c.b16 %v591, %v583
    %v832 = vpack.c.b16 %v592, %v584
    %v833 = vpack.c.b16 %v593, %v585
    %v834 = vpack.c.b16 %v602, %v594
    %v835 = vpack.c.b16 %v603, %v595
    %v836 = vpack.c.b16 %v604, %v596
    %v837 = vpack.c.b16 %v605, %v597
    %v838 = vpack.c.b16 %v606, %v598
    %v839 = vpack.c.b16 %v607, %v599
    %v840 = vpack.c.b16 %v608, %v600
    %v841 = vpack.c.b16 %v609, %v601
    %v842 = vpack.c.b16 %v618, %v610
    %v843 = vpack.c.b16 %v619, %v611
    %v844 = vpack.c.b16 %v620, %v612
    %v845 = vpack.c.b16 %v621, %v613
    %v846 = vpack.c.b16 %v622, %v614
    %v847 = vpack.c.b16 %v623, %v615
    %v848 = vpack.c.b16 %v624, %v616
    %v849 = vpack.c.b16 %v625, %v617
    %v850 = vpack.c.b16 %v634, %v626
    %v851 = vpack.c.b16 %v635, %v627
    %v852 = vpack.c.b16 %v636, %v628
    %v853 = vpack.c.b16 %v637, %v629
    %v854 = vpack.c.b16 %v638, %v630
    %v855 = vpack.c.b16 %v639, %v631
    %v856 = vpack.c.b16 %v640, %v632
    %v857 = vpack.c.b16 %v641, %v633
    %v858 = vpack.c.b16 %v650, %v642
    %v859 = vpack.c.b16 %v651, %v643
    %v860 = vpack.c.b16 %v652, %v644
    %v861 = vpack.c.b16 %v653, %v645
    %v862 = vpack.c.b16 %v654, %v646
    %v863 = vpack.c.b16 %v655, %v647
    %v864 = vpack.c.b16 %v656, %v648
    %v865 = vpack.c.b16 %v657, %v649
    %v866 = vpack.c.b16 %v666, %v658
    %v867 = vpack.c.b16 %v667, %v659
    %v868 = vpack.c.b16 %v668, %v660
    %v869 = vpack.c.b16 %v669, %v661
    %v870 = vpack.c.b16 %v670, %v662
    %v871 = vpack.c.b16 %v671, %v663
    %v872 = vpack.c.b16 %v672, %v664
    %v873 = vpack.c.b16 %v673, %v665
    %v874 = vpack.c.b16 %v682, %v674
    %v875 = vpack.c.b16 %v683, %v675
    %v876 = vpack.c.b16 %v684, %v676
    %v877 = vpack.c.b16 %v685, %v677
    %v878 = vpack.c.b16 %v686, %v678
    %v879 = vpack.c.b16 %v687, %v679
    %v880 = vpack.c.b16 %v688, %v680
    %v881 = vpack.c.b16 %v689, %v681
    %v882 = vpack.c.b16 %v698, %v690
    %v883 = vpack.c.b16 %v699, %v691
    %v884 = vpack.c.b16 %v700, %v692
    %v885 = vpack.c.b16 %v701, %v693
    %v886 = vpack.c.b16 %v702, %v694
    %v887 = vpack.c.b16 %v703, %v695
    %v888 = vpack.c.b16 %v704, %v696
    %v889 = vpack.c.b16 %v705, %v697
    %v890 = vpack.c.b16 %v714, %v706
    %v891 = vpack.c.b16 %v715, %v707
    %v892 = vpack.c.b16 %v716, %v708
    %v893 = vpack.c.b16 %v717, %v709
    %v894 = vpack.c.b16 %v718, %v710
    %v895 = vpack.c.b16 %v719, %v711
    %v896 = vpack.c.b16 %v720, %v712
    %v897 = vpack.c.b16 %v721, %v713
    %v898 = vpack.c.b16 %v730, %v722
    %v899 = vpack.c.b16 %v731, %v723
    %v900 = vpack.c.b16 %v732, %v724
    %v901 = vpack.c.b16 %v733, %v725
    %v902 = vpack.c.b16 %v734, %v726
    %v903 = vpack.c.b16 %v735, %v727
    %v904 = vpack.c.b16 %v736, %v728
    %v905 = vpack.c.b16 %v737, %v729
    %v906 = vpack.c.b16 %v746, %v738
    %v907 = vpack.c.b16 %v747, %v739
    %v908 = vpack.c.b16 %v748, %v740
    %v909 = vpack.c.b16 %v749, %v741
    %v910 = vpack.c.b16 %v750, %v742
    %v911 = vpack.c.b16 %v751, %v743
    %v912 = vpack.c.b16 %v752, %v744
    %v913 = vpack.c.b16 %v753, %v745
    %v914 = vpack.c.b16 %v762, %v754
    %v915 = vpack.c.b16 %v763, %v755
    %v916 = vpack.c.b16 %v764, %v756
    %v917 = vpack.c.b16 %v765, %v757
    %v918 = vpack.c.b16 %v766, %v758
    %v919 = vpack.c.b16 %v767, %v759
    %v920 = vpack.c.b16 %v768, %v760
    %v921 = vpack.c.b16 %v769, %v761
    %v922 = vpack.c.b16 %v778, %v770
    %v923 = vpack.c.b16 %v779, %v771
    %v924 = vpack.c.b16 %v780, %v772
    %v925 = vpack.c.b16 %v781, %v773
    %v926 = vpack.c.b16 %v782, %v774
    %v927 = vpack.c.b16 %v783, %v775
    %v928 = vpack.c.b16 %v784, %v776
    %v929 = vpack.c.b16 %v785, %v777
    %v930 = vpack.c.b16 %v794, %v786
    %v931 = vpack.c.b16 %v795, %v787
    %v932 = vpack.c.b16 %v796, %v788
    %v933 = vpack.c.b16 %v797, %v789
    %v934 = vpack.c.b16 %v798, %v790
    %v935 = vpack.c.b16 %v799, %v791
    %v936 = vpack.c.b16 %v800, %v792
    %v937 = vpack.c.b16 %v801, %v793
    %v938 = vpack.c.b16 %v810, %v802
    %v939 = vpack.c.b16 %v811, %v803
    %v940 = vpack.c.b16 %v812, %v804
    %v941 = vpack.c.b16 %v813, %v805
    %v942 = vpack.c.b16 %v814, %v806
    %v943 = vpack.c.b16 %v815, %v807
    %v944 = vpack.c.b16 %v816, %v808
    %v945 = vpack.c.b16 %v817, %v809
    %1074 = vmatprep.subr.bf16.mxu0 %v819
    %1075 = vmatpush1.bf16.msra.mxu0 %v818
    %1076 = vmatprep.subr.bf16.mxu0 %v827
    %1077 = vmatpush1.bf16.msra.mxu0 %v826
    %1078 = vmatprep.subr.bf16.mxu0 %v835
    %1079 = vmatpush1.bf16.msra.mxu0 %v834
    %1080 = vmatprep.subr.bf16.mxu0 %v843
    %1081 = vmatpush1.bf16.msra.mxu0 %v842
    %1082 = vmatprep.subr.bf16.mxu0 %v851
    %1083 = vmatpush1.bf16.msra.mxu0 %v850
    %1084 = vmatprep.subr.bf16.mxu0 %v859
    %1085 = vmatpush1.bf16.msra.mxu0 %v858
    %1086 = vmatprep.subr.bf16.mxu0 %v867
    %1087 = vmatpush1.bf16.msra.mxu0 %v866
    %1088 = vmatprep.subr.bf16.mxu0 %v875
    %1089 = vmatpush1.bf16.msra.mxu0 %v874
    %1090 = vmatprep.subr.bf16.mxu0 %v883
    %1091 = vmatpush1.bf16.msra.mxu0 %v882
    %1092 = vmatprep.subr.bf16.mxu0 %v891
    %1093 = vmatpush1.bf16.msra.mxu0 %v890
    %1094 = vmatprep.subr.bf16.mxu0 %v899
    %1095 = vmatpush1.bf16.msra.mxu0 %v898
    %1096 = vmatprep.subr.bf16.mxu0 %v907
    %1097 = vmatpush1.bf16.msra.mxu0 %v906
    %1098 = vmatprep.subr.bf16.mxu0 %v915
    %1099 = vmatpush1.bf16.msra.mxu0 %v914
    %1100 = vmatprep.subr.bf16.mxu0 %v923
    %1101 = vmatpush1.bf16.msra.mxu0 %v922
    %1102 = vmatprep.subr.bf16.mxu0 %v931
    %1103 = vmatpush1.bf16.msra.mxu0 %v930
    %1104 = vmatprep.subr.bf16.mxu0 %v939
    %1105 = vmatpush1.bf16.msra.mxu0 %v938
    %1106 = vmatprep.mubr.bf16.mxu0 %v263
    %1107 = vmatmul.mubr.bf16.gmra.mrb[0].mxu0 %v262
    %v1108 = vpop.f32.mrb[0].mxu0
    %v1109 = vadd.f32 %v397, %v1108
    %v1110 = vpop.f32.mrb[0].mxu0
    %v1111 = vadd.f32 %v401, %v1110
    %v1112 = vpop.f32.mrb[0].mxu0
    %v1113 = vpop.f32.mrb[0].mxu0
    %1114 = vdwg.mxu0
    %1115 = vmatprep.subr.bf16.mxu0 %v821
    %1116 = vmatpush1.bf16.msra.mxu0 %v820
    %1117 = vmatprep.subr.bf16.mxu0 %v829
    %1118 = vmatpush1.bf16.msra.mxu0 %v828
    %1119 = vmatprep.subr.bf16.mxu0 %v837
    %1120 = vmatpush1.bf16.msra.mxu0 %v836
    %1121 = vmatprep.subr.bf16.mxu0 %v845
    %1122 = vmatpush1.bf16.msra.mxu0 %v844
    %1123 = vmatprep.subr.bf16.mxu0 %v853
    %1124 = vmatpush1.bf16.msra.mxu0 %v852
    %1125 = vmatprep.subr.bf16.mxu0 %v861
    %1126 = vmatpush1.bf16.msra.mxu0 %v860
    %1127 = vmatprep.subr.bf16.mxu0 %v869
    %1128 = vmatpush1.bf16.msra.mxu0 %v868
    %1129 = vmatprep.subr.bf16.mxu0 %v877
    %1130 = vmatpush1.bf16.msra.mxu0 %v876
    %1131 = vmatprep.subr.bf16.mxu0 %v885
    %1132 = vmatpush1.bf16.msra.mxu0 %v884
    %1133 = vmatprep.subr.bf16.mxu0 %v893
    %1134 = vmatpush1.bf16.msra.mxu0 %v892
    %1135 = vmatprep.subr.bf16.mxu0 %v901
    %1136 = vmatpush1.bf16.msra.mxu0 %v900
    %1137 = vmatprep.subr.bf16.mxu0 %v909
    %1138 = vmatpush1.bf16.msra.mxu0 %v908
    %1139 = vmatprep.subr.bf16.mxu0 %v917
    %1140 = vmatpush1.bf16.msra.mxu0 %v916
    %1141 = vmatprep.subr.bf16.mxu0 %v925
    %1142 = vmatpush1.bf16.msra.mxu0 %v924
    %1143 = vmatprep.subr.bf16.mxu0 %v933
    %1144 = vmatpush1.bf16.msra.mxu0 %v932
    %1145 = vmatprep.subr.bf16.mxu0 %v941
    %1146 = vmatpush1.bf16.msra.mxu0 %v940
    %1147 = vmatprep.mubr.bf16.mxu0 %v263
    %1148 = vmatmul.mubr.bf16.gmra.mrb[0].mxu0 %v262
    %v1149 = vpop.f32.mrb[0].mxu0
    %v1150 = vadd.f32 %v405, %v1149
    %v1151 = vpop.f32.mrb[0].mxu0
    %v1152 = vadd.f32 %v409, %v1151
    %v1153 = vpop.f32.mrb[0].mxu0
    %v1154 = vpop.f32.mrb[0].mxu0
    %1155 = vdwg.mxu0
    %1156 = vmatprep.subr.bf16.mxu0 %v823
    %1157 = vmatpush1.bf16.msra.mxu0 %v822
    %1158 = vmatprep.subr.bf16.mxu0 %v831
    %1159 = vmatpush1.bf16.msra.mxu0 %v830
    %1160 = vmatprep.subr.bf16.mxu0 %v839
    %1161 = vmatpush1.bf16.msra.mxu0 %v838
    %1162 = vmatprep.subr.bf16.mxu0 %v847
    %1163 = vmatpush1.bf16.msra.mxu0 %v846
    %1164 = vmatprep.subr.bf16.mxu0 %v855
    %1165 = vmatpush1.bf16.msra.mxu0 %v854
    %1166 = vmatprep.subr.bf16.mxu0 %v863
    %1167 = vmatpush1.bf16.msra.mxu0 %v862
    %1168 = vmatprep.subr.bf16.mxu0 %v871
    %1169 = vmatpush1.bf16.msra.mxu0 %v870
    %1170 = vmatprep.subr.bf16.mxu0 %v879
    %1171 = vmatpush1.bf16.msra.mxu0 %v878
    %1172 = vmatprep.subr.bf16.mxu0 %v887
    %1173 = vmatpush1.bf16.msra.mxu0 %v886
    %1174 = vmatprep.subr.bf16.mxu0 %v895
    %1175 = vmatpush1.bf16.msra.mxu0 %v894
    %1176 = vmatprep.subr.bf16.mxu0 %v903
    %1177 = vmatpush1.bf16.msra.mxu0 %v902
    %1178 = vmatprep.subr.bf16.mxu0 %v911
    %1179 = vmatpush1.bf16.msra.mxu0 %v910
    %1180 = vmatprep.subr.bf16.mxu0 %v919
    %1181 = vmatpush1.bf16.msra.mxu0 %v918
    %1182 = vmatprep.subr.bf16.mxu0 %v927
    %1183 = vmatpush1.bf16.msra.mxu0 %v926
    %1184 = vmatprep.subr.bf16.mxu0 %v935
    %1185 = vmatpush1.bf16.msra.mxu0 %v934
    %1186 = vmatprep.subr.bf16.mxu0 %v943
    %1187 = vmatpush1.bf16.msra.mxu0 %v942
    %1188 = vmatprep.mubr.bf16.mxu0 %v263
    %1189 = vmatmul.mubr.bf16.gmra.mrb[0].mxu0 %v262
    %v1190 = vpop.f32.mrb[0].mxu0
    %v1191 = vadd.f32 %v413, %v1190
    %v1192 = vpop.f32.mrb[0].mxu0
    %v1193 = vadd.f32 %v417, %v1192
    %v1194 = vpop.f32.mrb[0].mxu0
    %v1195 = vpop.f32.mrb[0].mxu0
    %1196 = vdwg.mxu0
    %1197 = vmatprep.subr.bf16.mxu0 %v825
    %1198 = vmatpush1.bf16.msra.mxu0 %v824
    %1199 = vmatprep.subr.bf16.mxu0 %v833
    %1200 = vmatpush1.bf16.msra.mxu0 %v832
    %1201 = vmatprep.subr.bf16.mxu0 %v841
    %1202 = vmatpush1.bf16.msra.mxu0 %v840
    %1203 = vmatprep.subr.bf16.mxu0 %v849
    %1204 = vmatpush1.bf16.msra.mxu0 %v848
    %1205 = vmatprep.subr.bf16.mxu0 %v857
    %1206 = vmatpush1.bf16.msra.mxu0 %v856
    %1207 = vmatprep.subr.bf16.mxu0 %v865
    %1208 = vmatpush1.bf16.msra.mxu0 %v864
    %1209 = vmatprep.subr.bf16.mxu0 %v873
    %1210 = vmatpush1.bf16.msra.mxu0 %v872
    %1211 = vmatprep.subr.bf16.mxu0 %v881
    %1212 = vmatpush1.bf16.msra.mxu0 %v880
    %1213 = vmatprep.subr.bf16.mxu0 %v889
    %1214 = vmatpush1.bf16.msra.mxu0 %v888
    %1215 = vmatprep.subr.bf16.mxu0 %v897
    %1216 = vmatpush1.bf16.msra.mxu0 %v896
    %1217 = vmatprep.subr.bf16.mxu0 %v905
    %1218 = vmatpush1.bf16.msra.mxu0 %v904
    %1219 = vmatprep.subr.bf16.mxu0 %v913
    %1220 = vmatpush1.bf16.msra.mxu0 %v912
    %1221 = vmatprep.subr.bf16.mxu0 %v921
    %1222 = vmatpush1.bf16.msra.mxu0 %v920
    %1223 = vmatprep.subr.bf16.mxu0 %v929
    %1224 = vmatpush1.bf16.msra.mxu0 %v928
    %1225 = vmatprep.subr.bf16.mxu0 %v937
    %1226 = vmatpush1.bf16.msra.mxu0 %v936
    %1227 = vmatprep.subr.bf16.mxu0 %v945
    %1228 = vmatpush1.bf16.msra.mxu0 %v944
    %1229 = vmatprep.mubr.bf16.mxu0 %v263
    %1230 = vmatmul.mubr.bf16.gmra.mrb[0].mxu0 %v262
    %v1231 = vpop.f32.mrb[0].mxu0
    %v1232 = vadd.f32 %v421, %v1231
    %v1233 = vpop.f32.mrb[0].mxu0
    %v1234 = vadd.f32 %v425, %v1233
    %v1235 = vpop.f32.mrb[0].mxu0
    %v1236 = vpop.f32.mrb[0].mxu0
    %1237 = vdwg.mxu0
    %v1238 = vmax.f32 %v1109, 0.0
    %v1239 = vmax.f32 %v1111, 0.0
    %v1240 = vmax.f32 %v1150, 0.0
    %v1241 = vmax.f32 %v1152, 0.0
    %v1242 = vmax.f32 %v1191, 0.0
    %v1243 = vmax.f32 %v1193, 0.0
    %v1244 = vmax.f32 %v1232, 0.0
    %v1245 = vmax.f32 %v1234, 0.0
    %v1246 = vpack.c.bf16 %v1238, %v1238
    %v1247 = vpack.c.bf16 %v1239, %v1239
    %v1248 = vpack.c.bf16 %v1240, %v1240
    %v1249 = vpack.c.bf16 %v1241, %v1241
    %v1250 = vpack.c.bf16 %v1242, %v1242
    %v1251 = vpack.c.bf16 %v1243, %v1243
    %v1252 = vpack.c.bf16 %v1244, %v1244
    %v1253 = vpack.c.bf16 %v1245, %v1245
    %v1254 = vld [vmem:[#allocation11] sm:$0xff]
    %v1255 = vld [vmem:[#allocation11 + $0x8] sm:$0xff]
    %v1256 = vld [vmem:[#allocation11 + $0x10] sm:$0xff]
    %v1257 = vld [vmem:[#allocation11 + $0x18] sm:$0xff]
    %v1258 = vld [vmem:[#allocation11 + $0x20] sm:$0xff]
    %v1259 = vld [vmem:[#allocation11 + $0x28] sm:$0xff]
    %v1260 = vld [vmem:[#allocation11 + $0x30] sm:$0xff]
    %v1261 = vld [vmem:[#allocation11 + $0x38] sm:$0xff]
    %v1262 = vld [vmem:[#allocation11 + $0x40] sm:$0xff]
    %v1263 = vld [vmem:[#allocation11 + $0x48] sm:$0xff]
    %v1264 = vld [vmem:[#allocation11 + $0x50] sm:$0xff]
    %v1265 = vld [vmem:[#allocation11 + $0x58] sm:$0xff]
    %v1266 = vld [vmem:[#allocation11 + $0x60] sm:$0xff]
    %v1267 = vld [vmem:[#allocation11 + $0x68] sm:$0xff]
    %v1268 = vld [vmem:[#allocation11 + $0x70] sm:$0xff]
    %v1269 = vld [vmem:[#allocation11 + $0x78] sm:$0xff]
    %v1270 = vld [vmem:[#allocation11 + $0x80] sm:$0xff]
    %v1271 = vld [vmem:[#allocation11 + $0x88] sm:$0xff]
    %v1272 = vld [vmem:[#allocation11 + $0x90] sm:$0xff]
    %v1273 = vld [vmem:[#allocation11 + $0x98] sm:$0xff]
    %v1274 = vld [vmem:[#allocation11 + $0xa0] sm:$0xff]
    %v1275 = vld [vmem:[#allocation11 + $0xa8] sm:$0xff]
    %v1276 = vld [vmem:[#allocation11 + $0xb0] sm:$0xff]
    %v1277 = vld [vmem:[#allocation11 + $0xb8] sm:$0xff]
    %v1278 = vld [vmem:[#allocation11 + $0xc0] sm:$0xff]
    %v1279 = vld [vmem:[#allocation11 + $0xc8] sm:$0xff]
    %v1280 = vld [vmem:[#allocation11 + $0xd0] sm:$0xff]
    %v1281 = vld [vmem:[#allocation11 + $0xd8] sm:$0xff]
    %v1282 = vld [vmem:[#allocation11 + $0xe0] sm:$0xff]
    %v1283 = vld [vmem:[#allocation11 + $0xe8] sm:$0xff]
    %v1284 = vld [vmem:[#allocation11 + $0xf0] sm:$0xff]
    %v1285 = vld [vmem:[#allocation11 + $0xf8] sm:$0xff]
    %v1286 = vld [vmem:[#allocation11 + $0x100] sm:$0xff]
    %v1287 = vld [vmem:[#allocation11 + $0x108] sm:$0xff]
    %v1288 = vld [vmem:[#allocation11 + $0x110] sm:$0xff]
    %v1289 = vld [vmem:[#allocation11 + $0x118] sm:$0xff]
    %v1290 = vld [vmem:[#allocation11 + $0x120] sm:$0xff]
    %v1291 = vld [vmem:[#allocation11 + $0x128] sm:$0xff]
    %v1292 = vld [vmem:[#allocation11 + $0x130] sm:$0xff]
    %v1293 = vld [vmem:[#allocation11 + $0x138] sm:$0xff]
    %v1294 = vld [vmem:[#allocation11 + $0x140] sm:$0xff]
    %v1295 = vld [vmem:[#allocation11 + $0x148] sm:$0xff]
    %v1296 = vld [vmem:[#allocation11 + $0x150] sm:$0xff]
    %v1297 = vld [vmem:[#allocation11 + $0x158] sm:$0xff]
    %v1298 = vld [vmem:[#allocation11 + $0x160] sm:$0xff]
    %v1299 = vld [vmem:[#allocation11 + $0x168] sm:$0xff]
    %v1300 = vld [vmem:[#allocation11 + $0x170] sm:$0xff]
    %v1301 = vld [vmem:[#allocation11 + $0x178] sm:$0xff]
    %v1302 = vld [vmem:[#allocation11 + $0x180] sm:$0xff]
    %v1303 = vld [vmem:[#allocation11 + $0x188] sm:$0xff]
    %v1304 = vld [vmem:[#allocation11 + $0x190] sm:$0xff]
    %v1305 = vld [vmem:[#allocation11 + $0x198] sm:$0xff]
    %v1306 = vld [vmem:[#allocation11 + $0x1a0] sm:$0xff]
    %v1307 = vld [vmem:[#allocation11 + $0x1a8] sm:$0xff]
    %v1308 = vld [vmem:[#allocation11 + $0x1b0] sm:$0xff]
    %v1309 = vld [vmem:[#allocation11 + $0x1b8] sm:$0xff]
    %v1310 = vld [vmem:[#allocation11 + $0x1c0] sm:$0xff]
    %v1311 = vld [vmem:[#allocation11 + $0x1c8] sm:$0xff]
    %v1312 = vld [vmem:[#allocation11 + $0x1d0] sm:$0xff]
    %v1313 = vld [vmem:[#allocation11 + $0x1d8] sm:$0xff]
    %v1314 = vld [vmem:[#allocation11 + $0x1e0] sm:$0xff]
    %v1315 = vld [vmem:[#allocation11 + $0x1e8] sm:$0xff]
    %v1316 = vld [vmem:[#allocation11 + $0x1f0] sm:$0xff]
    %v1317 = vld [vmem:[#allocation11 + $0x1f8] sm:$0xff]
    %v1318 = vld [vmem:[#allocation11 + $0x200] sm:$0xff]
    %v1319 = vld [vmem:[#allocation11 + $0x208] sm:$0xff]
    %v1320 = vld [vmem:[#allocation11 + $0x210] sm:$0xff]
    %v1321 = vld [vmem:[#allocation11 + $0x218] sm:$0xff]
    %v1322 = vld [vmem:[#allocation11 + $0x220] sm:$0xff]
    %v1323 = vld [vmem:[#allocation11 + $0x228] sm:$0xff]
    %v1324 = vld [vmem:[#allocation11 + $0x230] sm:$0xff]
    %v1325 = vld [vmem:[#allocation11 + $0x238] sm:$0xff]
    %v1326 = vld [vmem:[#allocation11 + $0x240] sm:$0xff]
    %v1327 = vld [vmem:[#allocation11 + $0x248] sm:$0xff]
    %v1328 = vld [vmem:[#allocation11 + $0x250] sm:$0xff]
    %v1329 = vld [vmem:[#allocation11 + $0x258] sm:$0xff]
    %v1330 = vld [vmem:[#allocation11 + $0x260] sm:$0xff]
    %v1331 = vld [vmem:[#allocation11 + $0x268] sm:$0xff]
    %v1332 = vld [vmem:[#allocation11 + $0x270] sm:$0xff]
    %v1333 = vld [vmem:[#allocation11 + $0x278] sm:$0xff]
    %v1334 = vld [vmem:[#allocation11 + $0x280] sm:$0xff]
    %v1335 = vld [vmem:[#allocation11 + $0x288] sm:$0xff]
    %v1336 = vld [vmem:[#allocation11 + $0x290] sm:$0xff]
    %v1337 = vld [vmem:[#allocation11 + $0x298] sm:$0xff]
    %v1338 = vld [vmem:[#allocation11 + $0x2a0] sm:$0xff]
    %v1339 = vld [vmem:[#allocation11 + $0x2a8] sm:$0xff]
    %v1340 = vld [vmem:[#allocation11 + $0x2b0] sm:$0xff]
    %v1341 = vld [vmem:[#allocation11 + $0x2b8] sm:$0xff]
    %v1342 = vld [vmem:[#allocation11 + $0x2c0] sm:$0xff]
    %v1343 = vld [vmem:[#allocation11 + $0x2c8] sm:$0xff]
    %v1344 = vld [vmem:[#allocation11 + $0x2d0] sm:$0xff]
    %v1345 = vld [vmem:[#allocation11 + $0x2d8] sm:$0xff]
    %v1346 = vld [vmem:[#allocation11 + $0x2e0] sm:$0xff]
    %v1347 = vld [vmem:[#allocation11 + $0x2e8] sm:$0xff]
    %v1348 = vld [vmem:[#allocation11 + $0x2f0] sm:$0xff]
    %v1349 = vld [vmem:[#allocation11 + $0x2f8] sm:$0xff]
    %v1350 = vld [vmem:[#allocation11 + $0x300] sm:$0xff]
    %v1351 = vld [vmem:[#allocation11 + $0x308] sm:$0xff]
    %v1352 = vld [vmem:[#allocation11 + $0x310] sm:$0xff]
    %v1353 = vld [vmem:[#allocation11 + $0x318] sm:$0xff]
    %v1354 = vld [vmem:[#allocation11 + $0x320] sm:$0xff]
    %v1355 = vld [vmem:[#allocation11 + $0x328] sm:$0xff]
    %v1356 = vld [vmem:[#allocation11 + $0x330] sm:$0xff]
    %v1357 = vld [vmem:[#allocation11 + $0x338] sm:$0xff]
    %v1358 = vld [vmem:[#allocation11 + $0x340] sm:$0xff]
    %v1359 = vld [vmem:[#allocation11 + $0x348] sm:$0xff]
    %v1360 = vld [vmem:[#allocation11 + $0x350] sm:$0xff]
    %v1361 = vld [vmem:[#allocation11 + $0x358] sm:$0xff]
    %v1362 = vld [vmem:[#allocation11 + $0x360] sm:$0xff]
    %v1363 = vld [vmem:[#allocation11 + $0x368] sm:$0xff]
    %v1364 = vld [vmem:[#allocation11 + $0x370] sm:$0xff]
    %v1365 = vld [vmem:[#allocation11 + $0x378] sm:$0xff]
    %v1366 = vld [vmem:[#allocation11 + $0x380] sm:$0xff]
    %v1367 = vld [vmem:[#allocation11 + $0x388] sm:$0xff]
    %v1368 = vld [vmem:[#allocation11 + $0x390] sm:$0xff]
    %v1369 = vld [vmem:[#allocation11 + $0x398] sm:$0xff]
    %v1370 = vld [vmem:[#allocation11 + $0x3a0] sm:$0xff]
    %v1371 = vld [vmem:[#allocation11 + $0x3a8] sm:$0xff]
    %v1372 = vld [vmem:[#allocation11 + $0x3b0] sm:$0xff]
    %v1373 = vld [vmem:[#allocation11 + $0x3b8] sm:$0xff]
    %v1374 = vld [vmem:[#allocation11 + $0x3c0] sm:$0xff]
    %v1375 = vld [vmem:[#allocation11 + $0x3c8] sm:$0xff]
    %v1376 = vld [vmem:[#allocation11 + $0x3d0] sm:$0xff]
    %v1377 = vld [vmem:[#allocation11 + $0x3d8] sm:$0xff]
    %v1378 = vld [vmem:[#allocation11 + $0x3e0] sm:$0xff]
    %v1379 = vld [vmem:[#allocation11 + $0x3e8] sm:$0xff]
    %v1380 = vld [vmem:[#allocation11 + $0x3f0] sm:$0xff]
    %v1381 = vld [vmem:[#allocation11 + $0x3f8] sm:$0xff]
    %v1382 = vld [vmem:[#allocation11 + $0x400] sm:$0xff]
    %v1383 = vld [vmem:[#allocation11 + $0x408] sm:$0xff]
    %v1384 = vld [vmem:[#allocation11 + $0x410] sm:$0xff]
    %v1385 = vld [vmem:[#allocation11 + $0x418] sm:$0xff]
    %v1386 = vld [vmem:[#allocation11 + $0x420] sm:$0xff]
    %v1387 = vld [vmem:[#allocation11 + $0x428] sm:$0xff]
    %v1388 = vld [vmem:[#allocation11 + $0x430] sm:$0xff]
    %v1389 = vld [vmem:[#allocation11 + $0x438] sm:$0xff]
    %v1390 = vld [vmem:[#allocation11 + $0x440] sm:$0xff]
    %v1391 = vld [vmem:[#allocation11 + $0x448] sm:$0xff]
    %v1392 = vld [vmem:[#allocation11 + $0x450] sm:$0xff]
    %v1393 = vld [vmem:[#allocation11 + $0x458] sm:$0xff]
    %v1394 = vld [vmem:[#allocation11 + $0x460] sm:$0xff]
    %v1395 = vld [vmem:[#allocation11 + $0x468] sm:$0xff]
    %v1396 = vld [vmem:[#allocation11 + $0x470] sm:$0xff]
    %v1397 = vld [vmem:[#allocation11 + $0x478] sm:$0xff]
    %v1398 = vld [vmem:[#allocation11 + $0x480] sm:$0xff]
    %v1399 = vld [vmem:[#allocation11 + $0x488] sm:$0xff]
    %v1400 = vld [vmem:[#allocation11 + $0x490] sm:$0xff]
    %v1401 = vld [vmem:[#allocation11 + $0x498] sm:$0xff]
    %v1402 = vld [vmem:[#allocation11 + $0x4a0] sm:$0xff]
    %v1403 = vld [vmem:[#allocation11 + $0x4a8] sm:$0xff]
    %v1404 = vld [vmem:[#allocation11 + $0x4b0] sm:$0xff]
    %v1405 = vld [vmem:[#allocation11 + $0x4b8] sm:$0xff]
    %v1406 = vld [vmem:[#allocation11 + $0x4c0] sm:$0xff]
    %v1407 = vld [vmem:[#allocation11 + $0x4c8] sm:$0xff]
    %v1408 = vld [vmem:[#allocation11 + $0x4d0] sm:$0xff]
    %v1409 = vld [vmem:[#allocation11 + $0x4d8] sm:$0xff]
    %v1410 = vld [vmem:[#allocation11 + $0x4e0] sm:$0xff]
    %v1411 = vld [vmem:[#allocation11 + $0x4e8] sm:$0xff]
    %v1412 = vld [vmem:[#allocation11 + $0x4f0] sm:$0xff]
    %v1413 = vld [vmem:[#allocation11 + $0x4f8] sm:$0xff]
    %v1414 = vld [vmem:[#allocation11 + $0x500] sm:$0xff]
    %v1415 = vld [vmem:[#allocation11 + $0x508] sm:$0xff]
    %v1416 = vld [vmem:[#allocation11 + $0x510] sm:$0xff]
    %v1417 = vld [vmem:[#allocation11 + $0x518] sm:$0xff]
    %v1418 = vld [vmem:[#allocation11 + $0x520] sm:$0xff]
    %v1419 = vld [vmem:[#allocation11 + $0x528] sm:$0xff]
    %v1420 = vld [vmem:[#allocation11 + $0x530] sm:$0xff]
    %v1421 = vld [vmem:[#allocation11 + $0x538] sm:$0xff]
    %v1422 = vld [vmem:[#allocation11 + $0x540] sm:$0xff]
    %v1423 = vld [vmem:[#allocation11 + $0x548] sm:$0xff]
    %v1424 = vld [vmem:[#allocation11 + $0x550] sm:$0xff]
    %v1425 = vld [vmem:[#allocation11 + $0x558] sm:$0xff]
    %v1426 = vld [vmem:[#allocation11 + $0x560] sm:$0xff]
    %v1427 = vld [vmem:[#allocation11 + $0x568] sm:$0xff]
    %v1428 = vld [vmem:[#allocation11 + $0x570] sm:$0xff]
    %v1429 = vld [vmem:[#allocation11 + $0x578] sm:$0xff]
    %v1430 = vld [vmem:[#allocation11 + $0x580] sm:$0xff]
    %v1431 = vld [vmem:[#allocation11 + $0x588] sm:$0xff]
    %v1432 = vld [vmem:[#allocation11 + $0x590] sm:$0xff]
    %v1433 = vld [vmem:[#allocation11 + $0x598] sm:$0xff]
    %v1434 = vld [vmem:[#allocation11 + $0x5a0] sm:$0xff]
    %v1435 = vld [vmem:[#allocation11 + $0x5a8] sm:$0xff]
    %v1436 = vld [vmem:[#allocation11 + $0x5b0] sm:$0xff]
    %v1437 = vld [vmem:[#allocation11 + $0x5b8] sm:$0xff]
    %v1438 = vld [vmem:[#allocation11 + $0x5c0] sm:$0xff]
    %v1439 = vld [vmem:[#allocation11 + $0x5c8] sm:$0xff]
    %v1440 = vld [vmem:[#allocation11 + $0x5d0] sm:$0xff]
    %v1441 = vld [vmem:[#allocation11 + $0x5d8] sm:$0xff]
    %v1442 = vld [vmem:[#allocation11 + $0x5e0] sm:$0xff]
    %v1443 = vld [vmem:[#allocation11 + $0x5e8] sm:$0xff]
    %v1444 = vld [vmem:[#allocation11 + $0x5f0] sm:$0xff]
    %v1445 = vld [vmem:[#allocation11 + $0x5f8] sm:$0xff]
    %v1446 = vld [vmem:[#allocation11 + $0x600] sm:$0xff]
    %v1447 = vld [vmem:[#allocation11 + $0x608] sm:$0xff]
    %v1448 = vld [vmem:[#allocation11 + $0x610] sm:$0xff]
    %v1449 = vld [vmem:[#allocation11 + $0x618] sm:$0xff]
    %v1450 = vld [vmem:[#allocation11 + $0x620] sm:$0xff]
    %v1451 = vld [vmem:[#allocation11 + $0x628] sm:$0xff]
    %v1452 = vld [vmem:[#allocation11 + $0x630] sm:$0xff]
    %v1453 = vld [vmem:[#allocation11 + $0x638] sm:$0xff]
    %v1454 = vld [vmem:[#allocation11 + $0x640] sm:$0xff]
    %v1455 = vld [vmem:[#allocation11 + $0x648] sm:$0xff]
    %v1456 = vld [vmem:[#allocation11 + $0x650] sm:$0xff]
    %v1457 = vld [vmem:[#allocation11 + $0x658] sm:$0xff]
    %v1458 = vld [vmem:[#allocation11 + $0x660] sm:$0xff]
    %v1459 = vld [vmem:[#allocation11 + $0x668] sm:$0xff]
    %v1460 = vld [vmem:[#allocation11 + $0x670] sm:$0xff]
    %v1461 = vld [vmem:[#allocation11 + $0x678] sm:$0xff]
    %v1462 = vld [vmem:[#allocation11 + $0x680] sm:$0xff]
    %v1463 = vld [vmem:[#allocation11 + $0x688] sm:$0xff]
    %v1464 = vld [vmem:[#allocation11 + $0x690] sm:$0xff]
    %v1465 = vld [vmem:[#allocation11 + $0x698] sm:$0xff]
    %v1466 = vld [vmem:[#allocation11 + $0x6a0] sm:$0xff]
    %v1467 = vld [vmem:[#allocation11 + $0x6a8] sm:$0xff]
    %v1468 = vld [vmem:[#allocation11 + $0x6b0] sm:$0xff]
    %v1469 = vld [vmem:[#allocation11 + $0x6b8] sm:$0xff]
    %v1470 = vld [vmem:[#allocation11 + $0x6c0] sm:$0xff]
    %v1471 = vld [vmem:[#allocation11 + $0x6c8] sm:$0xff]
    %v1472 = vld [vmem:[#allocation11 + $0x6d0] sm:$0xff]
    %v1473 = vld [vmem:[#allocation11 + $0x6d8] sm:$0xff]
    %v1474 = vld [vmem:[#allocation11 + $0x6e0] sm:$0xff]
    %v1475 = vld [vmem:[#allocation11 + $0x6e8] sm:$0xff]
    %v1476 = vld [vmem:[#allocation11 + $0x6f0] sm:$0xff]
    %v1477 = vld [vmem:[#allocation11 + $0x6f8] sm:$0xff]
    %v1478 = vld [vmem:[#allocation11 + $0x700] sm:$0xff]
    %v1479 = vld [vmem:[#allocation11 + $0x708] sm:$0xff]
    %v1480 = vld [vmem:[#allocation11 + $0x710] sm:$0xff]
    %v1481 = vld [vmem:[#allocation11 + $0x718] sm:$0xff]
    %v1482 = vld [vmem:[#allocation11 + $0x720] sm:$0xff]
    %v1483 = vld [vmem:[#allocation11 + $0x728] sm:$0xff]
    %v1484 = vld [vmem:[#allocation11 + $0x730] sm:$0xff]
    %v1485 = vld [vmem:[#allocation11 + $0x738] sm:$0xff]
    %v1486 = vld [vmem:[#allocation11 + $0x740] sm:$0xff]
    %v1487 = vld [vmem:[#allocation11 + $0x748] sm:$0xff]
    %v1488 = vld [vmem:[#allocation11 + $0x750] sm:$0xff]
    %v1489 = vld [vmem:[#allocation11 + $0x758] sm:$0xff]
    %v1490 = vld [vmem:[#allocation11 + $0x760] sm:$0xff]
    %v1491 = vld [vmem:[#allocation11 + $0x768] sm:$0xff]
    %v1492 = vld [vmem:[#allocation11 + $0x770] sm:$0xff]
    %v1493 = vld [vmem:[#allocation11 + $0x778] sm:$0xff]
    %v1494 = vld [vmem:[#allocation11 + $0x780] sm:$0xff]
    %v1495 = vld [vmem:[#allocation11 + $0x788] sm:$0xff]
    %v1496 = vld [vmem:[#allocation11 + $0x790] sm:$0xff]
    %v1497 = vld [vmem:[#allocation11 + $0x798] sm:$0xff]
    %v1498 = vld [vmem:[#allocation11 + $0x7a0] sm:$0xff]
    %v1499 = vld [vmem:[#allocation11 + $0x7a8] sm:$0xff]
    %v1500 = vld [vmem:[#allocation11 + $0x7b0] sm:$0xff]
    %v1501 = vld [vmem:[#allocation11 + $0x7b8] sm:$0xff]
    %v1502 = vld [vmem:[#allocation11 + $0x7c0] sm:$0xff]
    %v1503 = vld [vmem:[#allocation11 + $0x7c8] sm:$0xff]
    %v1504 = vld [vmem:[#allocation11 + $0x7d0] sm:$0xff]
    %v1505 = vld [vmem:[#allocation11 + $0x7d8] sm:$0xff]
    %v1506 = vld [vmem:[#allocation11 + $0x7e0] sm:$0xff]
    %v1507 = vld [vmem:[#allocation11 + $0x7e8] sm:$0xff]
    %v1508 = vld [vmem:[#allocation11 + $0x7f0] sm:$0xff]
    %v1509 = vld [vmem:[#allocation11 + $0x7f8] sm:$0xff]
    %v1510 = vld [vmem:[#allocation11 + $0x800] sm:$0xff]
    %v1511 = vld [vmem:[#allocation11 + $0x808] sm:$0xff]
    %v1512 = vld [vmem:[#allocation11 + $0x810] sm:$0xff]
    %v1513 = vld [vmem:[#allocation11 + $0x818] sm:$0xff]
    %v1514 = vld [vmem:[#allocation11 + $0x820] sm:$0xff]
    %v1515 = vld [vmem:[#allocation11 + $0x828] sm:$0xff]
    %v1516 = vld [vmem:[#allocation11 + $0x830] sm:$0xff]
    %v1517 = vld [vmem:[#allocation11 + $0x838] sm:$0xff]
    %v1518 = vld [vmem:[#allocation11 + $0x840] sm:$0xff]
    %v1519 = vld [vmem:[#allocation11 + $0x848] sm:$0xff]
    %v1520 = vld [vmem:[#allocation11 + $0x850] sm:$0xff]
    %v1521 = vld [vmem:[#allocation11 + $0x858] sm:$0xff]
    %v1522 = vld [vmem:[#allocation11 + $0x860] sm:$0xff]
    %v1523 = vld [vmem:[#allocation11 + $0x868] sm:$0xff]
    %v1524 = vld [vmem:[#allocation11 + $0x870] sm:$0xff]
    %v1525 = vld [vmem:[#allocation11 + $0x878] sm:$0xff]
    %v1526 = vld [vmem:[#allocation11 + $0x880] sm:$0xff]
    %v1527 = vld [vmem:[#allocation11 + $0x888] sm:$0xff]
    %v1528 = vld [vmem:[#allocation11 + $0x890] sm:$0xff]
    %v1529 = vld [vmem:[#allocation11 + $0x898] sm:$0xff]
    %v1530 = vld [vmem:[#allocation11 + $0x8a0] sm:$0xff]
    %v1531 = vld [vmem:[#allocation11 + $0x8a8] sm:$0xff]
    %v1532 = vld [vmem:[#allocation11 + $0x8b0] sm:$0xff]
    %v1533 = vld [vmem:[#allocation11 + $0x8b8] sm:$0xff]
    %v1534 = vld [vmem:[#allocation11 + $0x8c0] sm:$0xff]
    %v1535 = vld [vmem:[#allocation11 + $0x8c8] sm:$0xff]
    %v1536 = vld [vmem:[#allocation11 + $0x8d0] sm:$0xff]
    %v1537 = vld [vmem:[#allocation11 + $0x8d8] sm:$0xff]
    %v1538 = vld [vmem:[#allocation11 + $0x8e0] sm:$0xff]
    %v1539 = vld [vmem:[#allocation11 + $0x8e8] sm:$0xff]
    %v1540 = vld [vmem:[#allocation11 + $0x8f0] sm:$0xff]
    %v1541 = vld [vmem:[#allocation11 + $0x8f8] sm:$0xff]
    %v1542 = vld [vmem:[#allocation11 + $0x900] sm:$0xff]
    %v1543 = vld [vmem:[#allocation11 + $0x908] sm:$0xff]
    %v1544 = vld [vmem:[#allocation11 + $0x910] sm:$0xff]
    %v1545 = vld [vmem:[#allocation11 + $0x918] sm:$0xff]
    %v1546 = vld [vmem:[#allocation11 + $0x920] sm:$0xff]
    %v1547 = vld [vmem:[#allocation11 + $0x928] sm:$0xff]
    %v1548 = vld [vmem:[#allocation11 + $0x930] sm:$0xff]
    %v1549 = vld [vmem:[#allocation11 + $0x938] sm:$0xff]
    %v1550 = vld [vmem:[#allocation11 + $0x940] sm:$0xff]
    %v1551 = vld [vmem:[#allocation11 + $0x948] sm:$0xff]
    %v1552 = vld [vmem:[#allocation11 + $0x950] sm:$0xff]
    %v1553 = vld [vmem:[#allocation11 + $0x958] sm:$0xff]
    %v1554 = vld [vmem:[#allocation11 + $0x960] sm:$0xff]
    %v1555 = vld [vmem:[#allocation11 + $0x968] sm:$0xff]
    %v1556 = vld [vmem:[#allocation11 + $0x970] sm:$0xff]
    %v1557 = vld [vmem:[#allocation11 + $0x978] sm:$0xff]
    %v1558 = vld [vmem:[#allocation11 + $0x980] sm:$0xff]
    %v1559 = vld [vmem:[#allocation11 + $0x988] sm:$0xff]
    %v1560 = vld [vmem:[#allocation11 + $0x990] sm:$0xff]
    %v1561 = vld [vmem:[#allocation11 + $0x998] sm:$0xff]
    %v1562 = vld [vmem:[#allocation11 + $0x9a0] sm:$0xff]
    %v1563 = vld [vmem:[#allocation11 + $0x9a8] sm:$0xff]
    %v1564 = vld [vmem:[#allocation11 + $0x9b0] sm:$0xff]
    %v1565 = vld [vmem:[#allocation11 + $0x9b8] sm:$0xff]
    %v1566 = vld [vmem:[#allocation11 + $0x9c0] sm:$0xff]
    %v1567 = vld [vmem:[#allocation11 + $0x9c8] sm:$0xff]
    %v1568 = vld [vmem:[#allocation11 + $0x9d0] sm:$0xff]
    %v1569 = vld [vmem:[#allocation11 + $0x9d8] sm:$0xff]
    %v1570 = vld [vmem:[#allocation11 + $0x9e0] sm:$0xff]
    %v1571 = vld [vmem:[#allocation11 + $0x9e8] sm:$0xff]
    %v1572 = vld [vmem:[#allocation11 + $0x9f0] sm:$0xff]
    %v1573 = vld [vmem:[#allocation11 + $0x9f8] sm:$0xff]
    %v1574 = vld [vmem:[#allocation11 + $0xa00] sm:$0xff]
    %v1575 = vld [vmem:[#allocation11 + $0xa08] sm:$0xff]
    %v1576 = vld [vmem:[#allocation11 + $0xa10] sm:$0xff]
    %v1577 = vld [vmem:[#allocation11 + $0xa18] sm:$0xff]
    %v1578 = vld [vmem:[#allocation11 + $0xa20] sm:$0xff]
    %v1579 = vld [vmem:[#allocation11 + $0xa28] sm:$0xff]
    %v1580 = vld [vmem:[#allocation11 + $0xa30] sm:$0xff]
    %v1581 = vld [vmem:[#allocation11 + $0xa38] sm:$0xff]
    %v1582 = vld [vmem:[#allocation11 + $0xa40] sm:$0xff]
    %v1583 = vld [vmem:[#allocation11 + $0xa48] sm:$0xff]
    %v1584 = vld [vmem:[#allocation11 + $0xa50] sm:$0xff]
    %v1585 = vld [vmem:[#allocation11 + $0xa58] sm:$0xff]
    %v1586 = vld [vmem:[#allocation11 + $0xa60] sm:$0xff]
    %v1587 = vld [vmem:[#allocation11 + $0xa68] sm:$0xff]
    %v1588 = vld [vmem:[#allocation11 + $0xa70] sm:$0xff]
    %v1589 = vld [vmem:[#allocation11 + $0xa78] sm:$0xff]
    %v1590 = vld [vmem:[#allocation11 + $0xa80] sm:$0xff]
    %v1591 = vld [vmem:[#allocation11 + $0xa88] sm:$0xff]
    %v1592 = vld [vmem:[#allocation11 + $0xa90] sm:$0xff]
    %v1593 = vld [vmem:[#allocation11 + $0xa98] sm:$0xff]
    %v1594 = vld [vmem:[#allocation11 + $0xaa0] sm:$0xff]
    %v1595 = vld [vmem:[#allocation11 + $0xaa8] sm:$0xff]
    %v1596 = vld [vmem:[#allocation11 + $0xab0] sm:$0xff]
    %v1597 = vld [vmem:[#allocation11 + $0xab8] sm:$0xff]
    %v1598 = vld [vmem:[#allocation11 + $0xac0] sm:$0xff]
    %v1599 = vld [vmem:[#allocation11 + $0xac8] sm:$0xff]
    %v1600 = vld [vmem:[#allocation11 + $0xad0] sm:$0xff]
    %v1601 = vld [vmem:[#allocation11 + $0xad8] sm:$0xff]
    %v1602 = vld [vmem:[#allocation11 + $0xae0] sm:$0xff]
    %v1603 = vld [vmem:[#allocation11 + $0xae8] sm:$0xff]
    %v1604 = vld [vmem:[#allocation11 + $0xaf0] sm:$0xff]
    %v1605 = vld [vmem:[#allocation11 + $0xaf8] sm:$0xff]
    %v1606 = vld [vmem:[#allocation11 + $0xb00] sm:$0xff]
    %v1607 = vld [vmem:[#allocation11 + $0xb08] sm:$0xff]
    %v1608 = vld [vmem:[#allocation11 + $0xb10] sm:$0xff]
    %v1609 = vld [vmem:[#allocation11 + $0xb18] sm:$0xff]
    %v1610 = vld [vmem:[#allocation11 + $0xb20] sm:$0xff]
    %v1611 = vld [vmem:[#allocation11 + $0xb28] sm:$0xff]
    %v1612 = vld [vmem:[#allocation11 + $0xb30] sm:$0xff]
    %v1613 = vld [vmem:[#allocation11 + $0xb38] sm:$0xff]
    %v1614 = vld [vmem:[#allocation11 + $0xb40] sm:$0xff]
    %v1615 = vld [vmem:[#allocation11 + $0xb48] sm:$0xff]
    %v1616 = vld [vmem:[#allocation11 + $0xb50] sm:$0xff]
    %v1617 = vld [vmem:[#allocation11 + $0xb58] sm:$0xff]
    %v1618 = vld [vmem:[#allocation11 + $0xb60] sm:$0xff]
    %v1619 = vld [vmem:[#allocation11 + $0xb68] sm:$0xff]
    %v1620 = vld [vmem:[#allocation11 + $0xb70] sm:$0xff]
    %v1621 = vld [vmem:[#allocation11 + $0xb78] sm:$0xff]
    %v1622 = vld [vmem:[#allocation11 + $0xb80] sm:$0xff]
    %v1623 = vld [vmem:[#allocation11 + $0xb88] sm:$0xff]
    %v1624 = vld [vmem:[#allocation11 + $0xb90] sm:$0xff]
    %v1625 = vld [vmem:[#allocation11 + $0xb98] sm:$0xff]
    %v1626 = vld [vmem:[#allocation11 + $0xba0] sm:$0xff]
    %v1627 = vld [vmem:[#allocation11 + $0xba8] sm:$0xff]
    %v1628 = vld [vmem:[#allocation11 + $0xbb0] sm:$0xff]
    %v1629 = vld [vmem:[#allocation11 + $0xbb8] sm:$0xff]
    %v1630 = vld [vmem:[#allocation11 + $0xbc0] sm:$0xff]
    %v1631 = vld [vmem:[#allocation11 + $0xbc8] sm:$0xff]
    %v1632 = vld [vmem:[#allocation11 + $0xbd0] sm:$0xff]
    %v1633 = vld [vmem:[#allocation11 + $0xbd8] sm:$0xff]
    %v1634 = vld [vmem:[#allocation11 + $0xbe0] sm:$0xff]
    %v1635 = vld [vmem:[#allocation11 + $0xbe8] sm:$0xff]
    %v1636 = vld [vmem:[#allocation11 + $0xbf0] sm:$0xff]
    %v1637 = vld [vmem:[#allocation11 + $0xbf8] sm:$0xff]
    %v1638 = vld [vmem:[#allocation11 + $0xc00] sm:$0xff]
    %v1639 = vld [vmem:[#allocation11 + $0xc08] sm:$0xff]
    %v1640 = vld [vmem:[#allocation11 + $0xc10] sm:$0xff]
    %v1641 = vld [vmem:[#allocation11 + $0xc18] sm:$0xff]
    %v1642 = vld [vmem:[#allocation11 + $0xc20] sm:$0xff]
    %v1643 = vld [vmem:[#allocation11 + $0xc28] sm:$0xff]
    %v1644 = vld [vmem:[#allocation11 + $0xc30] sm:$0xff]
    %v1645 = vld [vmem:[#allocation11 + $0xc38] sm:$0xff]
    %v1646 = vld [vmem:[#allocation11 + $0xc40] sm:$0xff]
    %v1647 = vld [vmem:[#allocation11 + $0xc48] sm:$0xff]
    %v1648 = vld [vmem:[#allocation11 + $0xc50] sm:$0xff]
    %v1649 = vld [vmem:[#allocation11 + $0xc58] sm:$0xff]
    %v1650 = vld [vmem:[#allocation11 + $0xc60] sm:$0xff]
    %v1651 = vld [vmem:[#allocation11 + $0xc68] sm:$0xff]
    %v1652 = vld [vmem:[#allocation11 + $0xc70] sm:$0xff]
    %v1653 = vld [vmem:[#allocation11 + $0xc78] sm:$0xff]
    %v1654 = vld [vmem:[#allocation11 + $0xc80] sm:$0xff]
    %v1655 = vld [vmem:[#allocation11 + $0xc88] sm:$0xff]
    %v1656 = vld [vmem:[#allocation11 + $0xc90] sm:$0xff]
    %v1657 = vld [vmem:[#allocation11 + $0xc98] sm:$0xff]
    %v1658 = vld [vmem:[#allocation11 + $0xca0] sm:$0xff]
    %v1659 = vld [vmem:[#allocation11 + $0xca8] sm:$0xff]
    %v1660 = vld [vmem:[#allocation11 + $0xcb0] sm:$0xff]
    %v1661 = vld [vmem:[#allocation11 + $0xcb8] sm:$0xff]
    %v1662 = vld [vmem:[#allocation11 + $0xcc0] sm:$0xff]
    %v1663 = vld [vmem:[#allocation11 + $0xcc8] sm:$0xff]
    %v1664 = vld [vmem:[#allocation11 + $0xcd0] sm:$0xff]
    %v1665 = vld [vmem:[#allocation11 + $0xcd8] sm:$0xff]
    %v1666 = vld [vmem:[#allocation11 + $0xce0] sm:$0xff]
    %v1667 = vld [vmem:[#allocation11 + $0xce8] sm:$0xff]
    %v1668 = vld [vmem:[#allocation11 + $0xcf0] sm:$0xff]
    %v1669 = vld [vmem:[#allocation11 + $0xcf8] sm:$0xff]
    %v1670 = vld [vmem:[#allocation11 + $0xd00] sm:$0xff]
    %v1671 = vld [vmem:[#allocation11 + $0xd08] sm:$0xff]
    %v1672 = vld [vmem:[#allocation11 + $0xd10] sm:$0xff]
    %v1673 = vld [vmem:[#allocation11 + $0xd18] sm:$0xff]
    %v1674 = vld [vmem:[#allocation11 + $0xd20] sm:$0xff]
    %v1675 = vld [vmem:[#allocation11 + $0xd28] sm:$0xff]
    %v1676 = vld [vmem:[#allocation11 + $0xd30] sm:$0xff]
    %v1677 = vld [vmem:[#allocation11 + $0xd38] sm:$0xff]
    %v1678 = vld [vmem:[#allocation11 + $0xd40] sm:$0xff]
    %v1679 = vld [vmem:[#allocation11 + $0xd48] sm:$0xff]
    %v1680 = vld [vmem:[#allocation11 + $0xd50] sm:$0xff]
    %v1681 = vld [vmem:[#allocation11 + $0xd58] sm:$0xff]
    %v1682 = vld [vmem:[#allocation11 + $0xd60] sm:$0xff]
    %v1683 = vld [vmem:[#allocation11 + $0xd68] sm:$0xff]
    %v1684 = vld [vmem:[#allocation11 + $0xd70] sm:$0xff]
    %v1685 = vld [vmem:[#allocation11 + $0xd78] sm:$0xff]
    %v1686 = vld [vmem:[#allocation11 + $0xd80] sm:$0xff]
    %v1687 = vld [vmem:[#allocation11 + $0xd88] sm:$0xff]
    %v1688 = vld [vmem:[#allocation11 + $0xd90] sm:$0xff]
    %v1689 = vld [vmem:[#allocation11 + $0xd98] sm:$0xff]
    %v1690 = vld [vmem:[#allocation11 + $0xda0] sm:$0xff]
    %v1691 = vld [vmem:[#allocation11 + $0xda8] sm:$0xff]
    %v1692 = vld [vmem:[#allocation11 + $0xdb0] sm:$0xff]
    %v1693 = vld [vmem:[#allocation11 + $0xdb8] sm:$0xff]
    %v1694 = vld [vmem:[#allocation11 + $0xdc0] sm:$0xff]
    %v1695 = vld [vmem:[#allocation11 + $0xdc8] sm:$0xff]
    %v1696 = vld [vmem:[#allocation11 + $0xdd0] sm:$0xff]
    %v1697 = vld [vmem:[#allocation11 + $0xdd8] sm:$0xff]
    %v1698 = vld [vmem:[#allocation11 + $0xde0] sm:$0xff]
    %v1699 = vld [vmem:[#allocation11 + $0xde8] sm:$0xff]
    %v1700 = vld [vmem:[#allocation11 + $0xdf0] sm:$0xff]
    %v1701 = vld [vmem:[#allocation11 + $0xdf8] sm:$0xff]
    %v1702 = vld [vmem:[#allocation11 + $0xe00] sm:$0xff]
    %v1703 = vld [vmem:[#allocation11 + $0xe08] sm:$0xff]
    %v1704 = vld [vmem:[#allocation11 + $0xe10] sm:$0xff]
    %v1705 = vld [vmem:[#allocation11 + $0xe18] sm:$0xff]
    %v1706 = vld [vmem:[#allocation11 + $0xe20] sm:$0xff]
    %v1707 = vld [vmem:[#allocation11 + $0xe28] sm:$0xff]
    %v1708 = vld [vmem:[#allocation11 + $0xe30] sm:$0xff]
    %v1709 = vld [vmem:[#allocation11 + $0xe38] sm:$0xff]
    %v1710 = vld [vmem:[#allocation11 + $0xe40] sm:$0xff]
    %v1711 = vld [vmem:[#allocation11 + $0xe48] sm:$0xff]
    %v1712 = vld [vmem:[#allocation11 + $0xe50] sm:$0xff]
    %v1713 = vld [vmem:[#allocation11 + $0xe58] sm:$0xff]
    %v1714 = vld [vmem:[#allocation11 + $0xe60] sm:$0xff]
    %v1715 = vld [vmem:[#allocation11 + $0xe68] sm:$0xff]
    %v1716 = vld [vmem:[#allocation11 + $0xe70] sm:$0xff]
    %v1717 = vld [vmem:[#allocation11 + $0xe78] sm:$0xff]
    %v1718 = vld [vmem:[#allocation11 + $0xe80] sm:$0xff]
    %v1719 = vld [vmem:[#allocation11 + $0xe88] sm:$0xff]
    %v1720 = vld [vmem:[#allocation11 + $0xe90] sm:$0xff]
    %v1721 = vld [vmem:[#allocation11 + $0xe98] sm:$0xff]
    %v1722 = vld [vmem:[#allocation11 + $0xea0] sm:$0xff]
    %v1723 = vld [vmem:[#allocation11 + $0xea8] sm:$0xff]
    %v1724 = vld [vmem:[#allocation11 + $0xeb0] sm:$0xff]
    %v1725 = vld [vmem:[#allocation11 + $0xeb8] sm:$0xff]
    %v1726 = vld [vmem:[#allocation11 + $0xec0] sm:$0xff]
    %v1727 = vld [vmem:[#allocation11 + $0xec8] sm:$0xff]
    %v1728 = vld [vmem:[#allocation11 + $0xed0] sm:$0xff]
    %v1729 = vld [vmem:[#allocation11 + $0xed8] sm:$0xff]
    %v1730 = vld [vmem:[#allocation11 + $0xee0] sm:$0xff]
    %v1731 = vld [vmem:[#allocation11 + $0xee8] sm:$0xff]
    %v1732 = vld [vmem:[#allocation11 + $0xef0] sm:$0xff]
    %v1733 = vld [vmem:[#allocation11 + $0xef8] sm:$0xff]
    %v1734 = vld [vmem:[#allocation11 + $0xf00] sm:$0xff]
    %v1735 = vld [vmem:[#allocation11 + $0xf08] sm:$0xff]
    %v1736 = vld [vmem:[#allocation11 + $0xf10] sm:$0xff]
    %v1737 = vld [vmem:[#allocation11 + $0xf18] sm:$0xff]
    %v1738 = vld [vmem:[#allocation11 + $0xf20] sm:$0xff]
    %v1739 = vld [vmem:[#allocation11 + $0xf28] sm:$0xff]
    %v1740 = vld [vmem:[#allocation11 + $0xf30] sm:$0xff]
    %v1741 = vld [vmem:[#allocation11 + $0xf38] sm:$0xff]
    %v1742 = vld [vmem:[#allocation11 + $0xf40] sm:$0xff]
    %v1743 = vld [vmem:[#allocation11 + $0xf48] sm:$0xff]
    %v1744 = vld [vmem:[#allocation11 + $0xf50] sm:$0xff]
    %v1745 = vld [vmem:[#allocation11 + $0xf58] sm:$0xff]
    %v1746 = vld [vmem:[#allocation11 + $0xf60] sm:$0xff]
    %v1747 = vld [vmem:[#allocation11 + $0xf68] sm:$0xff]
    %v1748 = vld [vmem:[#allocation11 + $0xf70] sm:$0xff]
    %v1749 = vld [vmem:[#allocation11 + $0xf78] sm:$0xff]
    %v1750 = vld [vmem:[#allocation11 + $0xf80] sm:$0xff]
    %v1751 = vld [vmem:[#allocation11 + $0xf88] sm:$0xff]
    %v1752 = vld [vmem:[#allocation11 + $0xf90] sm:$0xff]
    %v1753 = vld [vmem:[#allocation11 + $0xf98] sm:$0xff]
    %v1754 = vld [vmem:[#allocation11 + $0xfa0] sm:$0xff]
    %v1755 = vld [vmem:[#allocation11 + $0xfa8] sm:$0xff]
    %v1756 = vld [vmem:[#allocation11 + $0xfb0] sm:$0xff]
    %v1757 = vld [vmem:[#allocation11 + $0xfb8] sm:$0xff]
    %v1758 = vld [vmem:[#allocation11 + $0xfc0] sm:$0xff]
    %v1759 = vld [vmem:[#allocation11 + $0xfc8] sm:$0xff]
    %v1760 = vld [vmem:[#allocation11 + $0xfd0] sm:$0xff]
    %v1761 = vld [vmem:[#allocation11 + $0xfd8] sm:$0xff]
    %v1762 = vld [vmem:[#allocation11 + $0xfe0] sm:$0xff]
    %v1763 = vld [vmem:[#allocation11 + $0xfe8] sm:$0xff]
    %v1764 = vld [vmem:[#allocation11 + $0xff0] sm:$0xff]
    %v1765 = vld [vmem:[#allocation11 + $0xff8] sm:$0xff]
    %v1766 = vld [vmem:[#allocation13] sm:$0xff]
    %v1768 = vlaneseq
    %v1769 = vshrl.u32 %v1768, 7
    %v1770 = vsub.s32 0, %v1769
    %v1771 = vrot.slane %v1766, %v1770
    %v1772 = vlaneseq
    %v1773 = vshrl.u32 %v1772, 7
    %v1774 = vsub.s32 1, %v1773
    %v1775 = vrot.slane %v1766, %v1774
    %v1776 = vlaneseq
    %v1777 = vshrl.u32 %v1776, 7
    %v1778 = vsub.s32 2, %v1777
    %v1779 = vrot.slane %v1766, %v1778
    %v1780 = vlaneseq
    %v1781 = vshrl.u32 %v1780, 7
    %v1782 = vsub.s32 3, %v1781
    %v1783 = vrot.slane %v1766, %v1782
    %v1784 = vlaneseq
    %v1785 = vshrl.u32 %v1784, 7
    %v1786 = vsub.s32 4, %v1785
    %v1787 = vrot.slane %v1766, %v1786
    %v1788 = vlaneseq
    %v1789 = vshrl.u32 %v1788, 7
    %v1790 = vsub.s32 5, %v1789
    %v1791 = vrot.slane %v1766, %v1790
    %v1792 = vlaneseq
    %v1793 = vshrl.u32 %v1792, 7
    %v1794 = vsub.s32 6, %v1793
    %v1795 = vrot.slane %v1766, %v1794
    %v1796 = vlaneseq
    %v1797 = vshrl.u32 %v1796, 7
    %v1798 = vsub.s32 7, %v1797
    %v1799 = vrot.slane %v1766, %v1798
    %v2320 = vunpack.c.l.b16 %v1254
    %v2321 = vunpack.c.h.b16 %v1254
    %v2322 = vunpack.c.l.b16 %v1255
    %v2323 = vunpack.c.h.b16 %v1255
    %v2324 = vunpack.c.l.b16 %v1256
    %v2325 = vunpack.c.h.b16 %v1256
    %v2326 = vunpack.c.l.b16 %v1257
    %v2327 = vunpack.c.h.b16 %v1257
    %v2328 = vunpack.c.l.b16 %v1258
    %v2329 = vunpack.c.h.b16 %v1258
    %v2330 = vunpack.c.l.b16 %v1259
    %v2331 = vunpack.c.h.b16 %v1259
    %v2332 = vunpack.c.l.b16 %v1260
    %v2333 = vunpack.c.h.b16 %v1260
    %v2334 = vunpack.c.l.b16 %v1261
    %v2335 = vunpack.c.h.b16 %v1261
    %v2336 = vunpack.c.l.b16 %v1262
    %v2337 = vunpack.c.h.b16 %v1262
    %v2338 = vunpack.c.l.b16 %v1263
    %v2339 = vunpack.c.h.b16 %v1263
    %v2340 = vunpack.c.l.b16 %v1264
    %v2341 = vunpack.c.h.b16 %v1264
    %v2342 = vunpack.c.l.b16 %v1265
    %v2343 = vunpack.c.h.b16 %v1265
    %v2344 = vunpack.c.l.b16 %v1266
    %v2345 = vunpack.c.h.b16 %v1266
    %v2346 = vunpack.c.l.b16 %v1267
    %v2347 = vunpack.c.h.b16 %v1267
    %v2348 = vunpack.c.l.b16 %v1268
    %v2349 = vunpack.c.h.b16 %v1268
    %v2350 = vunpack.c.l.b16 %v1269
    %v2351 = vunpack.c.h.b16 %v1269
    %v2352 = vunpack.c.l.b16 %v1270
    %v2353 = vunpack.c.h.b16 %v1270
    %v2354 = vunpack.c.l.b16 %v1271
    %v2355 = vunpack.c.h.b16 %v1271
    %v2356 = vunpack.c.l.b16 %v1272
    %v2357 = vunpack.c.h.b16 %v1272
    %v2358 = vunpack.c.l.b16 %v1273
    %v2359 = vunpack.c.h.b16 %v1273
    %v2360 = vunpack.c.l.b16 %v1274
    %v2361 = vunpack.c.h.b16 %v1274
    %v2362 = vunpack.c.l.b16 %v1275
    %v2363 = vunpack.c.h.b16 %v1275
    %v2364 = vunpack.c.l.b16 %v1276
    %v2365 = vunpack.c.h.b16 %v1276
    %v2366 = vunpack.c.l.b16 %v1277
    %v2367 = vunpack.c.h.b16 %v1277
    %v2368 = vunpack.c.l.b16 %v1278
    %v2369 = vunpack.c.h.b16 %v1278
    %v2370 = vunpack.c.l.b16 %v1279
    %v2371 = vunpack.c.h.b16 %v1279
    %v2372 = vunpack.c.l.b16 %v1280
    %v2373 = vunpack.c.h.b16 %v1280
    %v2374 = vunpack.c.l.b16 %v1281
    %v2375 = vunpack.c.h.b16 %v1281
    %v2376 = vunpack.c.l.b16 %v1282
    %v2377 = vunpack.c.h.b16 %v1282
    %v2378 = vunpack.c.l.b16 %v1283
    %v2379 = vunpack.c.h.b16 %v1283
    %v2380 = vunpack.c.l.b16 %v1284
    %v2381 = vunpack.c.h.b16 %v1284
    %v2382 = vunpack.c.l.b16 %v1285
    %v2383 = vunpack.c.h.b16 %v1285
    %v2384 = vunpack.c.l.b16 %v1286
    %v2385 = vunpack.c.h.b16 %v1286
    %v2386 = vunpack.c.l.b16 %v1287
    %v2387 = vunpack.c.h.b16 %v1287
    %v2388 = vunpack.c.l.b16 %v1288
    %v2389 = vunpack.c.h.b16 %v1288
    %v2390 = vunpack.c.l.b16 %v1289
    %v2391 = vunpack.c.h.b16 %v1289
    %v2392 = vunpack.c.l.b16 %v1290
    %v2393 = vunpack.c.h.b16 %v1290
    %v2394 = vunpack.c.l.b16 %v1291
    %v2395 = vunpack.c.h.b16 %v1291
    %v2396 = vunpack.c.l.b16 %v1292
    %v2397 = vunpack.c.h.b16 %v1292
    %v2398 = vunpack.c.l.b16 %v1293
    %v2399 = vunpack.c.h.b16 %v1293
    %v2400 = vunpack.c.l.b16 %v1294
    %v2401 = vunpack.c.h.b16 %v1294
    %v2402 = vunpack.c.l.b16 %v1295
    %v2403 = vunpack.c.h.b16 %v1295
    %v2404 = vunpack.c.l.b16 %v1296
    %v2405 = vunpack.c.h.b16 %v1296
    %v2406 = vunpack.c.l.b16 %v1297
    %v2407 = vunpack.c.h.b16 %v1297
    %v2408 = vunpack.c.l.b16 %v1298
    %v2409 = vunpack.c.h.b16 %v1298
    %v2410 = vunpack.c.l.b16 %v1299
    %v2411 = vunpack.c.h.b16 %v1299
    %v2412 = vunpack.c.l.b16 %v1300
    %v2413 = vunpack.c.h.b16 %v1300
    %v2414 = vunpack.c.l.b16 %v1301
    %v2415 = vunpack.c.h.b16 %v1301
    %v2416 = vunpack.c.l.b16 %v1302
    %v2417 = vunpack.c.h.b16 %v1302
    %v2418 = vunpack.c.l.b16 %v1303
    %v2419 = vunpack.c.h.b16 %v1303
    %v2420 = vunpack.c.l.b16 %v1304
    %v2421 = vunpack.c.h.b16 %v1304
    %v2422 = vunpack.c.l.b16 %v1305
    %v2423 = vunpack.c.h.b16 %v1305
    %v2424 = vunpack.c.l.b16 %v1306
    %v2425 = vunpack.c.h.b16 %v1306
    %v2426 = vunpack.c.l.b16 %v1307
    %v2427 = vunpack.c.h.b16 %v1307
    %v2428 = vunpack.c.l.b16 %v1308
    %v2429 = vunpack.c.h.b16 %v1308
    %v2430 = vunpack.c.l.b16 %v1309
    %v2431 = vunpack.c.h.b16 %v1309
    %v2432 = vunpack.c.l.b16 %v1310
    %v2433 = vunpack.c.h.b16 %v1310
    %v2434 = vunpack.c.l.b16 %v1311
    %v2435 = vunpack.c.h.b16 %v1311
    %v2436 = vunpack.c.l.b16 %v1312
    %v2437 = vunpack.c.h.b16 %v1312
    %v2438 = vunpack.c.l.b16 %v1313
    %v2439 = vunpack.c.h.b16 %v1313
    %v2440 = vunpack.c.l.b16 %v1314
    %v2441 = vunpack.c.h.b16 %v1314
    %v2442 = vunpack.c.l.b16 %v1315
    %v2443 = vunpack.c.h.b16 %v1315
    %v2444 = vunpack.c.l.b16 %v1316
    %v2445 = vunpack.c.h.b16 %v1316
    %v2446 = vunpack.c.l.b16 %v1317
    %v2447 = vunpack.c.h.b16 %v1317
    %v2448 = vunpack.c.l.b16 %v1318
    %v2449 = vunpack.c.h.b16 %v1318
    %v2450 = vunpack.c.l.b16 %v1319
    %v2451 = vunpack.c.h.b16 %v1319
    %v2452 = vunpack.c.l.b16 %v1320
    %v2453 = vunpack.c.h.b16 %v1320
    %v2454 = vunpack.c.l.b16 %v1321
    %v2455 = vunpack.c.h.b16 %v1321
    %v2456 = vunpack.c.l.b16 %v1322
    %v2457 = vunpack.c.h.b16 %v1322
    %v2458 = vunpack.c.l.b16 %v1323
    %v2459 = vunpack.c.h.b16 %v1323
    %v2460 = vunpack.c.l.b16 %v1324
    %v2461 = vunpack.c.h.b16 %v1324
    %v2462 = vunpack.c.l.b16 %v1325
    %v2463 = vunpack.c.h.b16 %v1325
    %v2464 = vunpack.c.l.b16 %v1326
    %v2465 = vunpack.c.h.b16 %v1326
    %v2466 = vunpack.c.l.b16 %v1327
    %v2467 = vunpack.c.h.b16 %v1327
    %v2468 = vunpack.c.l.b16 %v1328
    %v2469 = vunpack.c.h.b16 %v1328
    %v2470 = vunpack.c.l.b16 %v1329
    %v2471 = vunpack.c.h.b16 %v1329
    %v2472 = vunpack.c.l.b16 %v1330
    %v2473 = vunpack.c.h.b16 %v1330
    %v2474 = vunpack.c.l.b16 %v1331
    %v2475 = vunpack.c.h.b16 %v1331
    %v2476 = vunpack.c.l.b16 %v1332
    %v2477 = vunpack.c.h.b16 %v1332
    %v2478 = vunpack.c.l.b16 %v1333
    %v2479 = vunpack.c.h.b16 %v1333
    %v2480 = vunpack.c.l.b16 %v1334
    %v2481 = vunpack.c.h.b16 %v1334
    %v2482 = vunpack.c.l.b16 %v1335
    %v2483 = vunpack.c.h.b16 %v1335
    %v2484 = vunpack.c.l.b16 %v1336
    %v2485 = vunpack.c.h.b16 %v1336
    %v2486 = vunpack.c.l.b16 %v1337
    %v2487 = vunpack.c.h.b16 %v1337
    %v2488 = vunpack.c.l.b16 %v1338
    %v2489 = vunpack.c.h.b16 %v1338
    %v2490 = vunpack.c.l.b16 %v1339
    %v2491 = vunpack.c.h.b16 %v1339
    %v2492 = vunpack.c.l.b16 %v1340
    %v2493 = vunpack.c.h.b16 %v1340
    %v2494 = vunpack.c.l.b16 %v1341
    %v2495 = vunpack.c.h.b16 %v1341
    %v2496 = vunpack.c.l.b16 %v1342
    %v2497 = vunpack.c.h.b16 %v1342
    %v2498 = vunpack.c.l.b16 %v1343
    %v2499 = vunpack.c.h.b16 %v1343
    %v2500 = vunpack.c.l.b16 %v1344
    %v2501 = vunpack.c.h.b16 %v1344
    %v2502 = vunpack.c.l.b16 %v1345
    %v2503 = vunpack.c.h.b16 %v1345
    %v2504 = vunpack.c.l.b16 %v1346
    %v2505 = vunpack.c.h.b16 %v1346
    %v2506 = vunpack.c.l.b16 %v1347
    %v2507 = vunpack.c.h.b16 %v1347
    %v2508 = vunpack.c.l.b16 %v1348
    %v2509 = vunpack.c.h.b16 %v1348
    %v2510 = vunpack.c.l.b16 %v1349
    %v2511 = vunpack.c.h.b16 %v1349
    %v2512 = vunpack.c.l.b16 %v1350
    %v2513 = vunpack.c.h.b16 %v1350
    %v2514 = vunpack.c.l.b16 %v1351
    %v2515 = vunpack.c.h.b16 %v1351
    %v2516 = vunpack.c.l.b16 %v1352
    %v2517 = vunpack.c.h.b16 %v1352
    %v2518 = vunpack.c.l.b16 %v1353
    %v2519 = vunpack.c.h.b16 %v1353
    %v2520 = vunpack.c.l.b16 %v1354
    %v2521 = vunpack.c.h.b16 %v1354
    %v2522 = vunpack.c.l.b16 %v1355
    %v2523 = vunpack.c.h.b16 %v1355
    %v2524 = vunpack.c.l.b16 %v1356
    %v2525 = vunpack.c.h.b16 %v1356
    %v2526 = vunpack.c.l.b16 %v1357
    %v2527 = vunpack.c.h.b16 %v1357
    %v2528 = vunpack.c.l.b16 %v1358
    %v2529 = vunpack.c.h.b16 %v1358
    %v2530 = vunpack.c.l.b16 %v1359
    %v2531 = vunpack.c.h.b16 %v1359
    %v2532 = vunpack.c.l.b16 %v1360
    %v2533 = vunpack.c.h.b16 %v1360
    %v2534 = vunpack.c.l.b16 %v1361
    %v2535 = vunpack.c.h.b16 %v1361
    %v2536 = vunpack.c.l.b16 %v1362
    %v2537 = vunpack.c.h.b16 %v1362
    %v2538 = vunpack.c.l.b16 %v1363
    %v2539 = vunpack.c.h.b16 %v1363
    %v2540 = vunpack.c.l.b16 %v1364
    %v2541 = vunpack.c.h.b16 %v1364
    %v2542 = vunpack.c.l.b16 %v1365
    %v2543 = vunpack.c.h.b16 %v1365
    %v2544 = vunpack.c.l.b16 %v1366
    %v2545 = vunpack.c.h.b16 %v1366
    %v2546 = vunpack.c.l.b16 %v1367
    %v2547 = vunpack.c.h.b16 %v1367
    %v2548 = vunpack.c.l.b16 %v1368
    %v2549 = vunpack.c.h.b16 %v1368
    %v2550 = vunpack.c.l.b16 %v1369
    %v2551 = vunpack.c.h.b16 %v1369
    %v2552 = vunpack.c.l.b16 %v1370
    %v2553 = vunpack.c.h.b16 %v1370
    %v2554 = vunpack.c.l.b16 %v1371
    %v2555 = vunpack.c.h.b16 %v1371
    %v2556 = vunpack.c.l.b16 %v1372
    %v2557 = vunpack.c.h.b16 %v1372
    %v2558 = vunpack.c.l.b16 %v1373
    %v2559 = vunpack.c.h.b16 %v1373
    %v2560 = vunpack.c.l.b16 %v1374
    %v2561 = vunpack.c.h.b16 %v1374
    %v2562 = vunpack.c.l.b16 %v1375
    %v2563 = vunpack.c.h.b16 %v1375
    %v2564 = vunpack.c.l.b16 %v1376
    %v2565 = vunpack.c.h.b16 %v1376
    %v2566 = vunpack.c.l.b16 %v1377
    %v2567 = vunpack.c.h.b16 %v1377
    %v2568 = vunpack.c.l.b16 %v1378
    %v2569 = vunpack.c.h.b16 %v1378
    %v2570 = vunpack.c.l.b16 %v1379
    %v2571 = vunpack.c.h.b16 %v1379
    %v2572 = vunpack.c.l.b16 %v1380
    %v2573 = vunpack.c.h.b16 %v1380
    %v2574 = vunpack.c.l.b16 %v1381
    %v2575 = vunpack.c.h.b16 %v1381
    %v2576 = vunpack.c.l.b16 %v1382
    %v2577 = vunpack.c.h.b16 %v1382
    %v2578 = vunpack.c.l.b16 %v1383
    %v2579 = vunpack.c.h.b16 %v1383
    %v2580 = vunpack.c.l.b16 %v1384
    %v2581 = vunpack.c.h.b16 %v1384
    %v2582 = vunpack.c.l.b16 %v1385
    %v2583 = vunpack.c.h.b16 %v1385
    %v2584 = vunpack.c.l.b16 %v1386
    %v2585 = vunpack.c.h.b16 %v1386
    %v2586 = vunpack.c.l.b16 %v1387
    %v2587 = vunpack.c.h.b16 %v1387
    %v2588 = vunpack.c.l.b16 %v1388
    %v2589 = vunpack.c.h.b16 %v1388
    %v2590 = vunpack.c.l.b16 %v1389
    %v2591 = vunpack.c.h.b16 %v1389
    %v2592 = vunpack.c.l.b16 %v1390
    %v2593 = vunpack.c.h.b16 %v1390
    %v2594 = vunpack.c.l.b16 %v1391
    %v2595 = vunpack.c.h.b16 %v1391
    %v2596 = vunpack.c.l.b16 %v1392
    %v2597 = vunpack.c.h.b16 %v1392
    %v2598 = vunpack.c.l.b16 %v1393
    %v2599 = vunpack.c.h.b16 %v1393
    %v2600 = vunpack.c.l.b16 %v1394
    %v2601 = vunpack.c.h.b16 %v1394
    %v2602 = vunpack.c.l.b16 %v1395
    %v2603 = vunpack.c.h.b16 %v1395
    %v2604 = vunpack.c.l.b16 %v1396
    %v2605 = vunpack.c.h.b16 %v1396
    %v2606 = vunpack.c.l.b16 %v1397
    %v2607 = vunpack.c.h.b16 %v1397
    %v2608 = vunpack.c.l.b16 %v1398
    %v2609 = vunpack.c.h.b16 %v1398
    %v2610 = vunpack.c.l.b16 %v1399
    %v2611 = vunpack.c.h.b16 %v1399
    %v2612 = vunpack.c.l.b16 %v1400
    %v2613 = vunpack.c.h.b16 %v1400
    %v2614 = vunpack.c.l.b16 %v1401
    %v2615 = vunpack.c.h.b16 %v1401
    %v2616 = vunpack.c.l.b16 %v1402
    %v2617 = vunpack.c.h.b16 %v1402
    %v2618 = vunpack.c.l.b16 %v1403
    %v2619 = vunpack.c.h.b16 %v1403
    %v2620 = vunpack.c.l.b16 %v1404
    %v2621 = vunpack.c.h.b16 %v1404
    %v2622 = vunpack.c.l.b16 %v1405
    %v2623 = vunpack.c.h.b16 %v1405
    %v2624 = vunpack.c.l.b16 %v1406
    %v2625 = vunpack.c.h.b16 %v1406
    %v2626 = vunpack.c.l.b16 %v1407
    %v2627 = vunpack.c.h.b16 %v1407
    %v2628 = vunpack.c.l.b16 %v1408
    %v2629 = vunpack.c.h.b16 %v1408
    %v2630 = vunpack.c.l.b16 %v1409
    %v2631 = vunpack.c.h.b16 %v1409
    %v2632 = vunpack.c.l.b16 %v1410
    %v2633 = vunpack.c.h.b16 %v1410
    %v2634 = vunpack.c.l.b16 %v1411
    %v2635 = vunpack.c.h.b16 %v1411
    %v2636 = vunpack.c.l.b16 %v1412
    %v2637 = vunpack.c.h.b16 %v1412
    %v2638 = vunpack.c.l.b16 %v1413
    %v2639 = vunpack.c.h.b16 %v1413
    %v2640 = vunpack.c.l.b16 %v1414
    %v2641 = vunpack.c.h.b16 %v1414
    %v2642 = vunpack.c.l.b16 %v1415
    %v2643 = vunpack.c.h.b16 %v1415
    %v2644 = vunpack.c.l.b16 %v1416
    %v2645 = vunpack.c.h.b16 %v1416
    %v2646 = vunpack.c.l.b16 %v1417
    %v2647 = vunpack.c.h.b16 %v1417
    %v2648 = vunpack.c.l.b16 %v1418
    %v2649 = vunpack.c.h.b16 %v1418
    %v2650 = vunpack.c.l.b16 %v1419
    %v2651 = vunpack.c.h.b16 %v1419
    %v2652 = vunpack.c.l.b16 %v1420
    %v2653 = vunpack.c.h.b16 %v1420
    %v2654 = vunpack.c.l.b16 %v1421
    %v2655 = vunpack.c.h.b16 %v1421
    %v2656 = vunpack.c.l.b16 %v1422
    %v2657 = vunpack.c.h.b16 %v1422
    %v2658 = vunpack.c.l.b16 %v1423
    %v2659 = vunpack.c.h.b16 %v1423
    %v2660 = vunpack.c.l.b16 %v1424
    %v2661 = vunpack.c.h.b16 %v1424
    %v2662 = vunpack.c.l.b16 %v1425
    %v2663 = vunpack.c.h.b16 %v1425
    %v2664 = vunpack.c.l.b16 %v1426
    %v2665 = vunpack.c.h.b16 %v1426
    %v2666 = vunpack.c.l.b16 %v1427
    %v2667 = vunpack.c.h.b16 %v1427
    %v2668 = vunpack.c.l.b16 %v1428
    %v2669 = vunpack.c.h.b16 %v1428
    %v2670 = vunpack.c.l.b16 %v1429
    %v2671 = vunpack.c.h.b16 %v1429
    %v2672 = vunpack.c.l.b16 %v1430
    %v2673 = vunpack.c.h.b16 %v1430
    %v2674 = vunpack.c.l.b16 %v1431
    %v2675 = vunpack.c.h.b16 %v1431
    %v2676 = vunpack.c.l.b16 %v1432
    %v2677 = vunpack.c.h.b16 %v1432
    %v2678 = vunpack.c.l.b16 %v1433
    %v2679 = vunpack.c.h.b16 %v1433
    %v2680 = vunpack.c.l.b16 %v1434
    %v2681 = vunpack.c.h.b16 %v1434
    %v2682 = vunpack.c.l.b16 %v1435
    %v2683 = vunpack.c.h.b16 %v1435
    %v2684 = vunpack.c.l.b16 %v1436
    %v2685 = vunpack.c.h.b16 %v1436
    %v2686 = vunpack.c.l.b16 %v1437
    %v2687 = vunpack.c.h.b16 %v1437
    %v2688 = vunpack.c.l.b16 %v1438
    %v2689 = vunpack.c.h.b16 %v1438
    %v2690 = vunpack.c.l.b16 %v1439
    %v2691 = vunpack.c.h.b16 %v1439
    %v2692 = vunpack.c.l.b16 %v1440
    %v2693 = vunpack.c.h.b16 %v1440
    %v2694 = vunpack.c.l.b16 %v1441
    %v2695 = vunpack.c.h.b16 %v1441
    %v2696 = vunpack.c.l.b16 %v1442
    %v2697 = vunpack.c.h.b16 %v1442
    %v2698 = vunpack.c.l.b16 %v1443
    %v2699 = vunpack.c.h.b16 %v1443
    %v2700 = vunpack.c.l.b16 %v1444
    %v2701 = vunpack.c.h.b16 %v1444
    %v2702 = vunpack.c.l.b16 %v1445
    %v2703 = vunpack.c.h.b16 %v1445
    %v2704 = vunpack.c.l.b16 %v1446
    %v2705 = vunpack.c.h.b16 %v1446
    %v2706 = vunpack.c.l.b16 %v1447
    %v2707 = vunpack.c.h.b16 %v1447
    %v2708 = vunpack.c.l.b16 %v1448
    %v2709 = vunpack.c.h.b16 %v1448
    %v2710 = vunpack.c.l.b16 %v1449
    %v2711 = vunpack.c.h.b16 %v1449
    %v2712 = vunpack.c.l.b16 %v1450
    %v2713 = vunpack.c.h.b16 %v1450
    %v2714 = vunpack.c.l.b16 %v1451
    %v2715 = vunpack.c.h.b16 %v1451
    %v2716 = vunpack.c.l.b16 %v1452
    %v2717 = vunpack.c.h.b16 %v1452
    %v2718 = vunpack.c.l.b16 %v1453
    %v2719 = vunpack.c.h.b16 %v1453
    %v2720 = vunpack.c.l.b16 %v1454
    %v2721 = vunpack.c.h.b16 %v1454
    %v2722 = vunpack.c.l.b16 %v1455
    %v2723 = vunpack.c.h.b16 %v1455
    %v2724 = vunpack.c.l.b16 %v1456
    %v2725 = vunpack.c.h.b16 %v1456
    %v2726 = vunpack.c.l.b16 %v1457
    %v2727 = vunpack.c.h.b16 %v1457
    %v2728 = vunpack.c.l.b16 %v1458
    %v2729 = vunpack.c.h.b16 %v1458
    %v2730 = vunpack.c.l.b16 %v1459
    %v2731 = vunpack.c.h.b16 %v1459
    %v2732 = vunpack.c.l.b16 %v1460
    %v2733 = vunpack.c.h.b16 %v1460
    %v2734 = vunpack.c.l.b16 %v1461
    %v2735 = vunpack.c.h.b16 %v1461
    %v2736 = vunpack.c.l.b16 %v1462
    %v2737 = vunpack.c.h.b16 %v1462
    %v2738 = vunpack.c.l.b16 %v1463
    %v2739 = vunpack.c.h.b16 %v1463
    %v2740 = vunpack.c.l.b16 %v1464
    %v2741 = vunpack.c.h.b16 %v1464
    %v2742 = vunpack.c.l.b16 %v1465
    %v2743 = vunpack.c.h.b16 %v1465
    %v2744 = vunpack.c.l.b16 %v1466
    %v2745 = vunpack.c.h.b16 %v1466
    %v2746 = vunpack.c.l.b16 %v1467
    %v2747 = vunpack.c.h.b16 %v1467
    %v2748 = vunpack.c.l.b16 %v1468
    %v2749 = vunpack.c.h.b16 %v1468
    %v2750 = vunpack.c.l.b16 %v1469
    %v2751 = vunpack.c.h.b16 %v1469
    %v2752 = vunpack.c.l.b16 %v1470
    %v2753 = vunpack.c.h.b16 %v1470
    %v2754 = vunpack.c.l.b16 %v1471
    %v2755 = vunpack.c.h.b16 %v1471
    %v2756 = vunpack.c.l.b16 %v1472
    %v2757 = vunpack.c.h.b16 %v1472
    %v2758 = vunpack.c.l.b16 %v1473
    %v2759 = vunpack.c.h.b16 %v1473
    %v2760 = vunpack.c.l.b16 %v1474
    %v2761 = vunpack.c.h.b16 %v1474
    %v2762 = vunpack.c.l.b16 %v1475
    %v2763 = vunpack.c.h.b16 %v1475
    %v2764 = vunpack.c.l.b16 %v1476
    %v2765 = vunpack.c.h.b16 %v1476
    %v2766 = vunpack.c.l.b16 %v1477
    %v2767 = vunpack.c.h.b16 %v1477
    %v2768 = vunpack.c.l.b16 %v1478
    %v2769 = vunpack.c.h.b16 %v1478
    %v2770 = vunpack.c.l.b16 %v1479
    %v2771 = vunpack.c.h.b16 %v1479
    %v2772 = vunpack.c.l.b16 %v1480
    %v2773 = vunpack.c.h.b16 %v1480
    %v2774 = vunpack.c.l.b16 %v1481
    %v2775 = vunpack.c.h.b16 %v1481
    %v2776 = vunpack.c.l.b16 %v1482
    %v2777 = vunpack.c.h.b16 %v1482
    %v2778 = vunpack.c.l.b16 %v1483
    %v2779 = vunpack.c.h.b16 %v1483
    %v2780 = vunpack.c.l.b16 %v1484
    %v2781 = vunpack.c.h.b16 %v1484
    %v2782 = vunpack.c.l.b16 %v1485
    %v2783 = vunpack.c.h.b16 %v1485
    %v2784 = vunpack.c.l.b16 %v1486
    %v2785 = vunpack.c.h.b16 %v1486
    %v2786 = vunpack.c.l.b16 %v1487
    %v2787 = vunpack.c.h.b16 %v1487
    %v2788 = vunpack.c.l.b16 %v1488
    %v2789 = vunpack.c.h.b16 %v1488
    %v2790 = vunpack.c.l.b16 %v1489
    %v2791 = vunpack.c.h.b16 %v1489
    %v2792 = vunpack.c.l.b16 %v1490
    %v2793 = vunpack.c.h.b16 %v1490
    %v2794 = vunpack.c.l.b16 %v1491
    %v2795 = vunpack.c.h.b16 %v1491
    %v2796 = vunpack.c.l.b16 %v1492
    %v2797 = vunpack.c.h.b16 %v1492
    %v2798 = vunpack.c.l.b16 %v1493
    %v2799 = vunpack.c.h.b16 %v1493
    %v2800 = vunpack.c.l.b16 %v1494
    %v2801 = vunpack.c.h.b16 %v1494
    %v2802 = vunpack.c.l.b16 %v1495
    %v2803 = vunpack.c.h.b16 %v1495
    %v2804 = vunpack.c.l.b16 %v1496
    %v2805 = vunpack.c.h.b16 %v1496
    %v2806 = vunpack.c.l.b16 %v1497
    %v2807 = vunpack.c.h.b16 %v1497
    %v2808 = vunpack.c.l.b16 %v1498
    %v2809 = vunpack.c.h.b16 %v1498
    %v2810 = vunpack.c.l.b16 %v1499
    %v2811 = vunpack.c.h.b16 %v1499
    %v2812 = vunpack.c.l.b16 %v1500
    %v2813 = vunpack.c.h.b16 %v1500
    %v2814 = vunpack.c.l.b16 %v1501
    %v2815 = vunpack.c.h.b16 %v1501
    %v2816 = vunpack.c.l.b16 %v1502
    %v2817 = vunpack.c.h.b16 %v1502
    %v2818 = vunpack.c.l.b16 %v1503
    %v2819 = vunpack.c.h.b16 %v1503
    %v2820 = vunpack.c.l.b16 %v1504
    %v2821 = vunpack.c.h.b16 %v1504
    %v2822 = vunpack.c.l.b16 %v1505
    %v2823 = vunpack.c.h.b16 %v1505
    %v2824 = vunpack.c.l.b16 %v1506
    %v2825 = vunpack.c.h.b16 %v1506
    %v2826 = vunpack.c.l.b16 %v1507
    %v2827 = vunpack.c.h.b16 %v1507
    %v2828 = vunpack.c.l.b16 %v1508
    %v2829 = vunpack.c.h.b16 %v1508
    %v2830 = vunpack.c.l.b16 %v1509
    %v2831 = vunpack.c.h.b16 %v1509
    %v2832 = vunpack.c.l.b16 %v1510
    %v2833 = vunpack.c.h.b16 %v1510
    %v2834 = vunpack.c.l.b16 %v1511
    %v2835 = vunpack.c.h.b16 %v1511
    %v2836 = vunpack.c.l.b16 %v1512
    %v2837 = vunpack.c.h.b16 %v1512
    %v2838 = vunpack.c.l.b16 %v1513
    %v2839 = vunpack.c.h.b16 %v1513
    %v2840 = vunpack.c.l.b16 %v1514
    %v2841 = vunpack.c.h.b16 %v1514
    %v2842 = vunpack.c.l.b16 %v1515
    %v2843 = vunpack.c.h.b16 %v1515
    %v2844 = vunpack.c.l.b16 %v1516
    %v2845 = vunpack.c.h.b16 %v1516
    %v2846 = vunpack.c.l.b16 %v1517
    %v2847 = vunpack.c.h.b16 %v1517
    %v2848 = vunpack.c.l.b16 %v1518
    %v2849 = vunpack.c.h.b16 %v1518
    %v2850 = vunpack.c.l.b16 %v1519
    %v2851 = vunpack.c.h.b16 %v1519
    %v2852 = vunpack.c.l.b16 %v1520
    %v2853 = vunpack.c.h.b16 %v1520
    %v2854 = vunpack.c.l.b16 %v1521
    %v2855 = vunpack.c.h.b16 %v1521
    %v2856 = vunpack.c.l.b16 %v1522
    %v2857 = vunpack.c.h.b16 %v1522
    %v2858 = vunpack.c.l.b16 %v1523
    %v2859 = vunpack.c.h.b16 %v1523
    %v2860 = vunpack.c.l.b16 %v1524
    %v2861 = vunpack.c.h.b16 %v1524
    %v2862 = vunpack.c.l.b16 %v1525
    %v2863 = vunpack.c.h.b16 %v1525
    %v2864 = vunpack.c.l.b16 %v1526
    %v2865 = vunpack.c.h.b16 %v1526
    %v2866 = vunpack.c.l.b16 %v1527
    %v2867 = vunpack.c.h.b16 %v1527
    %v2868 = vunpack.c.l.b16 %v1528
    %v2869 = vunpack.c.h.b16 %v1528
    %v2870 = vunpack.c.l.b16 %v1529
    %v2871 = vunpack.c.h.b16 %v1529
    %v2872 = vunpack.c.l.b16 %v1530
    %v2873 = vunpack.c.h.b16 %v1530
    %v2874 = vunpack.c.l.b16 %v1531
    %v2875 = vunpack.c.h.b16 %v1531
    %v2876 = vunpack.c.l.b16 %v1532
    %v2877 = vunpack.c.h.b16 %v1532
    %v2878 = vunpack.c.l.b16 %v1533
    %v2879 = vunpack.c.h.b16 %v1533
    %v2880 = vunpack.c.l.b16 %v1534
    %v2881 = vunpack.c.h.b16 %v1534
    %v2882 = vunpack.c.l.b16 %v1535
    %v2883 = vunpack.c.h.b16 %v1535
    %v2884 = vunpack.c.l.b16 %v1536
    %v2885 = vunpack.c.h.b16 %v1536
    %v2886 = vunpack.c.l.b16 %v1537
    %v2887 = vunpack.c.h.b16 %v1537
    %v2888 = vunpack.c.l.b16 %v1538
    %v2889 = vunpack.c.h.b16 %v1538
    %v2890 = vunpack.c.l.b16 %v1539
    %v2891 = vunpack.c.h.b16 %v1539
    %v2892 = vunpack.c.l.b16 %v1540
    %v2893 = vunpack.c.h.b16 %v1540
    %v2894 = vunpack.c.l.b16 %v1541
    %v2895 = vunpack.c.h.b16 %v1541
    %v2896 = vunpack.c.l.b16 %v1542
    %v2897 = vunpack.c.h.b16 %v1542
    %v2898 = vunpack.c.l.b16 %v1543
    %v2899 = vunpack.c.h.b16 %v1543
    %v2900 = vunpack.c.l.b16 %v1544
    %v2901 = vunpack.c.h.b16 %v1544
    %v2902 = vunpack.c.l.b16 %v1545
    %v2903 = vunpack.c.h.b16 %v1545
    %v2904 = vunpack.c.l.b16 %v1546
    %v2905 = vunpack.c.h.b16 %v1546
    %v2906 = vunpack.c.l.b16 %v1547
    %v2907 = vunpack.c.h.b16 %v1547
    %v2908 = vunpack.c.l.b16 %v1548
    %v2909 = vunpack.c.h.b16 %v1548
    %v2910 = vunpack.c.l.b16 %v1549
    %v2911 = vunpack.c.h.b16 %v1549
    %v2912 = vunpack.c.l.b16 %v1550
    %v2913 = vunpack.c.h.b16 %v1550
    %v2914 = vunpack.c.l.b16 %v1551
    %v2915 = vunpack.c.h.b16 %v1551
    %v2916 = vunpack.c.l.b16 %v1552
    %v2917 = vunpack.c.h.b16 %v1552
    %v2918 = vunpack.c.l.b16 %v1553
    %v2919 = vunpack.c.h.b16 %v1553
    %v2920 = vunpack.c.l.b16 %v1554
    %v2921 = vunpack.c.h.b16 %v1554
    %v2922 = vunpack.c.l.b16 %v1555
    %v2923 = vunpack.c.h.b16 %v1555
    %v2924 = vunpack.c.l.b16 %v1556
    %v2925 = vunpack.c.h.b16 %v1556
    %v2926 = vunpack.c.l.b16 %v1557
    %v2927 = vunpack.c.h.b16 %v1557
    %v2928 = vunpack.c.l.b16 %v1558
    %v2929 = vunpack.c.h.b16 %v1558
    %v2930 = vunpack.c.l.b16 %v1559
    %v2931 = vunpack.c.h.b16 %v1559
    %v2932 = vunpack.c.l.b16 %v1560
    %v2933 = vunpack.c.h.b16 %v1560
    %v2934 = vunpack.c.l.b16 %v1561
    %v2935 = vunpack.c.h.b16 %v1561
    %v2936 = vunpack.c.l.b16 %v1562
    %v2937 = vunpack.c.h.b16 %v1562
    %v2938 = vunpack.c.l.b16 %v1563
    %v2939 = vunpack.c.h.b16 %v1563
    %v2940 = vunpack.c.l.b16 %v1564
    %v2941 = vunpack.c.h.b16 %v1564
    %v2942 = vunpack.c.l.b16 %v1565
    %v2943 = vunpack.c.h.b16 %v1565
    %v2944 = vunpack.c.l.b16 %v1566
    %v2945 = vunpack.c.h.b16 %v1566
    %v2946 = vunpack.c.l.b16 %v1567
    %v2947 = vunpack.c.h.b16 %v1567
    %v2948 = vunpack.c.l.b16 %v1568
    %v2949 = vunpack.c.h.b16 %v1568
    %v2950 = vunpack.c.l.b16 %v1569
    %v2951 = vunpack.c.h.b16 %v1569
    %v2952 = vunpack.c.l.b16 %v1570
    %v2953 = vunpack.c.h.b16 %v1570
    %v2954 = vunpack.c.l.b16 %v1571
    %v2955 = vunpack.c.h.b16 %v1571
    %v2956 = vunpack.c.l.b16 %v1572
    %v2957 = vunpack.c.h.b16 %v1572
    %v2958 = vunpack.c.l.b16 %v1573
    %v2959 = vunpack.c.h.b16 %v1573
    %v2960 = vunpack.c.l.b16 %v1574
    %v2961 = vunpack.c.h.b16 %v1574
    %v2962 = vunpack.c.l.b16 %v1575
    %v2963 = vunpack.c.h.b16 %v1575
    %v2964 = vunpack.c.l.b16 %v1576
    %v2965 = vunpack.c.h.b16 %v1576
    %v2966 = vunpack.c.l.b16 %v1577
    %v2967 = vunpack.c.h.b16 %v1577
    %v2968 = vunpack.c.l.b16 %v1578
    %v2969 = vunpack.c.h.b16 %v1578
    %v2970 = vunpack.c.l.b16 %v1579
    %v2971 = vunpack.c.h.b16 %v1579
    %v2972 = vunpack.c.l.b16 %v1580
    %v2973 = vunpack.c.h.b16 %v1580
    %v2974 = vunpack.c.l.b16 %v1581
    %v2975 = vunpack.c.h.b16 %v1581
    %v2976 = vunpack.c.l.b16 %v1582
    %v2977 = vunpack.c.h.b16 %v1582
    %v2978 = vunpack.c.l.b16 %v1583
    %v2979 = vunpack.c.h.b16 %v1583
    %v2980 = vunpack.c.l.b16 %v1584
    %v2981 = vunpack.c.h.b16 %v1584
    %v2982 = vunpack.c.l.b16 %v1585
    %v2983 = vunpack.c.h.b16 %v1585
    %v2984 = vunpack.c.l.b16 %v1586
    %v2985 = vunpack.c.h.b16 %v1586
    %v2986 = vunpack.c.l.b16 %v1587
    %v2987 = vunpack.c.h.b16 %v1587
    %v2988 = vunpack.c.l.b16 %v1588
    %v2989 = vunpack.c.h.b16 %v1588
    %v2990 = vunpack.c.l.b16 %v1589
    %v2991 = vunpack.c.h.b16 %v1589
    %v2992 = vunpack.c.l.b16 %v1590
    %v2993 = vunpack.c.h.b16 %v1590
    %v2994 = vunpack.c.l.b16 %v1591
    %v2995 = vunpack.c.h.b16 %v1591
    %v2996 = vunpack.c.l.b16 %v1592
    %v2997 = vunpack.c.h.b16 %v1592
    %v2998 = vunpack.c.l.b16 %v1593
    %v2999 = vunpack.c.h.b16 %v1593
    %v3000 = vunpack.c.l.b16 %v1594
    %v3001 = vunpack.c.h.b16 %v1594
    %v3002 = vunpack.c.l.b16 %v1595
    %v3003 = vunpack.c.h.b16 %v1595
    %v3004 = vunpack.c.l.b16 %v1596
    %v3005 = vunpack.c.h.b16 %v1596
    %v3006 = vunpack.c.l.b16 %v1597
    %v3007 = vunpack.c.h.b16 %v1597
    %v3008 = vunpack.c.l.b16 %v1598
    %v3009 = vunpack.c.h.b16 %v1598
    %v3010 = vunpack.c.l.b16 %v1599
    %v3011 = vunpack.c.h.b16 %v1599
    %v3012 = vunpack.c.l.b16 %v1600
    %v3013 = vunpack.c.h.b16 %v1600
    %v3014 = vunpack.c.l.b16 %v1601
    %v3015 = vunpack.c.h.b16 %v1601
    %v3016 = vunpack.c.l.b16 %v1602
    %v3017 = vunpack.c.h.b16 %v1602
    %v3018 = vunpack.c.l.b16 %v1603
    %v3019 = vunpack.c.h.b16 %v1603
    %v3020 = vunpack.c.l.b16 %v1604
    %v3021 = vunpack.c.h.b16 %v1604
    %v3022 = vunpack.c.l.b16 %v1605
    %v3023 = vunpack.c.h.b16 %v1605
    %v3024 = vunpack.c.l.b16 %v1606
    %v3025 = vunpack.c.h.b16 %v1606
    %v3026 = vunpack.c.l.b16 %v1607
    %v3027 = vunpack.c.h.b16 %v1607
    %v3028 = vunpack.c.l.b16 %v1608
    %v3029 = vunpack.c.h.b16 %v1608
    %v3030 = vunpack.c.l.b16 %v1609
    %v3031 = vunpack.c.h.b16 %v1609
    %v3032 = vunpack.c.l.b16 %v1610
    %v3033 = vunpack.c.h.b16 %v1610
    %v3034 = vunpack.c.l.b16 %v1611
    %v3035 = vunpack.c.h.b16 %v1611
    %v3036 = vunpack.c.l.b16 %v1612
    %v3037 = vunpack.c.h.b16 %v1612
    %v3038 = vunpack.c.l.b16 %v1613
    %v3039 = vunpack.c.h.b16 %v1613
    %v3040 = vunpack.c.l.b16 %v1614
    %v3041 = vunpack.c.h.b16 %v1614
    %v3042 = vunpack.c.l.b16 %v1615
    %v3043 = vunpack.c.h.b16 %v1615
    %v3044 = vunpack.c.l.b16 %v1616
    %v3045 = vunpack.c.h.b16 %v1616
    %v3046 = vunpack.c.l.b16 %v1617
    %v3047 = vunpack.c.h.b16 %v1617
    %v3048 = vunpack.c.l.b16 %v1618
    %v3049 = vunpack.c.h.b16 %v1618
    %v3050 = vunpack.c.l.b16 %v1619
    %v3051 = vunpack.c.h.b16 %v1619
    %v3052 = vunpack.c.l.b16 %v1620
    %v3053 = vunpack.c.h.b16 %v1620
    %v3054 = vunpack.c.l.b16 %v1621
    %v3055 = vunpack.c.h.b16 %v1621
    %v3056 = vunpack.c.l.b16 %v1622
    %v3057 = vunpack.c.h.b16 %v1622
    %v3058 = vunpack.c.l.b16 %v1623
    %v3059 = vunpack.c.h.b16 %v1623
    %v3060 = vunpack.c.l.b16 %v1624
    %v3061 = vunpack.c.h.b16 %v1624
    %v3062 = vunpack.c.l.b16 %v1625
    %v3063 = vunpack.c.h.b16 %v1625
    %v3064 = vunpack.c.l.b16 %v1626
    %v3065 = vunpack.c.h.b16 %v1626
    %v3066 = vunpack.c.l.b16 %v1627
    %v3067 = vunpack.c.h.b16 %v1627
    %v3068 = vunpack.c.l.b16 %v1628
    %v3069 = vunpack.c.h.b16 %v1628
    %v3070 = vunpack.c.l.b16 %v1629
    %v3071 = vunpack.c.h.b16 %v1629
    %v3072 = vunpack.c.l.b16 %v1630
    %v3073 = vunpack.c.h.b16 %v1630
    %v3074 = vunpack.c.l.b16 %v1631
    %v3075 = vunpack.c.h.b16 %v1631
    %v3076 = vunpack.c.l.b16 %v1632
    %v3077 = vunpack.c.h.b16 %v1632
    %v3078 = vunpack.c.l.b16 %v1633
    %v3079 = vunpack.c.h.b16 %v1633
    %v3080 = vunpack.c.l.b16 %v1634
    %v3081 = vunpack.c.h.b16 %v1634
    %v3082 = vunpack.c.l.b16 %v1635
    %v3083 = vunpack.c.h.b16 %v1635
    %v3084 = vunpack.c.l.b16 %v1636
    %v3085 = vunpack.c.h.b16 %v1636
    %v3086 = vunpack.c.l.b16 %v1637
    %v3087 = vunpack.c.h.b16 %v1637
    %v3088 = vunpack.c.l.b16 %v1638
    %v3089 = vunpack.c.h.b16 %v1638
    %v3090 = vunpack.c.l.b16 %v1639
    %v3091 = vunpack.c.h.b16 %v1639
    %v3092 = vunpack.c.l.b16 %v1640
    %v3093 = vunpack.c.h.b16 %v1640
    %v3094 = vunpack.c.l.b16 %v1641
    %v3095 = vunpack.c.h.b16 %v1641
    %v3096 = vunpack.c.l.b16 %v1642
    %v3097 = vunpack.c.h.b16 %v1642
    %v3098 = vunpack.c.l.b16 %v1643
    %v3099 = vunpack.c.h.b16 %v1643
    %v3100 = vunpack.c.l.b16 %v1644
    %v3101 = vunpack.c.h.b16 %v1644
    %v3102 = vunpack.c.l.b16 %v1645
    %v3103 = vunpack.c.h.b16 %v1645
    %v3104 = vunpack.c.l.b16 %v1646
    %v3105 = vunpack.c.h.b16 %v1646
    %v3106 = vunpack.c.l.b16 %v1647
    %v3107 = vunpack.c.h.b16 %v1647
    %v3108 = vunpack.c.l.b16 %v1648
    %v3109 = vunpack.c.h.b16 %v1648
    %v3110 = vunpack.c.l.b16 %v1649
    %v3111 = vunpack.c.h.b16 %v1649
    %v3112 = vunpack.c.l.b16 %v1650
    %v3113 = vunpack.c.h.b16 %v1650
    %v3114 = vunpack.c.l.b16 %v1651
    %v3115 = vunpack.c.h.b16 %v1651
    %v3116 = vunpack.c.l.b16 %v1652
    %v3117 = vunpack.c.h.b16 %v1652
    %v3118 = vunpack.c.l.b16 %v1653
    %v3119 = vunpack.c.h.b16 %v1653
    %v3120 = vunpack.c.l.b16 %v1654
    %v3121 = vunpack.c.h.b16 %v1654
    %v3122 = vunpack.c.l.b16 %v1655
    %v3123 = vunpack.c.h.b16 %v1655
    %v3124 = vunpack.c.l.b16 %v1656
    %v3125 = vunpack.c.h.b16 %v1656
    %v3126 = vunpack.c.l.b16 %v1657
    %v3127 = vunpack.c.h.b16 %v1657
    %v3128 = vunpack.c.l.b16 %v1658
    %v3129 = vunpack.c.h.b16 %v1658
    %v3130 = vunpack.c.l.b16 %v1659
    %v3131 = vunpack.c.h.b16 %v1659
    %v3132 = vunpack.c.l.b16 %v1660
    %v3133 = vunpack.c.h.b16 %v1660
    %v3134 = vunpack.c.l.b16 %v1661
    %v3135 = vunpack.c.h.b16 %v1661
    %v3136 = vunpack.c.l.b16 %v1662
    %v3137 = vunpack.c.h.b16 %v1662
    %v3138 = vunpack.c.l.b16 %v1663
    %v3139 = vunpack.c.h.b16 %v1663
    %v3140 = vunpack.c.l.b16 %v1664
    %v3141 = vunpack.c.h.b16 %v1664
    %v3142 = vunpack.c.l.b16 %v1665
    %v3143 = vunpack.c.h.b16 %v1665
    %v3144 = vunpack.c.l.b16 %v1666
    %v3145 = vunpack.c.h.b16 %v1666
    %v3146 = vunpack.c.l.b16 %v1667
    %v3147 = vunpack.c.h.b16 %v1667
    %v3148 = vunpack.c.l.b16 %v1668
    %v3149 = vunpack.c.h.b16 %v1668
    %v3150 = vunpack.c.l.b16 %v1669
    %v3151 = vunpack.c.h.b16 %v1669
    %v3152 = vunpack.c.l.b16 %v1670
    %v3153 = vunpack.c.h.b16 %v1670
    %v3154 = vunpack.c.l.b16 %v1671
    %v3155 = vunpack.c.h.b16 %v1671
    %v3156 = vunpack.c.l.b16 %v1672
    %v3157 = vunpack.c.h.b16 %v1672
    %v3158 = vunpack.c.l.b16 %v1673
    %v3159 = vunpack.c.h.b16 %v1673
    %v3160 = vunpack.c.l.b16 %v1674
    %v3161 = vunpack.c.h.b16 %v1674
    %v3162 = vunpack.c.l.b16 %v1675
    %v3163 = vunpack.c.h.b16 %v1675
    %v3164 = vunpack.c.l.b16 %v1676
    %v3165 = vunpack.c.h.b16 %v1676
    %v3166 = vunpack.c.l.b16 %v1677
    %v3167 = vunpack.c.h.b16 %v1677
    %v3168 = vunpack.c.l.b16 %v1678
    %v3169 = vunpack.c.h.b16 %v1678
    %v3170 = vunpack.c.l.b16 %v1679
    %v3171 = vunpack.c.h.b16 %v1679
    %v3172 = vunpack.c.l.b16 %v1680
    %v3173 = vunpack.c.h.b16 %v1680
    %v3174 = vunpack.c.l.b16 %v1681
    %v3175 = vunpack.c.h.b16 %v1681
    %v3176 = vunpack.c.l.b16 %v1682
    %v3177 = vunpack.c.h.b16 %v1682
    %v3178 = vunpack.c.l.b16 %v1683
    %v3179 = vunpack.c.h.b16 %v1683
    %v3180 = vunpack.c.l.b16 %v1684
    %v3181 = vunpack.c.h.b16 %v1684
    %v3182 = vunpack.c.l.b16 %v1685
    %v3183 = vunpack.c.h.b16 %v1685
    %v3184 = vunpack.c.l.b16 %v1686
    %v3185 = vunpack.c.h.b16 %v1686
    %v3186 = vunpack.c.l.b16 %v1687
    %v3187 = vunpack.c.h.b16 %v1687
    %v3188 = vunpack.c.l.b16 %v1688
    %v3189 = vunpack.c.h.b16 %v1688
    %v3190 = vunpack.c.l.b16 %v1689
    %v3191 = vunpack.c.h.b16 %v1689
    %v3192 = vunpack.c.l.b16 %v1690
    %v3193 = vunpack.c.h.b16 %v1690
    %v3194 = vunpack.c.l.b16 %v1691
    %v3195 = vunpack.c.h.b16 %v1691
    %v3196 = vunpack.c.l.b16 %v1692
    %v3197 = vunpack.c.h.b16 %v1692
    %v3198 = vunpack.c.l.b16 %v1693
    %v3199 = vunpack.c.h.b16 %v1693
    %v3200 = vunpack.c.l.b16 %v1694
    %v3201 = vunpack.c.h.b16 %v1694
    %v3202 = vunpack.c.l.b16 %v1695
    %v3203 = vunpack.c.h.b16 %v1695
    %v3204 = vunpack.c.l.b16 %v1696
    %v3205 = vunpack.c.h.b16 %v1696
    %v3206 = vunpack.c.l.b16 %v1697
    %v3207 = vunpack.c.h.b16 %v1697
    %v3208 = vunpack.c.l.b16 %v1698
    %v3209 = vunpack.c.h.b16 %v1698
    %v3210 = vunpack.c.l.b16 %v1699
    %v3211 = vunpack.c.h.b16 %v1699
    %v3212 = vunpack.c.l.b16 %v1700
    %v3213 = vunpack.c.h.b16 %v1700
    %v3214 = vunpack.c.l.b16 %v1701
    %v3215 = vunpack.c.h.b16 %v1701
    %v3216 = vunpack.c.l.b16 %v1702
    %v3217 = vunpack.c.h.b16 %v1702
    %v3218 = vunpack.c.l.b16 %v1703
    %v3219 = vunpack.c.h.b16 %v1703
    %v3220 = vunpack.c.l.b16 %v1704
    %v3221 = vunpack.c.h.b16 %v1704
    %v3222 = vunpack.c.l.b16 %v1705
    %v3223 = vunpack.c.h.b16 %v1705
    %v3224 = vunpack.c.l.b16 %v1706
    %v3225 = vunpack.c.h.b16 %v1706
    %v3226 = vunpack.c.l.b16 %v1707
    %v3227 = vunpack.c.h.b16 %v1707
    %v3228 = vunpack.c.l.b16 %v1708
    %v3229 = vunpack.c.h.b16 %v1708
    %v3230 = vunpack.c.l.b16 %v1709
    %v3231 = vunpack.c.h.b16 %v1709
    %v3232 = vunpack.c.l.b16 %v1710
    %v3233 = vunpack.c.h.b16 %v1710
    %v3234 = vunpack.c.l.b16 %v1711
    %v3235 = vunpack.c.h.b16 %v1711
    %v3236 = vunpack.c.l.b16 %v1712
    %v3237 = vunpack.c.h.b16 %v1712
    %v3238 = vunpack.c.l.b16 %v1713
    %v3239 = vunpack.c.h.b16 %v1713
    %v3240 = vunpack.c.l.b16 %v1714
    %v3241 = vunpack.c.h.b16 %v1714
    %v3242 = vunpack.c.l.b16 %v1715
    %v3243 = vunpack.c.h.b16 %v1715
    %v3244 = vunpack.c.l.b16 %v1716
    %v3245 = vunpack.c.h.b16 %v1716
    %v3246 = vunpack.c.l.b16 %v1717
    %v3247 = vunpack.c.h.b16 %v1717
    %v3248 = vunpack.c.l.b16 %v1718
    %v3249 = vunpack.c.h.b16 %v1718
    %v3250 = vunpack.c.l.b16 %v1719
    %v3251 = vunpack.c.h.b16 %v1719
    %v3252 = vunpack.c.l.b16 %v1720
    %v3253 = vunpack.c.h.b16 %v1720
    %v3254 = vunpack.c.l.b16 %v1721
    %v3255 = vunpack.c.h.b16 %v1721
    %v3256 = vunpack.c.l.b16 %v1722
    %v3257 = vunpack.c.h.b16 %v1722
    %v3258 = vunpack.c.l.b16 %v1723
    %v3259 = vunpack.c.h.b16 %v1723
    %v3260 = vunpack.c.l.b16 %v1724
    %v3261 = vunpack.c.h.b16 %v1724
    %v3262 = vunpack.c.l.b16 %v1725
    %v3263 = vunpack.c.h.b16 %v1725
    %v3264 = vunpack.c.l.b16 %v1726
    %v3265 = vunpack.c.h.b16 %v1726
    %v3266 = vunpack.c.l.b16 %v1727
    %v3267 = vunpack.c.h.b16 %v1727
    %v3268 = vunpack.c.l.b16 %v1728
    %v3269 = vunpack.c.h.b16 %v1728
    %v3270 = vunpack.c.l.b16 %v1729
    %v3271 = vunpack.c.h.b16 %v1729
    %v3272 = vunpack.c.l.b16 %v1730
    %v3273 = vunpack.c.h.b16 %v1730
    %v3274 = vunpack.c.l.b16 %v1731
    %v3275 = vunpack.c.h.b16 %v1731
    %v3276 = vunpack.c.l.b16 %v1732
    %v3277 = vunpack.c.h.b16 %v1732
    %v3278 = vunpack.c.l.b16 %v1733
    %v3279 = vunpack.c.h.b16 %v1733
    %v3280 = vunpack.c.l.b16 %v1734
    %v3281 = vunpack.c.h.b16 %v1734
    %v3282 = vunpack.c.l.b16 %v1735
    %v3283 = vunpack.c.h.b16 %v1735
    %v3284 = vunpack.c.l.b16 %v1736
    %v3285 = vunpack.c.h.b16 %v1736
    %v3286 = vunpack.c.l.b16 %v1737
    %v3287 = vunpack.c.h.b16 %v1737
    %v3288 = vunpack.c.l.b16 %v1738
    %v3289 = vunpack.c.h.b16 %v1738
    %v3290 = vunpack.c.l.b16 %v1739
    %v3291 = vunpack.c.h.b16 %v1739
    %v3292 = vunpack.c.l.b16 %v1740
    %v3293 = vunpack.c.h.b16 %v1740
    %v3294 = vunpack.c.l.b16 %v1741
    %v3295 = vunpack.c.h.b16 %v1741
    %v3296 = vunpack.c.l.b16 %v1742
    %v3297 = vunpack.c.h.b16 %v1742
    %v3298 = vunpack.c.l.b16 %v1743
    %v3299 = vunpack.c.h.b16 %v1743
    %v3300 = vunpack.c.l.b16 %v1744
    %v3301 = vunpack.c.h.b16 %v1744
    %v3302 = vunpack.c.l.b16 %v1745
    %v3303 = vunpack.c.h.b16 %v1745
    %v3304 = vunpack.c.l.b16 %v1746
    %v3305 = vunpack.c.h.b16 %v1746
    %v3306 = vunpack.c.l.b16 %v1747
    %v3307 = vunpack.c.h.b16 %v1747
    %v3308 = vunpack.c.l.b16 %v1748
    %v3309 = vunpack.c.h.b16 %v1748
    %v3310 = vunpack.c.l.b16 %v1749
    %v3311 = vunpack.c.h.b16 %v1749
    %v3312 = vunpack.c.l.b16 %v1750
    %v3313 = vunpack.c.h.b16 %v1750
    %v3314 = vunpack.c.l.b16 %v1751
    %v3315 = vunpack.c.h.b16 %v1751
    %v3316 = vunpack.c.l.b16 %v1752
    %v3317 = vunpack.c.h.b16 %v1752
    %v3318 = vunpack.c.l.b16 %v1753
    %v3319 = vunpack.c.h.b16 %v1753
    %v3320 = vunpack.c.l.b16 %v1754
    %v3321 = vunpack.c.h.b16 %v1754
    %v3322 = vunpack.c.l.b16 %v1755
    %v3323 = vunpack.c.h.b16 %v1755
    %v3324 = vunpack.c.l.b16 %v1756
    %v3325 = vunpack.c.h.b16 %v1756
    %v3326 = vunpack.c.l.b16 %v1757
    %v3327 = vunpack.c.h.b16 %v1757
    %v3328 = vunpack.c.l.b16 %v1758
    %v3329 = vunpack.c.h.b16 %v1758
    %v3330 = vunpack.c.l.b16 %v1759
    %v3331 = vunpack.c.h.b16 %v1759
    %v3332 = vunpack.c.l.b16 %v1760
    %v3333 = vunpack.c.h.b16 %v1760
    %v3334 = vunpack.c.l.b16 %v1761
    %v3335 = vunpack.c.h.b16 %v1761
    %v3336 = vunpack.c.l.b16 %v1762
    %v3337 = vunpack.c.h.b16 %v1762
    %v3338 = vunpack.c.l.b16 %v1763
    %v3339 = vunpack.c.h.b16 %v1763
    %v3340 = vunpack.c.l.b16 %v1764
    %v3341 = vunpack.c.h.b16 %v1764
    %v3342 = vunpack.c.l.b16 %v1765
    %v3343 = vunpack.c.h.b16 %v1765
    %v3344 = vpack.c.b16 %v2328, %v2320
    %v3345 = vpack.c.b16 %v2329, %v2321
    %v3346 = vpack.c.b16 %v2330, %v2322
    %v3347 = vpack.c.b16 %v2331, %v2323
    %v3348 = vpack.c.b16 %v2332, %v2324
    %v3349 = vpack.c.b16 %v2333, %v2325
    %v3350 = vpack.c.b16 %v2334, %v2326
    %v3351 = vpack.c.b16 %v2335, %v2327
    %v3352 = vpack.c.b16 %v2344, %v2336
    %v3353 = vpack.c.b16 %v2345, %v2337
    %v3354 = vpack.c.b16 %v2346, %v2338
    %v3355 = vpack.c.b16 %v2347, %v2339
    %v3356 = vpack.c.b16 %v2348, %v2340
    %v3357 = vpack.c.b16 %v2349, %v2341
    %v3358 = vpack.c.b16 %v2350, %v2342
    %v3359 = vpack.c.b16 %v2351, %v2343
    %v3360 = vpack.c.b16 %v2360, %v2352
    %v3361 = vpack.c.b16 %v2361, %v2353
    %v3362 = vpack.c.b16 %v2362, %v2354
    %v3363 = vpack.c.b16 %v2363, %v2355
    %v3364 = vpack.c.b16 %v2364, %v2356
    %v3365 = vpack.c.b16 %v2365, %v2357
    %v3366 = vpack.c.b16 %v2366, %v2358
    %v3367 = vpack.c.b16 %v2367, %v2359
    %v3368 = vpack.c.b16 %v2376, %v2368
    %v3369 = vpack.c.b16 %v2377, %v2369
    %v3370 = vpack.c.b16 %v2378, %v2370
    %v3371 = vpack.c.b16 %v2379, %v2371
    %v3372 = vpack.c.b16 %v2380, %v2372
    %v3373 = vpack.c.b16 %v2381, %v2373
    %v3374 = vpack.c.b16 %v2382, %v2374
    %v3375 = vpack.c.b16 %v2383, %v2375
    %v3376 = vpack.c.b16 %v2392, %v2384
    %v3377 = vpack.c.b16 %v2393, %v2385
    %v3378 = vpack.c.b16 %v2394, %v2386
    %v3379 = vpack.c.b16 %v2395, %v2387
    %v3380 = vpack.c.b16 %v2396, %v2388
    %v3381 = vpack.c.b16 %v2397, %v2389
    %v3382 = vpack.c.b16 %v2398, %v2390
    %v3383 = vpack.c.b16 %v2399, %v2391
    %v3384 = vpack.c.b16 %v2408, %v2400
    %v3385 = vpack.c.b16 %v2409, %v2401
    %v3386 = vpack.c.b16 %v2410, %v2402
    %v3387 = vpack.c.b16 %v2411, %v2403
    %v3388 = vpack.c.b16 %v2412, %v2404
    %v3389 = vpack.c.b16 %v2413, %v2405
    %v3390 = vpack.c.b16 %v2414, %v2406
    %v3391 = vpack.c.b16 %v2415, %v2407
    %v3392 = vpack.c.b16 %v2424, %v2416
    %v3393 = vpack.c.b16 %v2425, %v2417
    %v3394 = vpack.c.b16 %v2426, %v2418
    %v3395 = vpack.c.b16 %v2427, %v2419
    %v3396 = vpack.c.b16 %v2428, %v2420
    %v3397 = vpack.c.b16 %v2429, %v2421
    %v3398 = vpack.c.b16 %v2430, %v2422
    %v3399 = vpack.c.b16 %v2431, %v2423
    %v3400 = vpack.c.b16 %v2440, %v2432
    %v3401 = vpack.c.b16 %v2441, %v2433
    %v3402 = vpack.c.b16 %v2442, %v2434
    %v3403 = vpack.c.b16 %v2443, %v2435
    %v3404 = vpack.c.b16 %v2444, %v2436
    %v3405 = vpack.c.b16 %v2445, %v2437
    %v3406 = vpack.c.b16 %v2446, %v2438
    %v3407 = vpack.c.b16 %v2447, %v2439
    %v3408 = vpack.c.b16 %v2456, %v2448
    %v3409 = vpack.c.b16 %v2457, %v2449
    %v3410 = vpack.c.b16 %v2458, %v2450
    %v3411 = vpack.c.b16 %v2459, %v2451
    %v3412 = vpack.c.b16 %v2460, %v2452
    %v3413 = vpack.c.b16 %v2461, %v2453
    %v3414 = vpack.c.b16 %v2462, %v2454
    %v3415 = vpack.c.b16 %v2463, %v2455
    %v3416 = vpack.c.b16 %v2472, %v2464
    %v3417 = vpack.c.b16 %v2473, %v2465
    %v3418 = vpack.c.b16 %v2474, %v2466
    %v3419 = vpack.c.b16 %v2475, %v2467
    %v3420 = vpack.c.b16 %v2476, %v2468
    %v3421 = vpack.c.b16 %v2477, %v2469
    %v3422 = vpack.c.b16 %v2478, %v2470
    %v3423 = vpack.c.b16 %v2479, %v2471
    %v3424 = vpack.c.b16 %v2488, %v2480
    %v3425 = vpack.c.b16 %v2489, %v2481
    %v3426 = vpack.c.b16 %v2490, %v2482
    %v3427 = vpack.c.b16 %v2491, %v2483
    %v3428 = vpack.c.b16 %v2492, %v2484
    %v3429 = vpack.c.b16 %v2493, %v2485
    %v3430 = vpack.c.b16 %v2494, %v2486
    %v3431 = vpack.c.b16 %v2495, %v2487
    %v3432 = vpack.c.b16 %v2504, %v2496
    %v3433 = vpack.c.b16 %v2505, %v2497
    %v3434 = vpack.c.b16 %v2506, %v2498
    %v3435 = vpack.c.b16 %v2507, %v2499
    %v3436 = vpack.c.b16 %v2508, %v2500
    %v3437 = vpack.c.b16 %v2509, %v2501
    %v3438 = vpack.c.b16 %v2510, %v2502
    %v3439 = vpack.c.b16 %v2511, %v2503
    %v3440 = vpack.c.b16 %v2520, %v2512
    %v3441 = vpack.c.b16 %v2521, %v2513
    %v3442 = vpack.c.b16 %v2522, %v2514
    %v3443 = vpack.c.b16 %v2523, %v2515
    %v3444 = vpack.c.b16 %v2524, %v2516
    %v3445 = vpack.c.b16 %v2525, %v2517
    %v3446 = vpack.c.b16 %v2526, %v2518
    %v3447 = vpack.c.b16 %v2527, %v2519
    %v3448 = vpack.c.b16 %v2536, %v2528
    %v3449 = vpack.c.b16 %v2537, %v2529
    %v3450 = vpack.c.b16 %v2538, %v2530
    %v3451 = vpack.c.b16 %v2539, %v2531
    %v3452 = vpack.c.b16 %v2540, %v2532
    %v3453 = vpack.c.b16 %v2541, %v2533
    %v3454 = vpack.c.b16 %v2542, %v2534
    %v3455 = vpack.c.b16 %v2543, %v2535
    %v3456 = vpack.c.b16 %v2552, %v2544
    %v3457 = vpack.c.b16 %v2553, %v2545
    %v3458 = vpack.c.b16 %v2554, %v2546
    %v3459 = vpack.c.b16 %v2555, %v2547
    %v3460 = vpack.c.b16 %v2556, %v2548
    %v3461 = vpack.c.b16 %v2557, %v2549
    %v3462 = vpack.c.b16 %v2558, %v2550
    %v3463 = vpack.c.b16 %v2559, %v2551
    %v3464 = vpack.c.b16 %v2568, %v2560
    %v3465 = vpack.c.b16 %v2569, %v2561
    %v3466 = vpack.c.b16 %v2570, %v2562
    %v3467 = vpack.c.b16 %v2571, %v2563
    %v3468 = vpack.c.b16 %v2572, %v2564
    %v3469 = vpack.c.b16 %v2573, %v2565
    %v3470 = vpack.c.b16 %v2574, %v2566
    %v3471 = vpack.c.b16 %v2575, %v2567
    %v3472 = vpack.c.b16 %v2584, %v2576
    %v3473 = vpack.c.b16 %v2585, %v2577
    %v3474 = vpack.c.b16 %v2586, %v2578
    %v3475 = vpack.c.b16 %v2587, %v2579
    %v3476 = vpack.c.b16 %v2588, %v2580
    %v3477 = vpack.c.b16 %v2589, %v2581
    %v3478 = vpack.c.b16 %v2590, %v2582
    %v3479 = vpack.c.b16 %v2591, %v2583
    %v3480 = vpack.c.b16 %v2600, %v2592
    %v3481 = vpack.c.b16 %v2601, %v2593
    %v3482 = vpack.c.b16 %v2602, %v2594
    %v3483 = vpack.c.b16 %v2603, %v2595
    %v3484 = vpack.c.b16 %v2604, %v2596
    %v3485 = vpack.c.b16 %v2605, %v2597
    %v3486 = vpack.c.b16 %v2606, %v2598
    %v3487 = vpack.c.b16 %v2607, %v2599
    %v3488 = vpack.c.b16 %v2616, %v2608
    %v3489 = vpack.c.b16 %v2617, %v2609
    %v3490 = vpack.c.b16 %v2618, %v2610
    %v3491 = vpack.c.b16 %v2619, %v2611
    %v3492 = vpack.c.b16 %v2620, %v2612
    %v3493 = vpack.c.b16 %v2621, %v2613
    %v3494 = vpack.c.b16 %v2622, %v2614
    %v3495 = vpack.c.b16 %v2623, %v2615
    %v3496 = vpack.c.b16 %v2632, %v2624
    %v3497 = vpack.c.b16 %v2633, %v2625
    %v3498 = vpack.c.b16 %v2634, %v2626
    %v3499 = vpack.c.b16 %v2635, %v2627
    %v3500 = vpack.c.b16 %v2636, %v2628
    %v3501 = vpack.c.b16 %v2637, %v2629
    %v3502 = vpack.c.b16 %v2638, %v2630
    %v3503 = vpack.c.b16 %v2639, %v2631
    %v3504 = vpack.c.b16 %v2648, %v2640
    %v3505 = vpack.c.b16 %v2649, %v2641
    %v3506 = vpack.c.b16 %v2650, %v2642
    %v3507 = vpack.c.b16 %v2651, %v2643
    %v3508 = vpack.c.b16 %v2652, %v2644
    %v3509 = vpack.c.b16 %v2653, %v2645
    %v3510 = vpack.c.b16 %v2654, %v2646
    %v3511 = vpack.c.b16 %v2655, %v2647
    %v3512 = vpack.c.b16 %v2664, %v2656
    %v3513 = vpack.c.b16 %v2665, %v2657
    %v3514 = vpack.c.b16 %v2666, %v2658
    %v3515 = vpack.c.b16 %v2667, %v2659
    %v3516 = vpack.c.b16 %v2668, %v2660
    %v3517 = vpack.c.b16 %v2669, %v2661
    %v3518 = vpack.c.b16 %v2670, %v2662
    %v3519 = vpack.c.b16 %v2671, %v2663
    %v3520 = vpack.c.b16 %v2680, %v2672
    %v3521 = vpack.c.b16 %v2681, %v2673
    %v3522 = vpack.c.b16 %v2682, %v2674
    %v3523 = vpack.c.b16 %v2683, %v2675
    %v3524 = vpack.c.b16 %v2684, %v2676
    %v3525 = vpack.c.b16 %v2685, %v2677
    %v3526 = vpack.c.b16 %v2686, %v2678
    %v3527 = vpack.c.b16 %v2687, %v2679
    %v3528 = vpack.c.b16 %v2696, %v2688
    %v3529 = vpack.c.b16 %v2697, %v2689
    %v3530 = vpack.c.b16 %v2698, %v2690
    %v3531 = vpack.c.b16 %v2699, %v2691
    %v3532 = vpack.c.b16 %v2700, %v2692
    %v3533 = vpack.c.b16 %v2701, %v2693
    %v3534 = vpack.c.b16 %v2702, %v2694
    %v3535 = vpack.c.b16 %v2703, %v2695
    %v3536 = vpack.c.b16 %v2712, %v2704
    %v3537 = vpack.c.b16 %v2713, %v2705
    %v3538 = vpack.c.b16 %v2714, %v2706
    %v3539 = vpack.c.b16 %v2715, %v2707
    %v3540 = vpack.c.b16 %v2716, %v2708
    %v3541 = vpack.c.b16 %v2717, %v2709
    %v3542 = vpack.c.b16 %v2718, %v2710
    %v3543 = vpack.c.b16 %v2719, %v2711
    %v3544 = vpack.c.b16 %v2728, %v2720
    %v3545 = vpack.c.b16 %v2729, %v2721
    %v3546 = vpack.c.b16 %v2730, %v2722
    %v3547 = vpack.c.b16 %v2731, %v2723
    %v3548 = vpack.c.b16 %v2732, %v2724
    %v3549 = vpack.c.b16 %v2733, %v2725
    %v3550 = vpack.c.b16 %v2734, %v2726
    %v3551 = vpack.c.b16 %v2735, %v2727
    %v3552 = vpack.c.b16 %v2744, %v2736
    %v3553 = vpack.c.b16 %v2745, %v2737
    %v3554 = vpack.c.b16 %v2746, %v2738
    %v3555 = vpack.c.b16 %v2747, %v2739
    %v3556 = vpack.c.b16 %v2748, %v2740
    %v3557 = vpack.c.b16 %v2749, %v2741
    %v3558 = vpack.c.b16 %v2750, %v2742
    %v3559 = vpack.c.b16 %v2751, %v2743
    %v3560 = vpack.c.b16 %v2760, %v2752
    %v3561 = vpack.c.b16 %v2761, %v2753
    %v3562 = vpack.c.b16 %v2762, %v2754
    %v3563 = vpack.c.b16 %v2763, %v2755
    %v3564 = vpack.c.b16 %v2764, %v2756
    %v3565 = vpack.c.b16 %v2765, %v2757
    %v3566 = vpack.c.b16 %v2766, %v2758
    %v3567 = vpack.c.b16 %v2767, %v2759
    %v3568 = vpack.c.b16 %v2776, %v2768
    %v3569 = vpack.c.b16 %v2777, %v2769
    %v3570 = vpack.c.b16 %v2778, %v2770
    %v3571 = vpack.c.b16 %v2779, %v2771
    %v3572 = vpack.c.b16 %v2780, %v2772
    %v3573 = vpack.c.b16 %v2781, %v2773
    %v3574 = vpack.c.b16 %v2782, %v2774
    %v3575 = vpack.c.b16 %v2783, %v2775
    %v3576 = vpack.c.b16 %v2792, %v2784
    %v3577 = vpack.c.b16 %v2793, %v2785
    %v3578 = vpack.c.b16 %v2794, %v2786
    %v3579 = vpack.c.b16 %v2795, %v2787
    %v3580 = vpack.c.b16 %v2796, %v2788
    %v3581 = vpack.c.b16 %v2797, %v2789
    %v3582 = vpack.c.b16 %v2798, %v2790
    %v3583 = vpack.c.b16 %v2799, %v2791
    %v3584 = vpack.c.b16 %v2808, %v2800
    %v3585 = vpack.c.b16 %v2809, %v2801
    %v3586 = vpack.c.b16 %v2810, %v2802
    %v3587 = vpack.c.b16 %v2811, %v2803
    %v3588 = vpack.c.b16 %v2812, %v2804
    %v3589 = vpack.c.b16 %v2813, %v2805
    %v3590 = vpack.c.b16 %v2814, %v2806
    %v3591 = vpack.c.b16 %v2815, %v2807
    %v3592 = vpack.c.b16 %v2824, %v2816
    %v3593 = vpack.c.b16 %v2825, %v2817
    %v3594 = vpack.c.b16 %v2826, %v2818
    %v3595 = vpack.c.b16 %v2827, %v2819
    %v3596 = vpack.c.b16 %v2828, %v2820
    %v3597 = vpack.c.b16 %v2829, %v2821
    %v3598 = vpack.c.b16 %v2830, %v2822
    %v3599 = vpack.c.b16 %v2831, %v2823
    %v3600 = vpack.c.b16 %v2840, %v2832
    %v3601 = vpack.c.b16 %v2841, %v2833
    %v3602 = vpack.c.b16 %v2842, %v2834
    %v3603 = vpack.c.b16 %v2843, %v2835
    %v3604 = vpack.c.b16 %v2844, %v2836
    %v3605 = vpack.c.b16 %v2845, %v2837
    %v3606 = vpack.c.b16 %v2846, %v2838
    %v3607 = vpack.c.b16 %v2847, %v2839
    %v3608 = vpack.c.b16 %v2856, %v2848
    %v3609 = vpack.c.b16 %v2857, %v2849
    %v3610 = vpack.c.b16 %v2858, %v2850
    %v3611 = vpack.c.b16 %v2859, %v2851
    %v3612 = vpack.c.b16 %v2860, %v2852
    %v3613 = vpack.c.b16 %v2861, %v2853
    %v3614 = vpack.c.b16 %v2862, %v2854
    %v3615 = vpack.c.b16 %v2863, %v2855
    %v3616 = vpack.c.b16 %v2872, %v2864
    %v3617 = vpack.c.b16 %v2873, %v2865
    %v3618 = vpack.c.b16 %v2874, %v2866
    %v3619 = vpack.c.b16 %v2875, %v2867
    %v3620 = vpack.c.b16 %v2876, %v2868
    %v3621 = vpack.c.b16 %v2877, %v2869
    %v3622 = vpack.c.b16 %v2878, %v2870
    %v3623 = vpack.c.b16 %v2879, %v2871
    %v3624 = vpack.c.b16 %v2888, %v2880
    %v3625 = vpack.c.b16 %v2889, %v2881
    %v3626 = vpack.c.b16 %v2890, %v2882
    %v3627 = vpack.c.b16 %v2891, %v2883
    %v3628 = vpack.c.b16 %v2892, %v2884
    %v3629 = vpack.c.b16 %v2893, %v2885
    %v3630 = vpack.c.b16 %v2894, %v2886
    %v3631 = vpack.c.b16 %v2895, %v2887
    %v3632 = vpack.c.b16 %v2904, %v2896
    %v3633 = vpack.c.b16 %v2905, %v2897
    %v3634 = vpack.c.b16 %v2906, %v2898
    %v3635 = vpack.c.b16 %v2907, %v2899
    %v3636 = vpack.c.b16 %v2908, %v2900
    %v3637 = vpack.c.b16 %v2909, %v2901
    %v3638 = vpack.c.b16 %v2910, %v2902
    %v3639 = vpack.c.b16 %v2911, %v2903
    %v3640 = vpack.c.b16 %v2920, %v2912
    %v3641 = vpack.c.b16 %v2921, %v2913
    %v3642 = vpack.c.b16 %v2922, %v2914
    %v3643 = vpack.c.b16 %v2923, %v2915
    %v3644 = vpack.c.b16 %v2924, %v2916
    %v3645 = vpack.c.b16 %v2925, %v2917
    %v3646 = vpack.c.b16 %v2926, %v2918
    %v3647 = vpack.c.b16 %v2927, %v2919
    %v3648 = vpack.c.b16 %v2936, %v2928
    %v3649 = vpack.c.b16 %v2937, %v2929
    %v3650 = vpack.c.b16 %v2938, %v2930
    %v3651 = vpack.c.b16 %v2939, %v2931
    %v3652 = vpack.c.b16 %v2940, %v2932
    %v3653 = vpack.c.b16 %v2941, %v2933
    %v3654 = vpack.c.b16 %v2942, %v2934
    %v3655 = vpack.c.b16 %v2943, %v2935
    %v3656 = vpack.c.b16 %v2952, %v2944
    %v3657 = vpack.c.b16 %v2953, %v2945
    %v3658 = vpack.c.b16 %v2954, %v2946
    %v3659 = vpack.c.b16 %v2955, %v2947
    %v3660 = vpack.c.b16 %v2956, %v2948
    %v3661 = vpack.c.b16 %v2957, %v2949
    %v3662 = vpack.c.b16 %v2958, %v2950
    %v3663 = vpack.c.b16 %v2959, %v2951
    %v3664 = vpack.c.b16 %v2968, %v2960
    %v3665 = vpack.c.b16 %v2969, %v2961
    %v3666 = vpack.c.b16 %v2970, %v2962
    %v3667 = vpack.c.b16 %v2971, %v2963
    %v3668 = vpack.c.b16 %v2972, %v2964
    %v3669 = vpack.c.b16 %v2973, %v2965
    %v3670 = vpack.c.b16 %v2974, %v2966
    %v3671 = vpack.c.b16 %v2975, %v2967
    %v3672 = vpack.c.b16 %v2984, %v2976
    %v3673 = vpack.c.b16 %v2985, %v2977
    %v3674 = vpack.c.b16 %v2986, %v2978
    %v3675 = vpack.c.b16 %v2987, %v2979
    %v3676 = vpack.c.b16 %v2988, %v2980
    %v3677 = vpack.c.b16 %v2989, %v2981
    %v3678 = vpack.c.b16 %v2990, %v2982
    %v3679 = vpack.c.b16 %v2991, %v2983
    %v3680 = vpack.c.b16 %v3000, %v2992
    %v3681 = vpack.c.b16 %v3001, %v2993
    %v3682 = vpack.c.b16 %v3002, %v2994
    %v3683 = vpack.c.b16 %v3003, %v2995
    %v3684 = vpack.c.b16 %v3004, %v2996
    %v3685 = vpack.c.b16 %v3005, %v2997
    %v3686 = vpack.c.b16 %v3006, %v2998
    %v3687 = vpack.c.b16 %v3007, %v2999
    %v3688 = vpack.c.b16 %v3016, %v3008
    %v3689 = vpack.c.b16 %v3017, %v3009
    %v3690 = vpack.c.b16 %v3018, %v3010
    %v3691 = vpack.c.b16 %v3019, %v3011
    %v3692 = vpack.c.b16 %v3020, %v3012
    %v3693 = vpack.c.b16 %v3021, %v3013
    %v3694 = vpack.c.b16 %v3022, %v3014
    %v3695 = vpack.c.b16 %v3023, %v3015
    %v3696 = vpack.c.b16 %v3032, %v3024
    %v3697 = vpack.c.b16 %v3033, %v3025
    %v3698 = vpack.c.b16 %v3034, %v3026
    %v3699 = vpack.c.b16 %v3035, %v3027
    %v3700 = vpack.c.b16 %v3036, %v3028
    %v3701 = vpack.c.b16 %v3037, %v3029
    %v3702 = vpack.c.b16 %v3038, %v3030
    %v3703 = vpack.c.b16 %v3039, %v3031
    %v3704 = vpack.c.b16 %v3048, %v3040
    %v3705 = vpack.c.b16 %v3049, %v3041
    %v3706 = vpack.c.b16 %v3050, %v3042
    %v3707 = vpack.c.b16 %v3051, %v3043
    %v3708 = vpack.c.b16 %v3052, %v3044
    %v3709 = vpack.c.b16 %v3053, %v3045
    %v3710 = vpack.c.b16 %v3054, %v3046
    %v3711 = vpack.c.b16 %v3055, %v3047
    %v3712 = vpack.c.b16 %v3064, %v3056
    %v3713 = vpack.c.b16 %v3065, %v3057
    %v3714 = vpack.c.b16 %v3066, %v3058
    %v3715 = vpack.c.b16 %v3067, %v3059
    %v3716 = vpack.c.b16 %v3068, %v3060
    %v3717 = vpack.c.b16 %v3069, %v3061
    %v3718 = vpack.c.b16 %v3070, %v3062
    %v3719 = vpack.c.b16 %v3071, %v3063
    %v3720 = vpack.c.b16 %v3080, %v3072
    %v3721 = vpack.c.b16 %v3081, %v3073
    %v3722 = vpack.c.b16 %v3082, %v3074
    %v3723 = vpack.c.b16 %v3083, %v3075
    %v3724 = vpack.c.b16 %v3084, %v3076
    %v3725 = vpack.c.b16 %v3085, %v3077
    %v3726 = vpack.c.b16 %v3086, %v3078
    %v3727 = vpack.c.b16 %v3087, %v3079
    %v3728 = vpack.c.b16 %v3096, %v3088
    %v3729 = vpack.c.b16 %v3097, %v3089
    %v3730 = vpack.c.b16 %v3098, %v3090
    %v3731 = vpack.c.b16 %v3099, %v3091
    %v3732 = vpack.c.b16 %v3100, %v3092
    %v3733 = vpack.c.b16 %v3101, %v3093
    %v3734 = vpack.c.b16 %v3102, %v3094
    %v3735 = vpack.c.b16 %v3103, %v3095
    %v3736 = vpack.c.b16 %v3112, %v3104
    %v3737 = vpack.c.b16 %v3113, %v3105
    %v3738 = vpack.c.b16 %v3114, %v3106
    %v3739 = vpack.c.b16 %v3115, %v3107
    %v3740 = vpack.c.b16 %v3116, %v3108
    %v3741 = vpack.c.b16 %v3117, %v3109
    %v3742 = vpack.c.b16 %v3118, %v3110
    %v3743 = vpack.c.b16 %v3119, %v3111
    %v3744 = vpack.c.b16 %v3128, %v3120
    %v3745 = vpack.c.b16 %v3129, %v3121
    %v3746 = vpack.c.b16 %v3130, %v3122
    %v3747 = vpack.c.b16 %v3131, %v3123
    %v3748 = vpack.c.b16 %v3132, %v3124
    %v3749 = vpack.c.b16 %v3133, %v3125
    %v3750 = vpack.c.b16 %v3134, %v3126
    %v3751 = vpack.c.b16 %v3135, %v3127
    %v3752 = vpack.c.b16 %v3144, %v3136
    %v3753 = vpack.c.b16 %v3145, %v3137
    %v3754 = vpack.c.b16 %v3146, %v3138
    %v3755 = vpack.c.b16 %v3147, %v3139
    %v3756 = vpack.c.b16 %v3148, %v3140
    %v3757 = vpack.c.b16 %v3149, %v3141
    %v3758 = vpack.c.b16 %v3150, %v3142
    %v3759 = vpack.c.b16 %v3151, %v3143
    %v3760 = vpack.c.b16 %v3160, %v3152
    %v3761 = vpack.c.b16 %v3161, %v3153
    %v3762 = vpack.c.b16 %v3162, %v3154
    %v3763 = vpack.c.b16 %v3163, %v3155
    %v3764 = vpack.c.b16 %v3164, %v3156
    %v3765 = vpack.c.b16 %v3165, %v3157
    %v3766 = vpack.c.b16 %v3166, %v3158
    %v3767 = vpack.c.b16 %v3167, %v3159
    %v3768 = vpack.c.b16 %v3176, %v3168
    %v3769 = vpack.c.b16 %v3177, %v3169
    %v3770 = vpack.c.b16 %v3178, %v3170
    %v3771 = vpack.c.b16 %v3179, %v3171
    %v3772 = vpack.c.b16 %v3180, %v3172
    %v3773 = vpack.c.b16 %v3181, %v3173
    %v3774 = vpack.c.b16 %v3182, %v3174
    %v3775 = vpack.c.b16 %v3183, %v3175
    %v3776 = vpack.c.b16 %v3192, %v3184
    %v3777 = vpack.c.b16 %v3193, %v3185
    %v3778 = vpack.c.b16 %v3194, %v3186
    %v3779 = vpack.c.b16 %v3195, %v3187
    %v3780 = vpack.c.b16 %v3196, %v3188
    %v3781 = vpack.c.b16 %v3197, %v3189
    %v3782 = vpack.c.b16 %v3198, %v3190
    %v3783 = vpack.c.b16 %v3199, %v3191
    %v3784 = vpack.c.b16 %v3208, %v3200
    %v3785 = vpack.c.b16 %v3209, %v3201
    %v3786 = vpack.c.b16 %v3210, %v3202
    %v3787 = vpack.c.b16 %v3211, %v3203
    %v3788 = vpack.c.b16 %v3212, %v3204
    %v3789 = vpack.c.b16 %v3213, %v3205
    %v3790 = vpack.c.b16 %v3214, %v3206
    %v3791 = vpack.c.b16 %v3215, %v3207
    %v3792 = vpack.c.b16 %v3224, %v3216
    %v3793 = vpack.c.b16 %v3225, %v3217
    %v3794 = vpack.c.b16 %v3226, %v3218
    %v3795 = vpack.c.b16 %v3227, %v3219
    %v3796 = vpack.c.b16 %v3228, %v3220
    %v3797 = vpack.c.b16 %v3229, %v3221
    %v3798 = vpack.c.b16 %v3230, %v3222
    %v3799 = vpack.c.b16 %v3231, %v3223
    %v3800 = vpack.c.b16 %v3240, %v3232
    %v3801 = vpack.c.b16 %v3241, %v3233
    %v3802 = vpack.c.b16 %v3242, %v3234
    %v3803 = vpack.c.b16 %v3243, %v3235
    %v3804 = vpack.c.b16 %v3244, %v3236
    %v3805 = vpack.c.b16 %v3245, %v3237
    %v3806 = vpack.c.b16 %v3246, %v3238
    %v3807 = vpack.c.b16 %v3247, %v3239
    %v3808 = vpack.c.b16 %v3256, %v3248
    %v3809 = vpack.c.b16 %v3257, %v3249
    %v3810 = vpack.c.b16 %v3258, %v3250
    %v3811 = vpack.c.b16 %v3259, %v3251
    %v3812 = vpack.c.b16 %v3260, %v3252
    %v3813 = vpack.c.b16 %v3261, %v3253
    %v3814 = vpack.c.b16 %v3262, %v3254
    %v3815 = vpack.c.b16 %v3263, %v3255
    %v3816 = vpack.c.b16 %v3272, %v3264
    %v3817 = vpack.c.b16 %v3273, %v3265
    %v3818 = vpack.c.b16 %v3274, %v3266
    %v3819 = vpack.c.b16 %v3275, %v3267
    %v3820 = vpack.c.b16 %v3276, %v3268
    %v3821 = vpack.c.b16 %v3277, %v3269
    %v3822 = vpack.c.b16 %v3278, %v3270
    %v3823 = vpack.c.b16 %v3279, %v3271
    %v3824 = vpack.c.b16 %v3288, %v3280
    %v3825 = vpack.c.b16 %v3289, %v3281
    %v3826 = vpack.c.b16 %v3290, %v3282
    %v3827 = vpack.c.b16 %v3291, %v3283
    %v3828 = vpack.c.b16 %v3292, %v3284
    %v3829 = vpack.c.b16 %v3293, %v3285
    %v3830 = vpack.c.b16 %v3294, %v3286
    %v3831 = vpack.c.b16 %v3295, %v3287
    %v3832 = vpack.c.b16 %v3304, %v3296
    %v3833 = vpack.c.b16 %v3305, %v3297
    %v3834 = vpack.c.b16 %v3306, %v3298
    %v3835 = vpack.c.b16 %v3307, %v3299
    %v3836 = vpack.c.b16 %v3308, %v3300
    %v3837 = vpack.c.b16 %v3309, %v3301
    %v3838 = vpack.c.b16 %v3310, %v3302
    %v3839 = vpack.c.b16 %v3311, %v3303
    %v3840 = vpack.c.b16 %v3320, %v3312
    %v3841 = vpack.c.b16 %v3321, %v3313
    %v3842 = vpack.c.b16 %v3322, %v3314
    %v3843 = vpack.c.b16 %v3323, %v3315
    %v3844 = vpack.c.b16 %v3324, %v3316
    %v3845 = vpack.c.b16 %v3325, %v3317
    %v3846 = vpack.c.b16 %v3326, %v3318
    %v3847 = vpack.c.b16 %v3327, %v3319
    %v3848 = vpack.c.b16 %v3336, %v3328
    %v3849 = vpack.c.b16 %v3337, %v3329
    %v3850 = vpack.c.b16 %v3338, %v3330
    %v3851 = vpack.c.b16 %v3339, %v3331
    %v3852 = vpack.c.b16 %v3340, %v3332
    %v3853 = vpack.c.b16 %v3341, %v3333
    %v3854 = vpack.c.b16 %v3342, %v3334
    %v3855 = vpack.c.b16 %v3343, %v3335
    %4368 = vmatprep.subr.bf16.mxu0 %v3345
    %4369 = vmatpush1.bf16.msra.mxu0 %v3344
    %4370 = vmatprep.subr.bf16.mxu0 %v3353
    %4371 = vmatpush1.bf16.msra.mxu0 %v3352
    %4372 = vmatprep.subr.bf16.mxu0 %v3361
    %4373 = vmatpush1.bf16.msra.mxu0 %v3360
    %4374 = vmatprep.subr.bf16.mxu0 %v3369
    %4375 = vmatpush1.bf16.msra.mxu0 %v3368
    %4376 = vmatprep.subr.bf16.mxu0 %v3377
    %4377 = vmatpush1.bf16.msra.mxu0 %v3376
    %4378 = vmatprep.subr.bf16.mxu0 %v3385
    %4379 = vmatpush1.bf16.msra.mxu0 %v3384
    %4380 = vmatprep.subr.bf16.mxu0 %v3393
    %4381 = vmatpush1.bf16.msra.mxu0 %v3392
    %4382 = vmatprep.subr.bf16.mxu0 %v3401
    %4383 = vmatpush1.bf16.msra.mxu0 %v3400
    %4384 = vmatprep.subr.bf16.mxu0 %v3409
    %4385 = vmatpush1.bf16.msra.mxu0 %v3408
    %4386 = vmatprep.subr.bf16.mxu0 %v3417
    %4387 = vmatpush1.bf16.msra.mxu0 %v3416
    %4388 = vmatprep.subr.bf16.mxu0 %v3425
    %4389 = vmatpush1.bf16.msra.mxu0 %v3424
    %4390 = vmatprep.subr.bf16.mxu0 %v3433
    %4391 = vmatpush1.bf16.msra.mxu0 %v3432
    %4392 = vmatprep.subr.bf16.mxu0 %v3441
    %4393 = vmatpush1.bf16.msra.mxu0 %v3440
    %4394 = vmatprep.subr.bf16.mxu0 %v3449
    %4395 = vmatpush1.bf16.msra.mxu0 %v3448
    %4396 = vmatprep.subr.bf16.mxu0 %v3457
    %4397 = vmatpush1.bf16.msra.mxu0 %v3456
    %4398 = vmatprep.subr.bf16.mxu0 %v3465
    %4399 = vmatpush1.bf16.msra.mxu0 %v3464
    %4400 = vmatprep.mubr.bf16.mxu0 %v1247
    %4401 = vmatmul.mubr.bf16.gmra.mrb[0].mxu0 %v1246
    %v4402 = vpop.f32.mrb[0].mxu0
    %v4403 = vadd.f32 %v1771, %v4402
    %v4404 = vpop.f32.mrb[0].mxu0
    %v4405 = vadd.f32 %v1775, %v4404
    %v4406 = vpop.f32.mrb[0].mxu0
    %v4407 = vpop.f32.mrb[0].mxu0
    %4408 = vdwg.mxu0
    %4409 = vmatprep.subr.bf16.mxu0 %v3473
    %4410 = vmatpush1.bf16.msra.mxu0 %v3472
    %4411 = vmatprep.subr.bf16.mxu0 %v3481
    %4412 = vmatpush1.bf16.msra.mxu0 %v3480
    %4413 = vmatprep.subr.bf16.mxu0 %v3489
    %4414 = vmatpush1.bf16.msra.mxu0 %v3488
    %4415 = vmatprep.subr.bf16.mxu0 %v3497
    %4416 = vmatpush1.bf16.msra.mxu0 %v3496
    %4417 = vmatprep.subr.bf16.mxu0 %v3505
    %4418 = vmatpush1.bf16.msra.mxu0 %v3504
    %4419 = vmatprep.subr.bf16.mxu0 %v3513
    %4420 = vmatpush1.bf16.msra.mxu0 %v3512
    %4421 = vmatprep.subr.bf16.mxu0 %v3521
    %4422 = vmatpush1.bf16.msra.mxu0 %v3520
    %4423 = vmatprep.subr.bf16.mxu0 %v3529
    %4424 = vmatpush1.bf16.msra.mxu0 %v3528
    %4425 = vmatprep.subr.bf16.mxu0 %v3537
    %4426 = vmatpush1.bf16.msra.mxu0 %v3536
    %4427 = vmatprep.subr.bf16.mxu0 %v3545
    %4428 = vmatpush1.bf16.msra.mxu0 %v3544
    %4429 = vmatprep.subr.bf16.mxu0 %v3553
    %4430 = vmatpush1.bf16.msra.mxu0 %v3552
    %4431 = vmatprep.subr.bf16.mxu0 %v3561
    %4432 = vmatpush1.bf16.msra.mxu0 %v3560
    %4433 = vmatprep.subr.bf16.mxu0 %v3569
    %4434 = vmatpush1.bf16.msra.mxu0 %v3568
    %4435 = vmatprep.subr.bf16.mxu0 %v3577
    %4436 = vmatpush1.bf16.msra.mxu0 %v3576
    %4437 = vmatprep.subr.bf16.mxu0 %v3585
    %4438 = vmatpush1.bf16.msra.mxu0 %v3584
    %4439 = vmatprep.subr.bf16.mxu0 %v3593
    %4440 = vmatpush1.bf16.msra.mxu0 %v3592
    %4441 = vmatprep.mubr.bf16.mxu0 %v1249
    %4442 = vmatmul.mubr.bf16.gmra.mrb[0].mxu0 %v1248
    %v4443 = vpop.f32.mrb[0].mxu0
    %v4444 = vadd.f32 %v4403, %v4443
    %v4445 = vpop.f32.mrb[0].mxu0
    %v4446 = vadd.f32 %v4405, %v4445
    %v4447 = vpop.f32.mrb[0].mxu0
    %v4448 = vpop.f32.mrb[0].mxu0
    %4449 = vdwg.mxu0
    %4450 = vmatprep.subr.bf16.mxu0 %v3601
    %4451 = vmatpush1.bf16.msra.mxu0 %v3600
    %4452 = vmatprep.subr.bf16.mxu0 %v3609
    %4453 = vmatpush1.bf16.msra.mxu0 %v3608
    %4454 = vmatprep.subr.bf16.mxu0 %v3617
    %4455 = vmatpush1.bf16.msra.mxu0 %v3616
    %4456 = vmatprep.subr.bf16.mxu0 %v3625
    %4457 = vmatpush1.bf16.msra.mxu0 %v3624
    %4458 = vmatprep.subr.bf16.mxu0 %v3633
    %4459 = vmatpush1.bf16.msra.mxu0 %v3632
    %4460 = vmatprep.subr.bf16.mxu0 %v3641
    %4461 = vmatpush1.bf16.msra.mxu0 %v3640
    %4462 = vmatprep.subr.bf16.mxu0 %v3649
    %4463 = vmatpush1.bf16.msra.mxu0 %v3648
    %4464 = vmatprep.subr.bf16.mxu0 %v3657
    %4465 = vmatpush1.bf16.msra.mxu0 %v3656
    %4466 = vmatprep.subr.bf16.mxu0 %v3665
    %4467 = vmatpush1.bf16.msra.mxu0 %v3664
    %4468 = vmatprep.subr.bf16.mxu0 %v3673
    %4469 = vmatpush1.bf16.msra.mxu0 %v3672
    %4470 = vmatprep.subr.bf16.mxu0 %v3681
    %4471 = vmatpush1.bf16.msra.mxu0 %v3680
    %4472 = vmatprep.subr.bf16.mxu0 %v3689
    %4473 = vmatpush1.bf16.msra.mxu0 %v3688
    %4474 = vmatprep.subr.bf16.mxu0 %v3697
    %4475 = vmatpush1.bf16.msra.mxu0 %v3696
    %4476 = vmatprep.subr.bf16.mxu0 %v3705
    %4477 = vmatpush1.bf16.msra.mxu0 %v3704
    %4478 = vmatprep.subr.bf16.mxu0 %v3713
    %4479 = vmatpush1.bf16.msra.mxu0 %v3712
    %4480 = vmatprep.subr.bf16.mxu0 %v3721
    %4481 = vmatpush1.bf16.msra.mxu0 %v3720
    %4482 = vmatprep.mubr.bf16.mxu0 %v1251
    %4483 = vmatmul.mubr.bf16.gmra.mrb[0].mxu0 %v1250
    %v4484 = vpop.f32.mrb[0].mxu0
    %v4485 = vadd.f32 %v4444, %v4484
    %v4486 = vpop.f32.mrb[0].mxu0
    %v4487 = vadd.f32 %v4446, %v4486
    %v4488 = vpop.f32.mrb[0].mxu0
    %v4489 = vpop.f32.mrb[0].mxu0
    %4490 = vdwg.mxu0
    %4491 = vmatprep.subr.bf16.mxu0 %v3729
    %4492 = vmatpush1.bf16.msra.mxu0 %v3728
    %4493 = vmatprep.subr.bf16.mxu0 %v3737
    %4494 = vmatpush1.bf16.msra.mxu0 %v3736
    %4495 = vmatprep.subr.bf16.mxu0 %v3745
    %4496 = vmatpush1.bf16.msra.mxu0 %v3744
    %4497 = vmatprep.subr.bf16.mxu0 %v3753
    %4498 = vmatpush1.bf16.msra.mxu0 %v3752
    %4499 = vmatprep.subr.bf16.mxu0 %v3761
    %4500 = vmatpush1.bf16.msra.mxu0 %v3760
    %4501 = vmatprep.subr.bf16.mxu0 %v3769
    %4502 = vmatpush1.bf16.msra.mxu0 %v3768
    %4503 = vmatprep.subr.bf16.mxu0 %v3777
    %4504 = vmatpush1.bf16.msra.mxu0 %v3776
    %4505 = vmatprep.subr.bf16.mxu0 %v3785
    %4506 = vmatpush1.bf16.msra.mxu0 %v3784
    %4507 = vmatprep.subr.bf16.mxu0 %v3793
    %4508 = vmatpush1.bf16.msra.mxu0 %v3792
    %4509 = vmatprep.subr.bf16.mxu0 %v3801
    %4510 = vmatpush1.bf16.msra.mxu0 %v3800
    %4511 = vmatprep.subr.bf16.mxu0 %v3809
    %4512 = vmatpush1.bf16.msra.mxu0 %v3808
    %4513 = vmatprep.subr.bf16.mxu0 %v3817
    %4514 = vmatpush1.bf16.msra.mxu0 %v3816
    %4515 = vmatprep.subr.bf16.mxu0 %v3825
    %4516 = vmatpush1.bf16.msra.mxu0 %v3824
    %4517 = vmatprep.subr.bf16.mxu0 %v3833
    %4518 = vmatpush1.bf16.msra.mxu0 %v3832
    %4519 = vmatprep.subr.bf16.mxu0 %v3841
    %4520 = vmatpush1.bf16.msra.mxu0 %v3840
    %4521 = vmatprep.subr.bf16.mxu0 %v3849
    %4522 = vmatpush1.bf16.msra.mxu0 %v3848
    %4523 = vmatprep.mubr.bf16.mxu0 %v1253
    %4524 = vmatmul.mubr.bf16.gmra.mrb[0].mxu0 %v1252
    %v4525 = vpop.f32.mrb[0].mxu0
    %v4526 = vadd.f32 %v4485, %v4525
    %v4527 = vpop.f32.mrb[0].mxu0
    %v4528 = vadd.f32 %v4487, %v4527
    %v4529 = vpop.f32.mrb[0].mxu0
    %v4530 = vpop.f32.mrb[0].mxu0
    %4531 = vdwg.mxu0
    %4532 = vmatprep.subr.bf16.mxu0 %v3347
    %4533 = vmatpush1.bf16.msra.mxu0 %v3346
    %4534 = vmatprep.subr.bf16.mxu0 %v3355
    %4535 = vmatpush1.bf16.msra.mxu0 %v3354
    %4536 = vmatprep.subr.bf16.mxu0 %v3363
    %4537 = vmatpush1.bf16.msra.mxu0 %v3362
    %4538 = vmatprep.subr.bf16.mxu0 %v3371
    %4539 = vmatpush1.bf16.msra.mxu0 %v3370
    %4540 = vmatprep.subr.bf16.mxu0 %v3379
    %4541 = vmatpush1.bf16.msra.mxu0 %v3378
    %4542 = vmatprep.subr.bf16.mxu0 %v3387
    %4543 = vmatpush1.bf16.msra.mxu0 %v3386
    %4544 = vmatprep.subr.bf16.mxu0 %v3395
    %4545 = vmatpush1.bf16.msra.mxu0 %v3394
    %4546 = vmatprep.subr.bf16.mxu0 %v3403
    %4547 = vmatpush1.bf16.msra.mxu0 %v3402
    %4548 = vmatprep.subr.bf16.mxu0 %v3411
    %4549 = vmatpush1.bf16.msra.mxu0 %v3410
    %4550 = vmatprep.subr.bf16.mxu0 %v3419
    %4551 = vmatpush1.bf16.msra.mxu0 %v3418
    %4552 = vmatprep.subr.bf16.mxu0 %v3427
    %4553 = vmatpush1.bf16.msra.mxu0 %v3426
    %4554 = vmatprep.subr.bf16.mxu0 %v3435
    %4555 = vmatpush1.bf16.msra.mxu0 %v3434
    %4556 = vmatprep.subr.bf16.mxu0 %v3443
    %4557 = vmatpush1.bf16.msra.mxu0 %v3442
    %4558 = vmatprep.subr.bf16.mxu0 %v3451
    %4559 = vmatpush1.bf16.msra.mxu0 %v3450
    %4560 = vmatprep.subr.bf16.mxu0 %v3459
    %4561 = vmatpush1.bf16.msra.mxu0 %v3458
    %4562 = vmatprep.subr.bf16.mxu0 %v3467
    %4563 = vmatpush1.bf16.msra.mxu0 %v3466
    %4564 = vmatprep.mubr.bf16.mxu0 %v1247
    %4565 = vmatmul.mubr.bf16.gmra.mrb[0].mxu0 %v1246
    %v4566 = vpop.f32.mrb[0].mxu0
    %v4567 = vadd.f32 %v1779, %v4566
    %v4568 = vpop.f32.mrb[0].mxu0
    %v4569 = vadd.f32 %v1783, %v4568
    %v4570 = vpop.f32.mrb[0].mxu0
    %v4571 = vpop.f32.mrb[0].mxu0
    %4572 = vdwg.mxu0
    %4573 = vmatprep.subr.bf16.mxu0 %v3475
    %4574 = vmatpush1.bf16.msra.mxu0 %v3474
    %4575 = vmatprep.subr.bf16.mxu0 %v3483
    %4576 = vmatpush1.bf16.msra.mxu0 %v3482
    %4577 = vmatprep.subr.bf16.mxu0 %v3491
    %4578 = vmatpush1.bf16.msra.mxu0 %v3490
    %4579 = vmatprep.subr.bf16.mxu0 %v3499
    %4580 = vmatpush1.bf16.msra.mxu0 %v3498
    %4581 = vmatprep.subr.bf16.mxu0 %v3507
    %4582 = vmatpush1.bf16.msra.mxu0 %v3506
    %4583 = vmatprep.subr.bf16.mxu0 %v3515
    %4584 = vmatpush1.bf16.msra.mxu0 %v3514
    %4585 = vmatprep.subr.bf16.mxu0 %v3523
    %4586 = vmatpush1.bf16.msra.mxu0 %v3522
    %4587 = vmatprep.subr.bf16.mxu0 %v3531
    %4588 = vmatpush1.bf16.msra.mxu0 %v3530
    %4589 = vmatprep.subr.bf16.mxu0 %v3539
    %4590 = vmatpush1.bf16.msra.mxu0 %v3538
    %4591 = vmatprep.subr.bf16.mxu0 %v3547
    %4592 = vmatpush1.bf16.msra.mxu0 %v3546
    %4593 = vmatprep.subr.bf16.mxu0 %v3555
    %4594 = vmatpush1.bf16.msra.mxu0 %v3554
    %4595 = vmatprep.subr.bf16.mxu0 %v3563
    %4596 = vmatpush1.bf16.msra.mxu0 %v3562
    %4597 = vmatprep.subr.bf16.mxu0 %v3571
    %4598 = vmatpush1.bf16.msra.mxu0 %v3570
    %4599 = vmatprep.subr.bf16.mxu0 %v3579
    %4600 = vmatpush1.bf16.msra.mxu0 %v3578
    %4601 = vmatprep.subr.bf16.mxu0 %v3587
    %4602 = vmatpush1.bf16.msra.mxu0 %v3586
    %4603 = vmatprep.subr.bf16.mxu0 %v3595
    %4604 = vmatpush1.bf16.msra.mxu0 %v3594
    %4605 = vmatprep.mubr.bf16.mxu0 %v1249
    %4606 = vmatmul.mubr.bf16.gmra.mrb[0].mxu0 %v1248
    %v4607 = vpop.f32.mrb[0].mxu0
    %v4608 = vadd.f32 %v4567, %v4607
    %v4609 = vpop.f32.mrb[0].mxu0
    %v4610 = vadd.f32 %v4569, %v4609
    %v4611 = vpop.f32.mrb[0].mxu0
    %v4612 = vpop.f32.mrb[0].mxu0
    %4613 = vdwg.mxu0
    %4614 = vmatprep.subr.bf16.mxu0 %v3603
    %4615 = vmatpush1.bf16.msra.mxu0 %v3602
    %4616 = vmatprep.subr.bf16.mxu0 %v3611
    %4617 = vmatpush1.bf16.msra.mxu0 %v3610
    %4618 = vmatprep.subr.bf16.mxu0 %v3619
    %4619 = vmatpush1.bf16.msra.mxu0 %v3618
    %4620 = vmatprep.subr.bf16.mxu0 %v3627
    %4621 = vmatpush1.bf16.msra.mxu0 %v3626
    %4622 = vmatprep.subr.bf16.mxu0 %v3635
    %4623 = vmatpush1.bf16.msra.mxu0 %v3634
    %4624 = vmatprep.subr.bf16.mxu0 %v3643
    %4625 = vmatpush1.bf16.msra.mxu0 %v3642
    %4626 = vmatprep.subr.bf16.mxu0 %v3651
    %4627 = vmatpush1.bf16.msra.mxu0 %v3650
    %4628 = vmatprep.subr.bf16.mxu0 %v3659
    %4629 = vmatpush1.bf16.msra.mxu0 %v3658
    %4630 = vmatprep.subr.bf16.mxu0 %v3667
    %4631 = vmatpush1.bf16.msra.mxu0 %v3666
    %4632 = vmatprep.subr.bf16.mxu0 %v3675
    %4633 = vmatpush1.bf16.msra.mxu0 %v3674
    %4634 = vmatprep.subr.bf16.mxu0 %v3683
    %4635 = vmatpush1.bf16.msra.mxu0 %v3682
    %4636 = vmatprep.subr.bf16.mxu0 %v3691
    %4637 = vmatpush1.bf16.msra.mxu0 %v3690
    %4638 = vmatprep.subr.bf16.mxu0 %v3699
    %4639 = vmatpush1.bf16.msra.mxu0 %v3698
    %4640 = vmatprep.subr.bf16.mxu0 %v3707
    %4641 = vmatpush1.bf16.msra.mxu0 %v3706
    %4642 = vmatprep.subr.bf16.mxu0 %v3715
    %4643 = vmatpush1.bf16.msra.mxu0 %v3714
    %4644 = vmatprep.subr.bf16.mxu0 %v3723
    %4645 = vmatpush1.bf16.msra.mxu0 %v3722
    %4646 = vmatprep.mubr.bf16.mxu0 %v1251
    %4647 = vmatmul.mubr.bf16.gmra.mrb[0].mxu0 %v1250
    %v4648 = vpop.f32.mrb[0].mxu0
    %v4649 = vadd.f32 %v4608, %v4648
    %v4650 = vpop.f32.mrb[0].mxu0
    %v4651 = vadd.f32 %v4610, %v4650
    %v4652 = vpop.f32.mrb[0].mxu0
    %v4653 = vpop.f32.mrb[0].mxu0
    %4654 = vdwg.mxu0
    %4655 = vmatprep.subr.bf16.mxu0 %v3731
    %4656 = vmatpush1.bf16.msra.mxu0 %v3730
    %4657 = vmatprep.subr.bf16.mxu0 %v3739
    %4658 = vmatpush1.bf16.msra.mxu0 %v3738
    %4659 = vmatprep.subr.bf16.mxu0 %v3747
    %4660 = vmatpush1.bf16.msra.mxu0 %v3746
    %4661 = vmatprep.subr.bf16.mxu0 %v3755
    %4662 = vmatpush1.bf16.msra.mxu0 %v3754
    %4663 = vmatprep.subr.bf16.mxu0 %v3763
    %4664 = vmatpush1.bf16.msra.mxu0 %v3762
    %4665 = vmatprep.subr.bf16.mxu0 %v3771
    %4666 = vmatpush1.bf16.msra.mxu0 %v3770
    %4667 = vmatprep.subr.bf16.mxu0 %v3779
    %4668 = vmatpush1.bf16.msra.mxu0 %v3778
    %4669 = vmatprep.subr.bf16.mxu0 %v3787
    %4670 = vmatpush1.bf16.msra.mxu0 %v3786
    %4671 = vmatprep.subr.bf16.mxu0 %v3795
    %4672 = vmatpush1.bf16.msra.mxu0 %v3794
    %4673 = vmatprep.subr.bf16.mxu0 %v3803
    %4674 = vmatpush1.bf16.msra.mxu0 %v3802
    %4675 = vmatprep.subr.bf16.mxu0 %v3811
    %4676 = vmatpush1.bf16.msra.mxu0 %v3810
    %4677 = vmatprep.subr.bf16.mxu0 %v3819
    %4678 = vmatpush1.bf16.msra.mxu0 %v3818
    %4679 = vmatprep.subr.bf16.mxu0 %v3827
    %4680 = vmatpush1.bf16.msra.mxu0 %v3826
    %4681 = vmatprep.subr.bf16.mxu0 %v3835
    %4682 = vmatpush1.bf16.msra.mxu0 %v3834
    %4683 = vmatprep.subr.bf16.mxu0 %v3843
    %4684 = vmatpush1.bf16.msra.mxu0 %v3842
    %4685 = vmatprep.subr.bf16.mxu0 %v3851
    %4686 = vmatpush1.bf16.msra.mxu0 %v3850
    %4687 = vmatprep.mubr.bf16.mxu0 %v1253
    %4688 = vmatmul.mubr.bf16.gmra.mrb[0].mxu0 %v1252
    %v4689 = vpop.f32.mrb[0].mxu0
    %v4690 = vadd.f32 %v4649, %v4689
    %v4691 = vpop.f32.mrb[0].mxu0
    %v4692 = vadd.f32 %v4651, %v4691
    %v4693 = vpop.f32.mrb[0].mxu0
    %v4694 = vpop.f32.mrb[0].mxu0
    %4695 = vdwg.mxu0
    %4696 = vmatprep.subr.bf16.mxu0 %v3349
    %4697 = vmatpush1.bf16.msra.mxu0 %v3348
    %4698 = vmatprep.subr.bf16.mxu0 %v3357
    %4699 = vmatpush1.bf16.msra.mxu0 %v3356
    %4700 = vmatprep.subr.bf16.mxu0 %v3365
    %4701 = vmatpush1.bf16.msra.mxu0 %v3364
    %4702 = vmatprep.subr.bf16.mxu0 %v3373
    %4703 = vmatpush1.bf16.msra.mxu0 %v3372
    %4704 = vmatprep.subr.bf16.mxu0 %v3381
    %4705 = vmatpush1.bf16.msra.mxu0 %v3380
    %4706 = vmatprep.subr.bf16.mxu0 %v3389
    %4707 = vmatpush1.bf16.msra.mxu0 %v3388
    %4708 = vmatprep.subr.bf16.mxu0 %v3397
    %4709 = vmatpush1.bf16.msra.mxu0 %v3396
    %4710 = vmatprep.subr.bf16.mxu0 %v3405
    %4711 = vmatpush1.bf16.msra.mxu0 %v3404
    %4712 = vmatprep.subr.bf16.mxu0 %v3413
    %4713 = vmatpush1.bf16.msra.mxu0 %v3412
    %4714 = vmatprep.subr.bf16.mxu0 %v3421
    %4715 = vmatpush1.bf16.msra.mxu0 %v3420
    %4716 = vmatprep.subr.bf16.mxu0 %v3429
    %4717 = vmatpush1.bf16.msra.mxu0 %v3428
    %4718 = vmatprep.subr.bf16.mxu0 %v3437
    %4719 = vmatpush1.bf16.msra.mxu0 %v3436
    %4720 = vmatprep.subr.bf16.mxu0 %v3445
    %4721 = vmatpush1.bf16.msra.mxu0 %v3444
    %4722 = vmatprep.subr.bf16.mxu0 %v3453
    %4723 = vmatpush1.bf16.msra.mxu0 %v3452
    %4724 = vmatprep.subr.bf16.mxu0 %v3461
    %4725 = vmatpush1.bf16.msra.mxu0 %v3460
    %4726 = vmatprep.subr.bf16.mxu0 %v3469
    %4727 = vmatpush1.bf16.msra.mxu0 %v3468
    %4728 = vmatprep.mubr.bf16.mxu0 %v1247
    %4729 = vmatmul.mubr.bf16.gmra.mrb[0].mxu0 %v1246
    %v4730 = vpop.f32.mrb[0].mxu0
    %v4731 = vadd.f32 %v1787, %v4730
    %v4732 = vpop.f32.mrb[0].mxu0
    %v4733 = vadd.f32 %v1791, %v4732
    %v4734 = vpop.f32.mrb[0].mxu0
    %v4735 = vpop.f32.mrb[0].mxu0
    %4736 = vdwg.mxu0
    %4737 = vmatprep.subr.bf16.mxu0 %v3477
    %4738 = vmatpush1.bf16.msra.mxu0 %v3476
    %4739 = vmatprep.subr.bf16.mxu0 %v3485
    %4740 = vmatpush1.bf16.msra.mxu0 %v3484
    %4741 = vmatprep.subr.bf16.mxu0 %v3493
    %4742 = vmatpush1.bf16.msra.mxu0 %v3492
    %4743 = vmatprep.subr.bf16.mxu0 %v3501
    %4744 = vmatpush1.bf16.msra.mxu0 %v3500
    %4745 = vmatprep.subr.bf16.mxu0 %v3509
    %4746 = vmatpush1.bf16.msra.mxu0 %v3508
    %4747 = vmatprep.subr.bf16.mxu0 %v3517
    %4748 = vmatpush1.bf16.msra.mxu0 %v3516
    %4749 = vmatprep.subr.bf16.mxu0 %v3525
    %4750 = vmatpush1.bf16.msra.mxu0 %v3524
    %4751 = vmatprep.subr.bf16.mxu0 %v3533
    %4752 = vmatpush1.bf16.msra.mxu0 %v3532
    %4753 = vmatprep.subr.bf16.mxu0 %v3541
    %4754 = vmatpush1.bf16.msra.mxu0 %v3540
    %4755 = vmatprep.subr.bf16.mxu0 %v3549
    %4756 = vmatpush1.bf16.msra.mxu0 %v3548
    %4757 = vmatprep.subr.bf16.mxu0 %v3557
    %4758 = vmatpush1.bf16.msra.mxu0 %v3556
    %4759 = vmatprep.subr.bf16.mxu0 %v3565
    %4760 = vmatpush1.bf16.msra.mxu0 %v3564
    %4761 = vmatprep.subr.bf16.mxu0 %v3573
    %4762 = vmatpush1.bf16.msra.mxu0 %v3572
    %4763 = vmatprep.subr.bf16.mxu0 %v3581
    %4764 = vmatpush1.bf16.msra.mxu0 %v3580
    %4765 = vmatprep.subr.bf16.mxu0 %v3589
    %4766 = vmatpush1.bf16.msra.mxu0 %v3588
    %4767 = vmatprep.subr.bf16.mxu0 %v3597
    %4768 = vmatpush1.bf16.msra.mxu0 %v3596
    %4769 = vmatprep.mubr.bf16.mxu0 %v1249
    %4770 = vmatmul.mubr.bf16.gmra.mrb[0].mxu0 %v1248
    %v4771 = vpop.f32.mrb[0].mxu0
    %v4772 = vadd.f32 %v4731, %v4771
    %v4773 = vpop.f32.mrb[0].mxu0
    %v4774 = vadd.f32 %v4733, %v4773
    %v4775 = vpop.f32.mrb[0].mxu0
    %v4776 = vpop.f32.mrb[0].mxu0
    %4777 = vdwg.mxu0
    %4778 = vmatprep.subr.bf16.mxu0 %v3605
    %4779 = vmatpush1.bf16.msra.mxu0 %v3604
    %4780 = vmatprep.subr.bf16.mxu0 %v3613
    %4781 = vmatpush1.bf16.msra.mxu0 %v3612
    %4782 = vmatprep.subr.bf16.mxu0 %v3621
    %4783 = vmatpush1.bf16.msra.mxu0 %v3620
    %4784 = vmatprep.subr.bf16.mxu0 %v3629
    %4785 = vmatpush1.bf16.msra.mxu0 %v3628
    %4786 = vmatprep.subr.bf16.mxu0 %v3637
    %4787 = vmatpush1.bf16.msra.mxu0 %v3636
    %4788 = vmatprep.subr.bf16.mxu0 %v3645
    %4789 = vmatpush1.bf16.msra.mxu0 %v3644
    %4790 = vmatprep.subr.bf16.mxu0 %v3653
    %4791 = vmatpush1.bf16.msra.mxu0 %v3652
    %4792 = vmatprep.subr.bf16.mxu0 %v3661
    %4793 = vmatpush1.bf16.msra.mxu0 %v3660
    %4794 = vmatprep.subr.bf16.mxu0 %v3669
    %4795 = vmatpush1.bf16.msra.mxu0 %v3668
    %4796 = vmatprep.subr.bf16.mxu0 %v3677
    %4797 = vmatpush1.bf16.msra.mxu0 %v3676
    %4798 = vmatprep.subr.bf16.mxu0 %v3685
    %4799 = vmatpush1.bf16.msra.mxu0 %v3684
    %4800 = vmatprep.subr.bf16.mxu0 %v3693
    %4801 = vmatpush1.bf16.msra.mxu0 %v3692
    %4802 = vmatprep.subr.bf16.mxu0 %v3701
    %4803 = vmatpush1.bf16.msra.mxu0 %v3700
    %4804 = vmatprep.subr.bf16.mxu0 %v3709
    %4805 = vmatpush1.bf16.msra.mxu0 %v3708
    %4806 = vmatprep.subr.bf16.mxu0 %v3717
    %4807 = vmatpush1.bf16.msra.mxu0 %v3716
    %4808 = vmatprep.subr.bf16.mxu0 %v3725
    %4809 = vmatpush1.bf16.msra.mxu0 %v3724
    %4810 = vmatprep.mubr.bf16.mxu0 %v1251
    %4811 = vmatmul.mubr.bf16.gmra.mrb[0].mxu0 %v1250
    %v4812 = vpop.f32.mrb[0].mxu0
    %v4813 = vadd.f32 %v4772, %v4812
    %v4814 = vpop.f32.mrb[0].mxu0
    %v4815 = vadd.f32 %v4774, %v4814
    %v4816 = vpop.f32.mrb[0].mxu0
    %v4817 = vpop.f32.mrb[0].mxu0
    %4818 = vdwg.mxu0
    %4819 = vmatprep.subr.bf16.mxu0 %v3733
    %4820 = vmatpush1.bf16.msra.mxu0 %v3732
    %4821 = vmatprep.subr.bf16.mxu0 %v3741
    %4822 = vmatpush1.bf16.msra.mxu0 %v3740
    %4823 = vmatprep.subr.bf16.mxu0 %v3749
    %4824 = vmatpush1.bf16.msra.mxu0 %v3748
    %4825 = vmatprep.subr.bf16.mxu0 %v3757
    %4826 = vmatpush1.bf16.msra.mxu0 %v3756
    %4827 = vmatprep.subr.bf16.mxu0 %v3765
    %4828 = vmatpush1.bf16.msra.mxu0 %v3764
    %4829 = vmatprep.subr.bf16.mxu0 %v3773
    %4830 = vmatpush1.bf16.msra.mxu0 %v3772
    %4831 = vmatprep.subr.bf16.mxu0 %v3781
    %4832 = vmatpush1.bf16.msra.mxu0 %v3780
    %4833 = vmatprep.subr.bf16.mxu0 %v3789
    %4834 = vmatpush1.bf16.msra.mxu0 %v3788
    %4835 = vmatprep.subr.bf16.mxu0 %v3797
    %4836 = vmatpush1.bf16.msra.mxu0 %v3796
    %4837 = vmatprep.subr.bf16.mxu0 %v3805
    %4838 = vmatpush1.bf16.msra.mxu0 %v3804
    %4839 = vmatprep.subr.bf16.mxu0 %v3813
    %4840 = vmatpush1.bf16.msra.mxu0 %v3812
    %4841 = vmatprep.subr.bf16.mxu0 %v3821
    %4842 = vmatpush1.bf16.msra.mxu0 %v3820
    %4843 = vmatprep.subr.bf16.mxu0 %v3829
    %4844 = vmatpush1.bf16.msra.mxu0 %v3828
    %4845 = vmatprep.subr.bf16.mxu0 %v3837
    %4846 = vmatpush1.bf16.msra.mxu0 %v3836
    %4847 = vmatprep.subr.bf16.mxu0 %v3845
    %4848 = vmatpush1.bf16.msra.mxu0 %v3844
    %4849 = vmatprep.subr.bf16.mxu0 %v3853
    %4850 = vmatpush1.bf16.msra.mxu0 %v3852
    %4851 = vmatprep.mubr.bf16.mxu0 %v1253
    %4852 = vmatmul.mubr.bf16.gmra.mrb[0].mxu0 %v1252
    %v4853 = vpop.f32.mrb[0].mxu0
    %v4854 = vadd.f32 %v4813, %v4853
    %v4855 = vpop.f32.mrb[0].mxu0
    %v4856 = vadd.f32 %v4815, %v4855
    %v4857 = vpop.f32.mrb[0].mxu0
    %v4858 = vpop.f32.mrb[0].mxu0
    %4859 = vdwg.mxu0
    %4860 = vmatprep.subr.bf16.mxu0 %v3351
    %4861 = vmatpush1.bf16.msra.mxu0 %v3350
    %4862 = vmatprep.subr.bf16.mxu0 %v3359
    %4863 = vmatpush1.bf16.msra.mxu0 %v3358
    %4864 = vmatprep.subr.bf16.mxu0 %v3367
    %4865 = vmatpush1.bf16.msra.mxu0 %v3366
    %4866 = vmatprep.subr.bf16.mxu0 %v3375
    %4867 = vmatpush1.bf16.msra.mxu0 %v3374
    %4868 = vmatprep.subr.bf16.mxu0 %v3383
    %4869 = vmatpush1.bf16.msra.mxu0 %v3382
    %4870 = vmatprep.subr.bf16.mxu0 %v3391
    %4871 = vmatpush1.bf16.msra.mxu0 %v3390
    %4872 = vmatprep.subr.bf16.mxu0 %v3399
    %4873 = vmatpush1.bf16.msra.mxu0 %v3398
    %4874 = vmatprep.subr.bf16.mxu0 %v3407
    %4875 = vmatpush1.bf16.msra.mxu0 %v3406
    %4876 = vmatprep.subr.bf16.mxu0 %v3415
    %4877 = vmatpush1.bf16.msra.mxu0 %v3414
    %4878 = vmatprep.subr.bf16.mxu0 %v3423
    %4879 = vmatpush1.bf16.msra.mxu0 %v3422
    %4880 = vmatprep.subr.bf16.mxu0 %v3431
    %4881 = vmatpush1.bf16.msra.mxu0 %v3430
    %4882 = vmatprep.subr.bf16.mxu0 %v3439
    %4883 = vmatpush1.bf16.msra.mxu0 %v3438
    %4884 = vmatprep.subr.bf16.mxu0 %v3447
    %4885 = vmatpush1.bf16.msra.mxu0 %v3446
    %4886 = vmatprep.subr.bf16.mxu0 %v3455
    %4887 = vmatpush1.bf16.msra.mxu0 %v3454
    %4888 = vmatprep.subr.bf16.mxu0 %v3463
    %4889 = vmatpush1.bf16.msra.mxu0 %v3462
    %4890 = vmatprep.subr.bf16.mxu0 %v3471
    %4891 = vmatpush1.bf16.msra.mxu0 %v3470
    %4892 = vmatprep.mubr.bf16.mxu0 %v1247
    %4893 = vmatmul.mubr.bf16.gmra.mrb[0].mxu0 %v1246
    %v4894 = vpop.f32.mrb[0].mxu0
    %v4895 = vadd.f32 %v1795, %v4894
    %v4896 = vpop.f32.mrb[0].mxu0
    %v4897 = vadd.f32 %v1799, %v4896
    %v4898 = vpop.f32.mrb[0].mxu0
    %v4899 = vpop.f32.mrb[0].mxu0
    %4900 = vdwg.mxu0
    %4901 = vmatprep.subr.bf16.mxu0 %v3479
    %4902 = vmatpush1.bf16.msra.mxu0 %v3478
    %4903 = vmatprep.subr.bf16.mxu0 %v3487
    %4904 = vmatpush1.bf16.msra.mxu0 %v3486
    %4905 = vmatprep.subr.bf16.mxu0 %v3495
    %4906 = vmatpush1.bf16.msra.mxu0 %v3494
    %4907 = vmatprep.subr.bf16.mxu0 %v3503
    %4908 = vmatpush1.bf16.msra.mxu0 %v3502
    %4909 = vmatprep.subr.bf16.mxu0 %v3511
    %4910 = vmatpush1.bf16.msra.mxu0 %v3510
    %4911 = vmatprep.subr.bf16.mxu0 %v3519
    %4912 = vmatpush1.bf16.msra.mxu0 %v3518
    %4913 = vmatprep.subr.bf16.mxu0 %v3527
    %4914 = vmatpush1.bf16.msra.mxu0 %v3526
    %4915 = vmatprep.subr.bf16.mxu0 %v3535
    %4916 = vmatpush1.bf16.msra.mxu0 %v3534
    %4917 = vmatprep.subr.bf16.mxu0 %v3543
    %4918 = vmatpush1.bf16.msra.mxu0 %v3542
    %4919 = vmatprep.subr.bf16.mxu0 %v3551
    %4920 = vmatpush1.bf16.msra.mxu0 %v3550
    %4921 = vmatprep.subr.bf16.mxu0 %v3559
    %4922 = vmatpush1.bf16.msra.mxu0 %v3558
    %4923 = vmatprep.subr.bf16.mxu0 %v3567
    %4924 = vmatpush1.bf16.msra.mxu0 %v3566
    %4925 = vmatprep.subr.bf16.mxu0 %v3575
    %4926 = vmatpush1.bf16.msra.mxu0 %v3574
    %4927 = vmatprep.subr.bf16.mxu0 %v3583
    %4928 = vmatpush1.bf16.msra.mxu0 %v3582
    %4929 = vmatprep.subr.bf16.mxu0 %v3591
    %4930 = vmatpush1.bf16.msra.mxu0 %v3590
    %4931 = vmatprep.subr.bf16.mxu0 %v3599
    %4932 = vmatpush1.bf16.msra.mxu0 %v3598
    %4933 = vmatprep.mubr.bf16.mxu0 %v1249
    %4934 = vmatmul.mubr.bf16.gmra.mrb[0].mxu0 %v1248
    %v4935 = vpop.f32.mrb[0].mxu0
    %v4936 = vadd.f32 %v4895, %v4935
    %v4937 = vpop.f32.mrb[0].mxu0
    %v4938 = vadd.f32 %v4897, %v4937
    %v4939 = vpop.f32.mrb[0].mxu0
    %v4940 = vpop.f32.mrb[0].mxu0
    %4941 = vdwg.mxu0
    %4942 = vmatprep.subr.bf16.mxu0 %v3607
    %4943 = vmatpush1.bf16.msra.mxu0 %v3606
    %4944 = vmatprep.subr.bf16.mxu0 %v3615
    %4945 = vmatpush1.bf16.msra.mxu0 %v3614
    %4946 = vmatprep.subr.bf16.mxu0 %v3623
    %4947 = vmatpush1.bf16.msra.mxu0 %v3622
    %4948 = vmatprep.subr.bf16.mxu0 %v3631
    %4949 = vmatpush1.bf16.msra.mxu0 %v3630
    %4950 = vmatprep.subr.bf16.mxu0 %v3639
    %4951 = vmatpush1.bf16.msra.mxu0 %v3638
    %4952 = vmatprep.subr.bf16.mxu0 %v3647
    %4953 = vmatpush1.bf16.msra.mxu0 %v3646
    %4954 = vmatprep.subr.bf16.mxu0 %v3655
    %4955 = vmatpush1.bf16.msra.mxu0 %v3654
    %4956 = vmatprep.subr.bf16.mxu0 %v3663
    %4957 = vmatpush1.bf16.msra.mxu0 %v3662
    %4958 = vmatprep.subr.bf16.mxu0 %v3671
    %4959 = vmatpush1.bf16.msra.mxu0 %v3670
    %4960 = vmatprep.subr.bf16.mxu0 %v3679
    %4961 = vmatpush1.bf16.msra.mxu0 %v3678
    %4962 = vmatprep.subr.bf16.mxu0 %v3687
    %4963 = vmatpush1.bf16.msra.mxu0 %v3686
    %4964 = vmatprep.subr.bf16.mxu0 %v3695
    %4965 = vmatpush1.bf16.msra.mxu0 %v3694
    %4966 = vmatprep.subr.bf16.mxu0 %v3703
    %4967 = vmatpush1.bf16.msra.mxu0 %v3702
    %4968 = vmatprep.subr.bf16.mxu0 %v3711
    %4969 = vmatpush1.bf16.msra.mxu0 %v3710
    %4970 = vmatprep.subr.bf16.mxu0 %v3719
    %4971 = vmatpush1.bf16.msra.mxu0 %v3718
    %4972 = vmatprep.subr.bf16.mxu0 %v3727
    %4973 = vmatpush1.bf16.msra.mxu0 %v3726
    %4974 = vmatprep.mubr.bf16.mxu0 %v1251
    %4975 = vmatmul.mubr.bf16.gmra.mrb[0].mxu0 %v1250
    %v4976 = vpop.f32.mrb[0].mxu0
    %v4977 = vadd.f32 %v4936, %v4976
    %v4978 = vpop.f32.mrb[0].mxu0
    %v4979 = vadd.f32 %v4938, %v4978
    %v4980 = vpop.f32.mrb[0].mxu0
    %v4981 = vpop.f32.mrb[0].mxu0
    %4982 = vdwg.mxu0
    %4983 = vmatprep.subr.bf16.mxu0 %v3735
    %4984 = vmatpush1.bf16.msra.mxu0 %v3734
    %4985 = vmatprep.subr.bf16.mxu0 %v3743
    %4986 = vmatpush1.bf16.msra.mxu0 %v3742
    %4987 = vmatprep.subr.bf16.mxu0 %v3751
    %4988 = vmatpush1.bf16.msra.mxu0 %v3750
    %4989 = vmatprep.subr.bf16.mxu0 %v3759
    %4990 = vmatpush1.bf16.msra.mxu0 %v3758
    %4991 = vmatprep.subr.bf16.mxu0 %v3767
    %4992 = vmatpush1.bf16.msra.mxu0 %v3766
    %4993 = vmatprep.subr.bf16.mxu0 %v3775
    %4994 = vmatpush1.bf16.msra.mxu0 %v3774
    %4995 = vmatprep.subr.bf16.mxu0 %v3783
    %4996 = vmatpush1.bf16.msra.mxu0 %v3782
    %4997 = vmatprep.subr.bf16.mxu0 %v3791
    %4998 = vmatpush1.bf16.msra.mxu0 %v3790
    %4999 = vmatprep.subr.bf16.mxu0 %v3799
    %5000 = vmatpush1.bf16.msra.mxu0 %v3798
    %5001 = vmatprep.subr.bf16.mxu0 %v3807
    %5002 = vmatpush1.bf16.msra.mxu0 %v3806
    %5003 = vmatprep.subr.bf16.mxu0 %v3815
    %5004 = vmatpush1.bf16.msra.mxu0 %v3814
    %5005 = vmatprep.subr.bf16.mxu0 %v3823
    %5006 = vmatpush1.bf16.msra.mxu0 %v3822
    %5007 = vmatprep.subr.bf16.mxu0 %v3831
    %5008 = vmatpush1.bf16.msra.mxu0 %v3830
    %5009 = vmatprep.subr.bf16.mxu0 %v3839
    %5010 = vmatpush1.bf16.msra.mxu0 %v3838
    %5011 = vmatprep.subr.bf16.mxu0 %v3847
    %5012 = vmatpush1.bf16.msra.mxu0 %v3846
    %5013 = vmatprep.subr.bf16.mxu0 %v3855
    %5014 = vmatpush1.bf16.msra.mxu0 %v3854
    %5015 = vmatprep.mubr.bf16.mxu0 %v1253
    %5016 = vmatmul.mubr.bf16.gmra.mrb[0].mxu0 %v1252
    %v5017 = vpop.f32.mrb[0].mxu0
    %v5018 = vadd.f32 %v4977, %v5017
    %v5019 = vpop.f32.mrb[0].mxu0
    %v5020 = vadd.f32 %v4979, %v5019
    %v5021 = vpop.f32.mrb[0].mxu0
    %v5022 = vpop.f32.mrb[0].mxu0
    %5023 = vdwg.mxu0
    %v5024 = vmax.f32 %v4526, 0.0
    %v5025 = vmax.f32 %v4528, 0.0
    %v5026 = vmax.f32 %v4690, 0.0
    %v5027 = vmax.f32 %v4692, 0.0
    %v5028 = vmax.f32 %v4854, 0.0
    %v5029 = vmax.f32 %v4856, 0.0
    %v5030 = vmax.f32 %v5018, 0.0
    %v5031 = vmax.f32 %v5020, 0.0
    %v5032 = vpack.c.bf16 %v5024, %v5024
    %v5033 = vpack.c.bf16 %v5025, %v5025
    %v5034 = vpack.c.bf16 %v5026, %v5026
    %v5035 = vpack.c.bf16 %v5027, %v5027
    %v5036 = vpack.c.bf16 %v5028, %v5028
    %v5037 = vpack.c.bf16 %v5029, %v5029
    %v5038 = vpack.c.bf16 %v5030, %v5030
    %v5039 = vpack.c.bf16 %v5031, %v5031
    %v5040 = vld [vmem:[#allocation14] sm:$0xff]
    %v5041 = vld [vmem:[#allocation14 + $0x8] sm:$0xff]
    %v5042 = vld [vmem:[#allocation14 + $0x10] sm:$0xff]
    %v5043 = vld [vmem:[#allocation14 + $0x18] sm:$0xff]
    %v5044 = vld [vmem:[#allocation14 + $0x20] sm:$0xff]
    %v5045 = vld [vmem:[#allocation14 + $0x28] sm:$0xff]
    %v5046 = vld [vmem:[#allocation14 + $0x30] sm:$0xff]
    %v5047 = vld [vmem:[#allocation14 + $0x38] sm:$0xff]
    %v5048 = vld [vmem:[#allocation14 + $0x40] sm:$0xff]
    %v5049 = vld [vmem:[#allocation14 + $0x48] sm:$0xff]
    %v5050 = vld [vmem:[#allocation14 + $0x50] sm:$0xff]
    %v5051 = vld [vmem:[#allocation14 + $0x58] sm:$0xff]
    %v5052 = vld [vmem:[#allocation14 + $0x60] sm:$0xff]
    %v5053 = vld [vmem:[#allocation14 + $0x68] sm:$0xff]
    %v5054 = vld [vmem:[#allocation14 + $0x70] sm:$0xff]
    %v5055 = vld [vmem:[#allocation14 + $0x78] sm:$0xff]
    %v5056 = vld [vmem:[#allocation14 + $0x80] sm:$0xff]
    %v5057 = vld [vmem:[#allocation14 + $0x88] sm:$0xff]
    %v5058 = vld [vmem:[#allocation14 + $0x90] sm:$0xff]
    %v5059 = vld [vmem:[#allocation14 + $0x98] sm:$0xff]
    %v5060 = vld [vmem:[#allocation14 + $0xa0] sm:$0xff]
    %v5061 = vld [vmem:[#allocation14 + $0xa8] sm:$0xff]
    %v5062 = vld [vmem:[#allocation14 + $0xb0] sm:$0xff]
    %v5063 = vld [vmem:[#allocation14 + $0xb8] sm:$0xff]
    %v5064 = vld [vmem:[#allocation14 + $0xc0] sm:$0xff]
    %v5065 = vld [vmem:[#allocation14 + $0xc8] sm:$0xff]
    %v5066 = vld [vmem:[#allocation14 + $0xd0] sm:$0xff]
    %v5067 = vld [vmem:[#allocation14 + $0xd8] sm:$0xff]
    %v5068 = vld [vmem:[#allocation14 + $0xe0] sm:$0xff]
    %v5069 = vld [vmem:[#allocation14 + $0xe8] sm:$0xff]
    %v5070 = vld [vmem:[#allocation14 + $0xf0] sm:$0xff]
    %v5071 = vld [vmem:[#allocation14 + $0xf8] sm:$0xff]
    %v5072 = vld [vmem:[#allocation14 + $0x100] sm:$0xff]
    %v5073 = vld [vmem:[#allocation14 + $0x108] sm:$0xff]
    %v5074 = vld [vmem:[#allocation14 + $0x110] sm:$0xff]
    %v5075 = vld [vmem:[#allocation14 + $0x118] sm:$0xff]
    %v5076 = vld [vmem:[#allocation14 + $0x120] sm:$0xff]
    %v5077 = vld [vmem:[#allocation14 + $0x128] sm:$0xff]
    %v5078 = vld [vmem:[#allocation14 + $0x130] sm:$0xff]
    %v5079 = vld [vmem:[#allocation14 + $0x138] sm:$0xff]
    %v5080 = vld [vmem:[#allocation14 + $0x140] sm:$0xff]
    %v5081 = vld [vmem:[#allocation14 + $0x148] sm:$0xff]
    %v5082 = vld [vmem:[#allocation14 + $0x150] sm:$0xff]
    %v5083 = vld [vmem:[#allocation14 + $0x158] sm:$0xff]
    %v5084 = vld [vmem:[#allocation14 + $0x160] sm:$0xff]
    %v5085 = vld [vmem:[#allocation14 + $0x168] sm:$0xff]
    %v5086 = vld [vmem:[#allocation14 + $0x170] sm:$0xff]
    %v5087 = vld [vmem:[#allocation14 + $0x178] sm:$0xff]
    %v5088 = vld [vmem:[#allocation14 + $0x180] sm:$0xff]
    %v5089 = vld [vmem:[#allocation14 + $0x188] sm:$0xff]
    %v5090 = vld [vmem:[#allocation14 + $0x190] sm:$0xff]
    %v5091 = vld [vmem:[#allocation14 + $0x198] sm:$0xff]
    %v5092 = vld [vmem:[#allocation14 + $0x1a0] sm:$0xff]
    %v5093 = vld [vmem:[#allocation14 + $0x1a8] sm:$0xff]
    %v5094 = vld [vmem:[#allocation14 + $0x1b0] sm:$0xff]
    %v5095 = vld [vmem:[#allocation14 + $0x1b8] sm:$0xff]
    %v5096 = vld [vmem:[#allocation14 + $0x1c0] sm:$0xff]
    %v5097 = vld [vmem:[#allocation14 + $0x1c8] sm:$0xff]
    %v5098 = vld [vmem:[#allocation14 + $0x1d0] sm:$0xff]
    %v5099 = vld [vmem:[#allocation14 + $0x1d8] sm:$0xff]
    %v5100 = vld [vmem:[#allocation14 + $0x1e0] sm:$0xff]
    %v5101 = vld [vmem:[#allocation14 + $0x1e8] sm:$0xff]
    %v5102 = vld [vmem:[#allocation14 + $0x1f0] sm:$0xff]
    %v5103 = vld [vmem:[#allocation14 + $0x1f8] sm:$0xff]
    %v5104 = vld [vmem:[#allocation14 + $0x200] sm:$0xff]
    %v5105 = vld [vmem:[#allocation14 + $0x208] sm:$0xff]
    %v5106 = vld [vmem:[#allocation14 + $0x210] sm:$0xff]
    %v5107 = vld [vmem:[#allocation14 + $0x218] sm:$0xff]
    %v5108 = vld [vmem:[#allocation14 + $0x220] sm:$0xff]
    %v5109 = vld [vmem:[#allocation14 + $0x228] sm:$0xff]
    %v5110 = vld [vmem:[#allocation14 + $0x230] sm:$0xff]
    %v5111 = vld [vmem:[#allocation14 + $0x238] sm:$0xff]
    %v5112 = vld [vmem:[#allocation14 + $0x240] sm:$0xff]
    %v5113 = vld [vmem:[#allocation14 + $0x248] sm:$0xff]
    %v5114 = vld [vmem:[#allocation14 + $0x250] sm:$0xff]
    %v5115 = vld [vmem:[#allocation14 + $0x258] sm:$0xff]
    %v5116 = vld [vmem:[#allocation14 + $0x260] sm:$0xff]
    %v5117 = vld [vmem:[#allocation14 + $0x268] sm:$0xff]
    %v5118 = vld [vmem:[#allocation14 + $0x270] sm:$0xff]
    %v5119 = vld [vmem:[#allocation14 + $0x278] sm:$0xff]
    %v5120 = vld [vmem:[#allocation14 + $0x280] sm:$0xff]
    %v5121 = vld [vmem:[#allocation14 + $0x288] sm:$0xff]
    %v5122 = vld [vmem:[#allocation14 + $0x290] sm:$0xff]
    %v5123 = vld [vmem:[#allocation14 + $0x298] sm:$0xff]
    %v5124 = vld [vmem:[#allocation14 + $0x2a0] sm:$0xff]
    %v5125 = vld [vmem:[#allocation14 + $0x2a8] sm:$0xff]
    %v5126 = vld [vmem:[#allocation14 + $0x2b0] sm:$0xff]
    %v5127 = vld [vmem:[#allocation14 + $0x2b8] sm:$0xff]
    %v5128 = vld [vmem:[#allocation14 + $0x2c0] sm:$0xff]
    %v5129 = vld [vmem:[#allocation14 + $0x2c8] sm:$0xff]
    %v5130 = vld [vmem:[#allocation14 + $0x2d0] sm:$0xff]
    %v5131 = vld [vmem:[#allocation14 + $0x2d8] sm:$0xff]
    %v5132 = vld [vmem:[#allocation14 + $0x2e0] sm:$0xff]
    %v5133 = vld [vmem:[#allocation14 + $0x2e8] sm:$0xff]
    %v5134 = vld [vmem:[#allocation14 + $0x2f0] sm:$0xff]
    %v5135 = vld [vmem:[#allocation14 + $0x2f8] sm:$0xff]
    %v5136 = vld [vmem:[#allocation14 + $0x300] sm:$0xff]
    %v5137 = vld [vmem:[#allocation14 + $0x308] sm:$0xff]
    %v5138 = vld [vmem:[#allocation14 + $0x310] sm:$0xff]
    %v5139 = vld [vmem:[#allocation14 + $0x318] sm:$0xff]
    %v5140 = vld [vmem:[#allocation14 + $0x320] sm:$0xff]
    %v5141 = vld [vmem:[#allocation14 + $0x328] sm:$0xff]
    %v5142 = vld [vmem:[#allocation14 + $0x330] sm:$0xff]
    %v5143 = vld [vmem:[#allocation14 + $0x338] sm:$0xff]
    %v5144 = vld [vmem:[#allocation14 + $0x340] sm:$0xff]
    %v5145 = vld [vmem:[#allocation14 + $0x348] sm:$0xff]
    %v5146 = vld [vmem:[#allocation14 + $0x350] sm:$0xff]
    %v5147 = vld [vmem:[#allocation14 + $0x358] sm:$0xff]
    %v5148 = vld [vmem:[#allocation14 + $0x360] sm:$0xff]
    %v5149 = vld [vmem:[#allocation14 + $0x368] sm:$0xff]
    %v5150 = vld [vmem:[#allocation14 + $0x370] sm:$0xff]
    %v5151 = vld [vmem:[#allocation14 + $0x378] sm:$0xff]
    %v5152 = vld [vmem:[#allocation14 + $0x380] sm:$0xff]
    %v5153 = vld [vmem:[#allocation14 + $0x388] sm:$0xff]
    %v5154 = vld [vmem:[#allocation14 + $0x390] sm:$0xff]
    %v5155 = vld [vmem:[#allocation14 + $0x398] sm:$0xff]
    %v5156 = vld [vmem:[#allocation14 + $0x3a0] sm:$0xff]
    %v5157 = vld [vmem:[#allocation14 + $0x3a8] sm:$0xff]
    %v5158 = vld [vmem:[#allocation14 + $0x3b0] sm:$0xff]
    %v5159 = vld [vmem:[#allocation14 + $0x3b8] sm:$0xff]
    %v5160 = vld [vmem:[#allocation14 + $0x3c0] sm:$0xff]
    %v5161 = vld [vmem:[#allocation14 + $0x3c8] sm:$0xff]
    %v5162 = vld [vmem:[#allocation14 + $0x3d0] sm:$0xff]
    %v5163 = vld [vmem:[#allocation14 + $0x3d8] sm:$0xff]
    %v5164 = vld [vmem:[#allocation14 + $0x3e0] sm:$0xff]
    %v5165 = vld [vmem:[#allocation14 + $0x3e8] sm:$0xff]
    %v5166 = vld [vmem:[#allocation14 + $0x3f0] sm:$0xff]
    %v5167 = vld [vmem:[#allocation14 + $0x3f8] sm:$0xff]
    %v5168 = vld [vmem:[#allocation16] sm:$0x3]
    %v5170 = vlaneseq
    %v5171 = vshrl.u32 %v5170, 7
    %v5172 = vsub.s32 0, %v5171
    %v5173 = vrot.slane %v5168, %v5172
    %v5174 = vlaneseq
    %v5175 = vshrl.u32 %v5174, 7
    %v5176 = vsub.s32 1, %v5175
    %v5177 = vrot.slane %v5168, %v5176
    %v5308 = vunpack.c.l.b16 %v5040
    %v5309 = vunpack.c.h.b16 %v5040
    %v5310 = vunpack.c.l.b16 %v5041
    %v5311 = vunpack.c.h.b16 %v5041
    %v5312 = vunpack.c.l.b16 %v5042
    %v5313 = vunpack.c.h.b16 %v5042
    %v5314 = vunpack.c.l.b16 %v5043
    %v5315 = vunpack.c.h.b16 %v5043
    %v5316 = vunpack.c.l.b16 %v5044
    %v5317 = vunpack.c.h.b16 %v5044
    %v5318 = vunpack.c.l.b16 %v5045
    %v5319 = vunpack.c.h.b16 %v5045
    %v5320 = vunpack.c.l.b16 %v5046
    %v5321 = vunpack.c.h.b16 %v5046
    %v5322 = vunpack.c.l.b16 %v5047
    %v5323 = vunpack.c.h.b16 %v5047
    %v5324 = vunpack.c.l.b16 %v5048
    %v5325 = vunpack.c.h.b16 %v5048
    %v5326 = vunpack.c.l.b16 %v5049
    %v5327 = vunpack.c.h.b16 %v5049
    %v5328 = vunpack.c.l.b16 %v5050
    %v5329 = vunpack.c.h.b16 %v5050
    %v5330 = vunpack.c.l.b16 %v5051
    %v5331 = vunpack.c.h.b16 %v5051
    %v5332 = vunpack.c.l.b16 %v5052
    %v5333 = vunpack.c.h.b16 %v5052
    %v5334 = vunpack.c.l.b16 %v5053
    %v5335 = vunpack.c.h.b16 %v5053
    %v5336 = vunpack.c.l.b16 %v5054
    %v5337 = vunpack.c.h.b16 %v5054
    %v5338 = vunpack.c.l.b16 %v5055
    %v5339 = vunpack.c.h.b16 %v5055
    %v5340 = vunpack.c.l.b16 %v5056
    %v5341 = vunpack.c.h.b16 %v5056
    %v5342 = vunpack.c.l.b16 %v5057
    %v5343 = vunpack.c.h.b16 %v5057
    %v5344 = vunpack.c.l.b16 %v5058
    %v5345 = vunpack.c.h.b16 %v5058
    %v5346 = vunpack.c.l.b16 %v5059
    %v5347 = vunpack.c.h.b16 %v5059
    %v5348 = vunpack.c.l.b16 %v5060
    %v5349 = vunpack.c.h.b16 %v5060
    %v5350 = vunpack.c.l.b16 %v5061
    %v5351 = vunpack.c.h.b16 %v5061
    %v5352 = vunpack.c.l.b16 %v5062
    %v5353 = vunpack.c.h.b16 %v5062
    %v5354 = vunpack.c.l.b16 %v5063
    %v5355 = vunpack.c.h.b16 %v5063
    %v5356 = vunpack.c.l.b16 %v5064
    %v5357 = vunpack.c.h.b16 %v5064
    %v5358 = vunpack.c.l.b16 %v5065
    %v5359 = vunpack.c.h.b16 %v5065
    %v5360 = vunpack.c.l.b16 %v5066
    %v5361 = vunpack.c.h.b16 %v5066
    %v5362 = vunpack.c.l.b16 %v5067
    %v5363 = vunpack.c.h.b16 %v5067
    %v5364 = vunpack.c.l.b16 %v5068
    %v5365 = vunpack.c.h.b16 %v5068
    %v5366 = vunpack.c.l.b16 %v5069
    %v5367 = vunpack.c.h.b16 %v5069
    %v5368 = vunpack.c.l.b16 %v5070
    %v5369 = vunpack.c.h.b16 %v5070
    %v5370 = vunpack.c.l.b16 %v5071
    %v5371 = vunpack.c.h.b16 %v5071
    %v5372 = vunpack.c.l.b16 %v5072
    %v5373 = vunpack.c.h.b16 %v5072
    %v5374 = vunpack.c.l.b16 %v5073
    %v5375 = vunpack.c.h.b16 %v5073
    %v5376 = vunpack.c.l.b16 %v5074
    %v5377 = vunpack.c.h.b16 %v5074
    %v5378 = vunpack.c.l.b16 %v5075
    %v5379 = vunpack.c.h.b16 %v5075
    %v5380 = vunpack.c.l.b16 %v5076
    %v5381 = vunpack.c.h.b16 %v5076
    %v5382 = vunpack.c.l.b16 %v5077
    %v5383 = vunpack.c.h.b16 %v5077
    %v5384 = vunpack.c.l.b16 %v5078
    %v5385 = vunpack.c.h.b16 %v5078
    %v5386 = vunpack.c.l.b16 %v5079
    %v5387 = vunpack.c.h.b16 %v5079
    %v5388 = vunpack.c.l.b16 %v5080
    %v5389 = vunpack.c.h.b16 %v5080
    %v5390 = vunpack.c.l.b16 %v5081
    %v5391 = vunpack.c.h.b16 %v5081
    %v5392 = vunpack.c.l.b16 %v5082
    %v5393 = vunpack.c.h.b16 %v5082
    %v5394 = vunpack.c.l.b16 %v5083
    %v5395 = vunpack.c.h.b16 %v5083
    %v5396 = vunpack.c.l.b16 %v5084
    %v5397 = vunpack.c.h.b16 %v5084
    %v5398 = vunpack.c.l.b16 %v5085
    %v5399 = vunpack.c.h.b16 %v5085
    %v5400 = vunpack.c.l.b16 %v5086
    %v5401 = vunpack.c.h.b16 %v5086
    %v5402 = vunpack.c.l.b16 %v5087
    %v5403 = vunpack.c.h.b16 %v5087
    %v5404 = vunpack.c.l.b16 %v5088
    %v5405 = vunpack.c.h.b16 %v5088
    %v5406 = vunpack.c.l.b16 %v5089
    %v5407 = vunpack.c.h.b16 %v5089
    %v5408 = vunpack.c.l.b16 %v5090
    %v5409 = vunpack.c.h.b16 %v5090
    %v5410 = vunpack.c.l.b16 %v5091
    %v5411 = vunpack.c.h.b16 %v5091
    %v5412 = vunpack.c.l.b16 %v5092
    %v5413 = vunpack.c.h.b16 %v5092
    %v5414 = vunpack.c.l.b16 %v5093
    %v5415 = vunpack.c.h.b16 %v5093
    %v5416 = vunpack.c.l.b16 %v5094
    %v5417 = vunpack.c.h.b16 %v5094
    %v5418 = vunpack.c.l.b16 %v5095
    %v5419 = vunpack.c.h.b16 %v5095
    %v5420 = vunpack.c.l.b16 %v5096
    %v5421 = vunpack.c.h.b16 %v5096
    %v5422 = vunpack.c.l.b16 %v5097
    %v5423 = vunpack.c.h.b16 %v5097
    %v5424 = vunpack.c.l.b16 %v5098
    %v5425 = vunpack.c.h.b16 %v5098
    %v5426 = vunpack.c.l.b16 %v5099
    %v5427 = vunpack.c.h.b16 %v5099
    %v5428 = vunpack.c.l.b16 %v5100
    %v5429 = vunpack.c.h.b16 %v5100
    %v5430 = vunpack.c.l.b16 %v5101
    %v5431 = vunpack.c.h.b16 %v5101
    %v5432 = vunpack.c.l.b16 %v5102
    %v5433 = vunpack.c.h.b16 %v5102
    %v5434 = vunpack.c.l.b16 %v5103
    %v5435 = vunpack.c.h.b16 %v5103
    %v5436 = vunpack.c.l.b16 %v5104
    %v5437 = vunpack.c.h.b16 %v5104
    %v5438 = vunpack.c.l.b16 %v5105
    %v5439 = vunpack.c.h.b16 %v5105
    %v5440 = vunpack.c.l.b16 %v5106
    %v5441 = vunpack.c.h.b16 %v5106
    %v5442 = vunpack.c.l.b16 %v5107
    %v5443 = vunpack.c.h.b16 %v5107
    %v5444 = vunpack.c.l.b16 %v5108
    %v5445 = vunpack.c.h.b16 %v5108
    %v5446 = vunpack.c.l.b16 %v5109
    %v5447 = vunpack.c.h.b16 %v5109
    %v5448 = vunpack.c.l.b16 %v5110
    %v5449 = vunpack.c.h.b16 %v5110
    %v5450 = vunpack.c.l.b16 %v5111
    %v5451 = vunpack.c.h.b16 %v5111
    %v5452 = vunpack.c.l.b16 %v5112
    %v5453 = vunpack.c.h.b16 %v5112
    %v5454 = vunpack.c.l.b16 %v5113
    %v5455 = vunpack.c.h.b16 %v5113
    %v5456 = vunpack.c.l.b16 %v5114
    %v5457 = vunpack.c.h.b16 %v5114
    %v5458 = vunpack.c.l.b16 %v5115
    %v5459 = vunpack.c.h.b16 %v5115
    %v5460 = vunpack.c.l.b16 %v5116
    %v5461 = vunpack.c.h.b16 %v5116
    %v5462 = vunpack.c.l.b16 %v5117
    %v5463 = vunpack.c.h.b16 %v5117
    %v5464 = vunpack.c.l.b16 %v5118
    %v5465 = vunpack.c.h.b16 %v5118
    %v5466 = vunpack.c.l.b16 %v5119
    %v5467 = vunpack.c.h.b16 %v5119
    %v5468 = vunpack.c.l.b16 %v5120
    %v5469 = vunpack.c.h.b16 %v5120
    %v5470 = vunpack.c.l.b16 %v5121
    %v5471 = vunpack.c.h.b16 %v5121
    %v5472 = vunpack.c.l.b16 %v5122
    %v5473 = vunpack.c.h.b16 %v5122
    %v5474 = vunpack.c.l.b16 %v5123
    %v5475 = vunpack.c.h.b16 %v5123
    %v5476 = vunpack.c.l.b16 %v5124
    %v5477 = vunpack.c.h.b16 %v5124
    %v5478 = vunpack.c.l.b16 %v5125
    %v5479 = vunpack.c.h.b16 %v5125
    %v5480 = vunpack.c.l.b16 %v5126
    %v5481 = vunpack.c.h.b16 %v5126
    %v5482 = vunpack.c.l.b16 %v5127
    %v5483 = vunpack.c.h.b16 %v5127
    %v5484 = vunpack.c.l.b16 %v5128
    %v5485 = vunpack.c.h.b16 %v5128
    %v5486 = vunpack.c.l.b16 %v5129
    %v5487 = vunpack.c.h.b16 %v5129
    %v5488 = vunpack.c.l.b16 %v5130
    %v5489 = vunpack.c.h.b16 %v5130
    %v5490 = vunpack.c.l.b16 %v5131
    %v5491 = vunpack.c.h.b16 %v5131
    %v5492 = vunpack.c.l.b16 %v5132
    %v5493 = vunpack.c.h.b16 %v5132
    %v5494 = vunpack.c.l.b16 %v5133
    %v5495 = vunpack.c.h.b16 %v5133
    %v5496 = vunpack.c.l.b16 %v5134
    %v5497 = vunpack.c.h.b16 %v5134
    %v5498 = vunpack.c.l.b16 %v5135
    %v5499 = vunpack.c.h.b16 %v5135
    %v5500 = vunpack.c.l.b16 %v5136
    %v5501 = vunpack.c.h.b16 %v5136
    %v5502 = vunpack.c.l.b16 %v5137
    %v5503 = vunpack.c.h.b16 %v5137
    %v5504 = vunpack.c.l.b16 %v5138
    %v5505 = vunpack.c.h.b16 %v5138
    %v5506 = vunpack.c.l.b16 %v5139
    %v5507 = vunpack.c.h.b16 %v5139
    %v5508 = vunpack.c.l.b16 %v5140
    %v5509 = vunpack.c.h.b16 %v5140
    %v5510 = vunpack.c.l.b16 %v5141
    %v5511 = vunpack.c.h.b16 %v5141
    %v5512 = vunpack.c.l.b16 %v5142
    %v5513 = vunpack.c.h.b16 %v5142
    %v5514 = vunpack.c.l.b16 %v5143
    %v5515 = vunpack.c.h.b16 %v5143
    %v5516 = vunpack.c.l.b16 %v5144
    %v5517 = vunpack.c.h.b16 %v5144
    %v5518 = vunpack.c.l.b16 %v5145
    %v5519 = vunpack.c.h.b16 %v5145
    %v5520 = vunpack.c.l.b16 %v5146
    %v5521 = vunpack.c.h.b16 %v5146
    %v5522 = vunpack.c.l.b16 %v5147
    %v5523 = vunpack.c.h.b16 %v5147
    %v5524 = vunpack.c.l.b16 %v5148
    %v5525 = vunpack.c.h.b16 %v5148
    %v5526 = vunpack.c.l.b16 %v5149
    %v5527 = vunpack.c.h.b16 %v5149
    %v5528 = vunpack.c.l.b16 %v5150
    %v5529 = vunpack.c.h.b16 %v5150
    %v5530 = vunpack.c.l.b16 %v5151
    %v5531 = vunpack.c.h.b16 %v5151
    %v5532 = vunpack.c.l.b16 %v5152
    %v5533 = vunpack.c.h.b16 %v5152
    %v5534 = vunpack.c.l.b16 %v5153
    %v5535 = vunpack.c.h.b16 %v5153
    %v5536 = vunpack.c.l.b16 %v5154
    %v5537 = vunpack.c.h.b16 %v5154
    %v5538 = vunpack.c.l.b16 %v5155
    %v5539 = vunpack.c.h.b16 %v5155
    %v5540 = vunpack.c.l.b16 %v5156
    %v5541 = vunpack.c.h.b16 %v5156
    %v5542 = vunpack.c.l.b16 %v5157
    %v5543 = vunpack.c.h.b16 %v5157
    %v5544 = vunpack.c.l.b16 %v5158
    %v5545 = vunpack.c.h.b16 %v5158
    %v5546 = vunpack.c.l.b16 %v5159
    %v5547 = vunpack.c.h.b16 %v5159
    %v5548 = vunpack.c.l.b16 %v5160
    %v5549 = vunpack.c.h.b16 %v5160
    %v5550 = vunpack.c.l.b16 %v5161
    %v5551 = vunpack.c.h.b16 %v5161
    %v5552 = vunpack.c.l.b16 %v5162
    %v5553 = vunpack.c.h.b16 %v5162
    %v5554 = vunpack.c.l.b16 %v5163
    %v5555 = vunpack.c.h.b16 %v5163
    %v5556 = vunpack.c.l.b16 %v5164
    %v5557 = vunpack.c.h.b16 %v5164
    %v5558 = vunpack.c.l.b16 %v5165
    %v5559 = vunpack.c.h.b16 %v5165
    %v5560 = vunpack.c.l.b16 %v5166
    %v5561 = vunpack.c.h.b16 %v5166
    %v5562 = vunpack.c.l.b16 %v5167
    %v5563 = vunpack.c.h.b16 %v5167
    %v5564 = vpack.c.b16 %v5310, %v5308
    %v5565 = vpack.c.b16 %v5311, %v5309
    %v5566 = vpack.c.b16 %v5314, %v5312
    %v5567 = vpack.c.b16 %v5315, %v5313
    %v5568 = vpack.c.b16 %v5318, %v5316
    %v5569 = vpack.c.b16 %v5319, %v5317
    %v5570 = vpack.c.b16 %v5322, %v5320
    %v5571 = vpack.c.b16 %v5323, %v5321
    %v5572 = vpack.c.b16 %v5326, %v5324
    %v5573 = vpack.c.b16 %v5327, %v5325
    %v5574 = vpack.c.b16 %v5330, %v5328
    %v5575 = vpack.c.b16 %v5331, %v5329
    %v5576 = vpack.c.b16 %v5334, %v5332
    %v5577 = vpack.c.b16 %v5335, %v5333
    %v5578 = vpack.c.b16 %v5338, %v5336
    %v5579 = vpack.c.b16 %v5339, %v5337
    %v5580 = vpack.c.b16 %v5342, %v5340
    %v5581 = vpack.c.b16 %v5343, %v5341
    %v5582 = vpack.c.b16 %v5346, %v5344
    %v5583 = vpack.c.b16 %v5347, %v5345
    %v5584 = vpack.c.b16 %v5350, %v5348
    %v5585 = vpack.c.b16 %v5351, %v5349
    %v5586 = vpack.c.b16 %v5354, %v5352
    %v5587 = vpack.c.b16 %v5355, %v5353
    %v5588 = vpack.c.b16 %v5358, %v5356
    %v5589 = vpack.c.b16 %v5359, %v5357
    %v5590 = vpack.c.b16 %v5362, %v5360
    %v5591 = vpack.c.b16 %v5363, %v5361
    %v5592 = vpack.c.b16 %v5366, %v5364
    %v5593 = vpack.c.b16 %v5367, %v5365
    %v5594 = vpack.c.b16 %v5370, %v5368
    %v5595 = vpack.c.b16 %v5371, %v5369
    %v5596 = vpack.c.b16 %v5374, %v5372
    %v5597 = vpack.c.b16 %v5375, %v5373
    %v5598 = vpack.c.b16 %v5378, %v5376
    %v5599 = vpack.c.b16 %v5379, %v5377
    %v5600 = vpack.c.b16 %v5382, %v5380
    %v5601 = vpack.c.b16 %v5383, %v5381
    %v5602 = vpack.c.b16 %v5386, %v5384
    %v5603 = vpack.c.b16 %v5387, %v5385
    %v5604 = vpack.c.b16 %v5390, %v5388
    %v5605 = vpack.c.b16 %v5391, %v5389
    %v5606 = vpack.c.b16 %v5394, %v5392
    %v5607 = vpack.c.b16 %v5395, %v5393
    %v5608 = vpack.c.b16 %v5398, %v5396
    %v5609 = vpack.c.b16 %v5399, %v5397
    %v5610 = vpack.c.b16 %v5402, %v5400
    %v5611 = vpack.c.b16 %v5403, %v5401
    %v5612 = vpack.c.b16 %v5406, %v5404
    %v5613 = vpack.c.b16 %v5407, %v5405
    %v5614 = vpack.c.b16 %v5410, %v5408
    %v5615 = vpack.c.b16 %v5411, %v5409
    %v5616 = vpack.c.b16 %v5414, %v5412
    %v5617 = vpack.c.b16 %v5415, %v5413
    %v5618 = vpack.c.b16 %v5418, %v5416
    %v5619 = vpack.c.b16 %v5419, %v5417
    %v5620 = vpack.c.b16 %v5422, %v5420
    %v5621 = vpack.c.b16 %v5423, %v5421
    %v5622 = vpack.c.b16 %v5426, %v5424
    %v5623 = vpack.c.b16 %v5427, %v5425
    %v5624 = vpack.c.b16 %v5430, %v5428
    %v5625 = vpack.c.b16 %v5431, %v5429
    %v5626 = vpack.c.b16 %v5434, %v5432
    %v5627 = vpack.c.b16 %v5435, %v5433
    %v5628 = vpack.c.b16 %v5438, %v5436
    %v5629 = vpack.c.b16 %v5439, %v5437
    %v5630 = vpack.c.b16 %v5442, %v5440
    %v5631 = vpack.c.b16 %v5443, %v5441
    %v5632 = vpack.c.b16 %v5446, %v5444
    %v5633 = vpack.c.b16 %v5447, %v5445
    %v5634 = vpack.c.b16 %v5450, %v5448
    %v5635 = vpack.c.b16 %v5451, %v5449
    %v5636 = vpack.c.b16 %v5454, %v5452
    %v5637 = vpack.c.b16 %v5455, %v5453
    %v5638 = vpack.c.b16 %v5458, %v5456
    %v5639 = vpack.c.b16 %v5459, %v5457
    %v5640 = vpack.c.b16 %v5462, %v5460
    %v5641 = vpack.c.b16 %v5463, %v5461
    %v5642 = vpack.c.b16 %v5466, %v5464
    %v5643 = vpack.c.b16 %v5467, %v5465
    %v5644 = vpack.c.b16 %v5470, %v5468
    %v5645 = vpack.c.b16 %v5471, %v5469
    %v5646 = vpack.c.b16 %v5474, %v5472
    %v5647 = vpack.c.b16 %v5475, %v5473
    %v5648 = vpack.c.b16 %v5478, %v5476
    %v5649 = vpack.c.b16 %v5479, %v5477
    %v5650 = vpack.c.b16 %v5482, %v5480
    %v5651 = vpack.c.b16 %v5483, %v5481
    %v5652 = vpack.c.b16 %v5486, %v5484
    %v5653 = vpack.c.b16 %v5487, %v5485
    %v5654 = vpack.c.b16 %v5490, %v5488
    %v5655 = vpack.c.b16 %v5491, %v5489
    %v5656 = vpack.c.b16 %v5494, %v5492
    %v5657 = vpack.c.b16 %v5495, %v5493
    %v5658 = vpack.c.b16 %v5498, %v5496
    %v5659 = vpack.c.b16 %v5499, %v5497
    %v5660 = vpack.c.b16 %v5502, %v5500
    %v5661 = vpack.c.b16 %v5503, %v5501
    %v5662 = vpack.c.b16 %v5506, %v5504
    %v5663 = vpack.c.b16 %v5507, %v5505
    %v5664 = vpack.c.b16 %v5510, %v5508
    %v5665 = vpack.c.b16 %v5511, %v5509
    %v5666 = vpack.c.b16 %v5514, %v5512
    %v5667 = vpack.c.b16 %v5515, %v5513
    %v5668 = vpack.c.b16 %v5518, %v5516
    %v5669 = vpack.c.b16 %v5519, %v5517
    %v5670 = vpack.c.b16 %v5522, %v5520
    %v5671 = vpack.c.b16 %v5523, %v5521
    %v5672 = vpack.c.b16 %v5526, %v5524
    %v5673 = vpack.c.b16 %v5527, %v5525
    %v5674 = vpack.c.b16 %v5530, %v5528
    %v5675 = vpack.c.b16 %v5531, %v5529
    %v5676 = vpack.c.b16 %v5534, %v5532
    %v5677 = vpack.c.b16 %v5535, %v5533
    %v5678 = vpack.c.b16 %v5538, %v5536
    %v5679 = vpack.c.b16 %v5539, %v5537
    %v5680 = vpack.c.b16 %v5542, %v5540
    %v5681 = vpack.c.b16 %v5543, %v5541
    %v5682 = vpack.c.b16 %v5546, %v5544
    %v5683 = vpack.c.b16 %v5547, %v5545
    %v5684 = vpack.c.b16 %v5550, %v5548
    %v5685 = vpack.c.b16 %v5551, %v5549
    %v5686 = vpack.c.b16 %v5554, %v5552
    %v5687 = vpack.c.b16 %v5555, %v5553
    %v5688 = vpack.c.b16 %v5558, %v5556
    %v5689 = vpack.c.b16 %v5559, %v5557
    %v5690 = vpack.c.b16 %v5562, %v5560
    %v5691 = vpack.c.b16 %v5563, %v5561
    %5820 = vmatprep.subr.bf16.mxu0 %v5565
    %5821 = vmatpush1.bf16.msra.mxu0 %v5564
    %5822 = vmatprep.subr.bf16.mxu0 %v5567
    %5823 = vmatpush1.bf16.msra.mxu0 %v5566
    %5824 = vmatprep.subr.bf16.mxu0 %v5569
    %5825 = vmatpush1.bf16.msra.mxu0 %v5568
    %5826 = vmatprep.subr.bf16.mxu0 %v5571
    %5827 = vmatpush1.bf16.msra.mxu0 %v5570
    %5828 = vmatprep.subr.bf16.mxu0 %v5573
    %5829 = vmatpush1.bf16.msra.mxu0 %v5572
    %5830 = vmatprep.subr.bf16.mxu0 %v5575
    %5831 = vmatpush1.bf16.msra.mxu0 %v5574
    %5832 = vmatprep.subr.bf16.mxu0 %v5577
    %5833 = vmatpush1.bf16.msra.mxu0 %v5576
    %5834 = vmatprep.subr.bf16.mxu0 %v5579
    %5835 = vmatpush1.bf16.msra.mxu0 %v5578
    %5836 = vmatprep.subr.bf16.mxu0 %v5581
    %5837 = vmatpush1.bf16.msra.mxu0 %v5580
    %5838 = vmatprep.subr.bf16.mxu0 %v5583
    %5839 = vmatpush1.bf16.msra.mxu0 %v5582
    %5840 = vmatprep.subr.bf16.mxu0 %v5585
    %5841 = vmatpush1.bf16.msra.mxu0 %v5584
    %5842 = vmatprep.subr.bf16.mxu0 %v5587
    %5843 = vmatpush1.bf16.msra.mxu0 %v5586
    %5844 = vmatprep.subr.bf16.mxu0 %v5589
    %5845 = vmatpush1.bf16.msra.mxu0 %v5588
    %5846 = vmatprep.subr.bf16.mxu0 %v5591
    %5847 = vmatpush1.bf16.msra.mxu0 %v5590
    %5848 = vmatprep.subr.bf16.mxu0 %v5593
    %5849 = vmatpush1.bf16.msra.mxu0 %v5592
    %5850 = vmatprep.subr.bf16.mxu0 %v5595
    %5851 = vmatpush1.bf16.msra.mxu0 %v5594
    %5852 = vmatprep.mubr.bf16.mxu0 %v5033
    %5853 = vmatmul.mubr.bf16.gmra.mrb[0].mxu0 %v5032
    %v5854 = vpop.f32.mrb[0].mxu0
    %v5855 = vadd.f32 %v5173, %v5854
    %v5856 = vpop.f32.mrb[0].mxu0
    %v5857 = vadd.f32 %v5177, %v5856
    %v5858 = vpop.f32.mrb[0].mxu0
    %v5859 = vpop.f32.mrb[0].mxu0
    %5860 = vdwg.mxu0
    %5861 = vmatprep.subr.bf16.mxu0 %v5597
    %5862 = vmatpush1.bf16.msra.mxu0 %v5596
    %5863 = vmatprep.subr.bf16.mxu0 %v5599
    %5864 = vmatpush1.bf16.msra.mxu0 %v5598
    %5865 = vmatprep.subr.bf16.mxu0 %v5601
    %5866 = vmatpush1.bf16.msra.mxu0 %v5600
    %5867 = vmatprep.subr.bf16.mxu0 %v5603
    %5868 = vmatpush1.bf16.msra.mxu0 %v5602
    %5869 = vmatprep.subr.bf16.mxu0 %v5605
    %5870 = vmatpush1.bf16.msra.mxu0 %v5604
    %5871 = vmatprep.subr.bf16.mxu0 %v5607
    %5872 = vmatpush1.bf16.msra.mxu0 %v5606
    %5873 = vmatprep.subr.bf16.mxu0 %v5609
    %5874 = vmatpush1.bf16.msra.mxu0 %v5608
    %5875 = vmatprep.subr.bf16.mxu0 %v5611
    %5876 = vmatpush1.bf16.msra.mxu0 %v5610
    %5877 = vmatprep.subr.bf16.mxu0 %v5613
    %5878 = vmatpush1.bf16.msra.mxu0 %v5612
    %5879 = vmatprep.subr.bf16.mxu0 %v5615
    %5880 = vmatpush1.bf16.msra.mxu0 %v5614
    %5881 = vmatprep.subr.bf16.mxu0 %v5617
    %5882 = vmatpush1.bf16.msra.mxu0 %v5616
    %5883 = vmatprep.subr.bf16.mxu0 %v5619
    %5884 = vmatpush1.bf16.msra.mxu0 %v5618
    %5885 = vmatprep.subr.bf16.mxu0 %v5621
    %5886 = vmatpush1.bf16.msra.mxu0 %v5620
    %5887 = vmatprep.subr.bf16.mxu0 %v5623
    %5888 = vmatpush1.bf16.msra.mxu0 %v5622
    %5889 = vmatprep.subr.bf16.mxu0 %v5625
    %5890 = vmatpush1.bf16.msra.mxu0 %v5624
    %5891 = vmatprep.subr.bf16.mxu0 %v5627
    %5892 = vmatpush1.bf16.msra.mxu0 %v5626
    %5893 = vmatprep.mubr.bf16.mxu0 %v5035
    %5894 = vmatmul.mubr.bf16.gmra.mrb[0].mxu0 %v5034
    %v5895 = vpop.f32.mrb[0].mxu0
    %v5896 = vadd.f32 %v5855, %v5895
    %v5897 = vpop.f32.mrb[0].mxu0
    %v5898 = vadd.f32 %v5857, %v5897
    %v5899 = vpop.f32.mrb[0].mxu0
    %v5900 = vpop.f32.mrb[0].mxu0
    %5901 = vdwg.mxu0
    %5902 = vmatprep.subr.bf16.mxu0 %v5629
    %5903 = vmatpush1.bf16.msra.mxu0 %v5628
    %5904 = vmatprep.subr.bf16.mxu0 %v5631
    %5905 = vmatpush1.bf16.msra.mxu0 %v5630
    %5906 = vmatprep.subr.bf16.mxu0 %v5633
    %5907 = vmatpush1.bf16.msra.mxu0 %v5632
    %5908 = vmatprep.subr.bf16.mxu0 %v5635
    %5909 = vmatpush1.bf16.msra.mxu0 %v5634
    %5910 = vmatprep.subr.bf16.mxu0 %v5637
    %5911 = vmatpush1.bf16.msra.mxu0 %v5636
    %5912 = vmatprep.subr.bf16.mxu0 %v5639
    %5913 = vmatpush1.bf16.msra.mxu0 %v5638
    %5914 = vmatprep.subr.bf16.mxu0 %v5641
    %5915 = vmatpush1.bf16.msra.mxu0 %v5640
    %5916 = vmatprep.subr.bf16.mxu0 %v5643
    %5917 = vmatpush1.bf16.msra.mxu0 %v5642
    %5918 = vmatprep.subr.bf16.mxu0 %v5645
    %5919 = vmatpush1.bf16.msra.mxu0 %v5644
    %5920 = vmatprep.subr.bf16.mxu0 %v5647
    %5921 = vmatpush1.bf16.msra.mxu0 %v5646
    %5922 = vmatprep.subr.bf16.mxu0 %v5649
    %5923 = vmatpush1.bf16.msra.mxu0 %v5648
    %5924 = vmatprep.subr.bf16.mxu0 %v5651
    %5925 = vmatpush1.bf16.msra.mxu0 %v5650
    %5926 = vmatprep.subr.bf16.mxu0 %v5653
    %5927 = vmatpush1.bf16.msra.mxu0 %v5652
    %5928 = vmatprep.subr.bf16.mxu0 %v5655
    %5929 = vmatpush1.bf16.msra.mxu0 %v5654
    %5930 = vmatprep.subr.bf16.mxu0 %v5657
    %5931 = vmatpush1.bf16.msra.mxu0 %v5656
    %5932 = vmatprep.subr.bf16.mxu0 %v5659
    %5933 = vmatpush1.bf16.msra.mxu0 %v5658
    %5934 = vmatprep.mubr.bf16.mxu0 %v5037
    %5935 = vmatmul.mubr.bf16.gmra.mrb[0].mxu0 %v5036
    %v5936 = vpop.f32.mrb[0].mxu0
    %v5937 = vadd.f32 %v5896, %v5936
    %v5938 = vpop.f32.mrb[0].mxu0
    %v5939 = vadd.f32 %v5898, %v5938
    %v5940 = vpop.f32.mrb[0].mxu0
    %v5941 = vpop.f32.mrb[0].mxu0
    %5942 = vdwg.mxu0
    %5943 = vmatprep.subr.bf16.mxu0 %v5661
    %5944 = vmatpush1.bf16.msra.mxu0 %v5660
    %5945 = vmatprep.subr.bf16.mxu0 %v5663
    %5946 = vmatpush1.bf16.msra.mxu0 %v5662
    %5947 = vmatprep.subr.bf16.mxu0 %v5665
    %5948 = vmatpush1.bf16.msra.mxu0 %v5664
    %5949 = vmatprep.subr.bf16.mxu0 %v5667
    %5950 = vmatpush1.bf16.msra.mxu0 %v5666
    %5951 = vmatprep.subr.bf16.mxu0 %v5669
    %5952 = vmatpush1.bf16.msra.mxu0 %v5668
    %5953 = vmatprep.subr.bf16.mxu0 %v5671
    %5954 = vmatpush1.bf16.msra.mxu0 %v5670
    %5955 = vmatprep.subr.bf16.mxu0 %v5673
    %5956 = vmatpush1.bf16.msra.mxu0 %v5672
    %5957 = vmatprep.subr.bf16.mxu0 %v5675
    %5958 = vmatpush1.bf16.msra.mxu0 %v5674
    %5959 = vmatprep.subr.bf16.mxu0 %v5677
    %5960 = vmatpush1.bf16.msra.mxu0 %v5676
    %5961 = vmatprep.subr.bf16.mxu0 %v5679
    %5962 = vmatpush1.bf16.msra.mxu0 %v5678
    %5963 = vmatprep.subr.bf16.mxu0 %v5681
    %5964 = vmatpush1.bf16.msra.mxu0 %v5680
    %5965 = vmatprep.subr.bf16.mxu0 %v5683
    %5966 = vmatpush1.bf16.msra.mxu0 %v5682
    %5967 = vmatprep.subr.bf16.mxu0 %v5685
    %5968 = vmatpush1.bf16.msra.mxu0 %v5684
    %5969 = vmatprep.subr.bf16.mxu0 %v5687
    %5970 = vmatpush1.bf16.msra.mxu0 %v5686
    %5971 = vmatprep.subr.bf16.mxu0 %v5689
    %5972 = vmatpush1.bf16.msra.mxu0 %v5688
    %5973 = vmatprep.subr.bf16.mxu0 %v5691
    %5974 = vmatpush1.bf16.msra.mxu0 %v5690
    %5975 = vmatprep.mubr.bf16.mxu0 %v5039
    %5976 = vmatmul.mubr.bf16.gmra.mrb[0].mxu0 %v5038
    %v5977 = vpop.f32.mrb[0].mxu0
    %v5978 = vadd.f32 %v5937, %v5977
    %v5979 = vpop.f32.mrb[0].mxu0
    %v5980 = vadd.f32 %v5939, %v5979
    %v5981 = vpop.f32.mrb[0].mxu0
    %v5982 = vpop.f32.mrb[0].mxu0
    %5983 = vdwg.mxu0
    %v5984 = vmax.f32 %v5978, 0.0
    %v5985 = vmax.f32 %v5980, 0.0
    %v5986 = vpack.c.bf16 %v5984, %v5984
    %v5987 = vpack.c.bf16 %v5985, %v5985
    %v5988 = vld [vmem:[#allocation17] sm:$0xf]
    %v5989 = vld [vmem:[#allocation17 + $0x4] sm:$0xf]
    %v5990 = vld [vmem:[#allocation17 + $0x8] sm:$0xf]
    %v5991 = vld [vmem:[#allocation17 + $0xc] sm:$0xf]
    %v5992 = vld [vmem:[#allocation17 + $0x10] sm:$0xf]
    %v5993 = vld [vmem:[#allocation17 + $0x14] sm:$0xf]
    %v5994 = vld [vmem:[#allocation17 + $0x18] sm:$0xf]
    %v5995 = vld [vmem:[#allocation17 + $0x1c] sm:$0xf]
    %v5996 = vld [vmem:[#allocation17 + $0x20] sm:$0xf]
    %v5997 = vld [vmem:[#allocation17 + $0x24] sm:$0xf]
    %v5998 = vld [vmem:[#allocation17 + $0x28] sm:$0xf]
    %v5999 = vld [vmem:[#allocation17 + $0x2c] sm:$0xf]
    %v6000 = vld [vmem:[#allocation17 + $0x30] sm:$0xf]
    %v6001 = vld [vmem:[#allocation17 + $0x34] sm:$0xf]
    %v6002 = vld [vmem:[#allocation17 + $0x38] sm:$0xf]
    %v6003 = vld [vmem:[#allocation17 + $0x3c] sm:$0xf]
    %v6004 = vld [vmem:[#allocation17 + $0x40] sm:$0xf]
    %v6005 = vld [vmem:[#allocation17 + $0x44] sm:$0xf]
    %v6006 = vld [vmem:[#allocation17 + $0x48] sm:$0xf]
    %v6007 = vld [vmem:[#allocation17 + $0x4c] sm:$0xf]
    %v6008 = vld [vmem:[#allocation17 + $0x50] sm:$0xf]
    %v6009 = vld [vmem:[#allocation17 + $0x54] sm:$0xf]
    %v6010 = vld [vmem:[#allocation17 + $0x58] sm:$0xf]
    %v6011 = vld [vmem:[#allocation17 + $0x5c] sm:$0xf]
    %v6012 = vld [vmem:[#allocation17 + $0x60] sm:$0xf]
    %v6013 = vld [vmem:[#allocation17 + $0x64] sm:$0xf]
    %v6014 = vld [vmem:[#allocation17 + $0x68] sm:$0xf]
    %v6015 = vld [vmem:[#allocation17 + $0x6c] sm:$0xf]
    %v6016 = vld [vmem:[#allocation17 + $0x70] sm:$0xf]
    %v6017 = vld [vmem:[#allocation17 + $0x74] sm:$0xf]
    %v6018 = vld [vmem:[#allocation17 + $0x78] sm:$0xf]
    %v6019 = vld [vmem:[#allocation17 + $0x7c] sm:$0xf]
    %v6020 = vld [vmem:[#allocation19] sm:$0x1]
    %v6022 = vlaneseq
    %v6023 = vshrl.u32 %v6022, 7
    %v6024 = vsub.s32 0, %v6023
    %v6025 = vrot.slane %v6020, %v6024
    %v6059 = vunpack.c.l.b16 %v5988
    %v6060 = vunpack.c.l.b16 %v5989
    %v6061 = vunpack.c.l.b16 %v5990
    %v6062 = vunpack.c.l.b16 %v5991
    %v6063 = vunpack.c.l.b16 %v5992
    %v6064 = vunpack.c.l.b16 %v5993
    %v6065 = vunpack.c.l.b16 %v5994
    %v6066 = vunpack.c.l.b16 %v5995
    %v6067 = vunpack.c.l.b16 %v5996
    %v6068 = vunpack.c.l.b16 %v5997
    %v6069 = vunpack.c.l.b16 %v5998
    %v6070 = vunpack.c.l.b16 %v5999
    %v6071 = vunpack.c.l.b16 %v6000
    %v6072 = vunpack.c.l.b16 %v6001
    %v6073 = vunpack.c.l.b16 %v6002
    %v6074 = vunpack.c.l.b16 %v6003
    %v6075 = vunpack.c.l.b16 %v6004
    %v6076 = vunpack.c.l.b16 %v6005
    %v6077 = vunpack.c.l.b16 %v6006
    %v6078 = vunpack.c.l.b16 %v6007
    %v6079 = vunpack.c.l.b16 %v6008
    %v6080 = vunpack.c.l.b16 %v6009
    %v6081 = vunpack.c.l.b16 %v6010
    %v6082 = vunpack.c.l.b16 %v6011
    %v6083 = vunpack.c.l.b16 %v6012
    %v6084 = vunpack.c.l.b16 %v6013
    %v6085 = vunpack.c.l.b16 %v6014
    %v6086 = vunpack.c.l.b16 %v6015
    %v6087 = vunpack.c.l.b16 %v6016
    %v6088 = vunpack.c.l.b16 %v6017
    %v6089 = vunpack.c.l.b16 %v6018
    %v6090 = vunpack.c.l.b16 %v6019
    %v6091 = vpack.c.b16 %v6060, %v6059
    %v6092 = vpack.c.b16 %v6062, %v6061
    %v6093 = vpack.c.b16 %v6064, %v6063
    %v6094 = vpack.c.b16 %v6066, %v6065
    %v6095 = vpack.c.b16 %v6068, %v6067
    %v6096 = vpack.c.b16 %v6070, %v6069
    %v6097 = vpack.c.b16 %v6072, %v6071
    %v6098 = vpack.c.b16 %v6074, %v6073
    %v6099 = vpack.c.b16 %v6076, %v6075
    %v6100 = vpack.c.b16 %v6078, %v6077
    %v6101 = vpack.c.b16 %v6080, %v6079
    %v6102 = vpack.c.b16 %v6082, %v6081
    %v6103 = vpack.c.b16 %v6084, %v6083
    %v6104 = vpack.c.b16 %v6086, %v6085
    %v6105 = vpack.c.b16 %v6088, %v6087
    %v6106 = vpack.c.b16 %v6090, %v6089
    %6123 = vmatprep.subr.bf16.mxu0 0
    %6124 = vmatpush1.bf16.msra.mxu0 %v6091
    %6125 = vmatprep.subr.bf16.mxu0 0
    %6126 = vmatpush1.bf16.msra.mxu0 %v6092
    %6127 = vmatprep.subr.bf16.mxu0 0
    %6128 = vmatpush1.bf16.msra.mxu0 %v6093
    %6129 = vmatprep.subr.bf16.mxu0 0
    %6130 = vmatpush1.bf16.msra.mxu0 %v6094
    %6131 = vmatprep.subr.bf16.mxu0 0
    %6132 = vmatpush1.bf16.msra.mxu0 %v6095
    %6133 = vmatprep.subr.bf16.mxu0 0
    %6134 = vmatpush1.bf16.msra.mxu0 %v6096
    %6135 = vmatprep.subr.bf16.mxu0 0
    %6136 = vmatpush1.bf16.msra.mxu0 %v6097
    %6137 = vmatprep.subr.bf16.mxu0 0
    %6138 = vmatpush1.bf16.msra.mxu0 %v6098
    %6139 = vmatprep.subr.bf16.mxu0 0
    %6140 = vmatpush1.bf16.msra.mxu0 %v6099
    %6141 = vmatprep.subr.bf16.mxu0 0
    %6142 = vmatpush1.bf16.msra.mxu0 %v6100
    %6143 = vmatprep.subr.bf16.mxu0 0
    %6144 = vmatpush1.bf16.msra.mxu0 %v6101
    %6145 = vmatprep.subr.bf16.mxu0 0
    %6146 = vmatpush1.bf16.msra.mxu0 %v6102
    %6147 = vmatprep.subr.bf16.mxu0 0
    %6148 = vmatpush1.bf16.msra.mxu0 %v6103
    %6149 = vmatprep.subr.bf16.mxu0 0
    %6150 = vmatpush1.bf16.msra.mxu0 %v6104
    %6151 = vmatprep.subr.bf16.mxu0 0
    %6152 = vmatpush1.bf16.msra.mxu0 %v6105
    %6153 = vmatprep.subr.bf16.mxu0 0
    %6154 = vmatpush1.bf16.msra.mxu0 %v6106
    %6155 = vmatprep.mubr.bf16.mxu0 %v5987
    %6156 = vmatmul.mubr.bf16.gmra.mrb[0].mxu0 %v5986
    %v6157 = vpop.f32.mrb[0].mxu0
    %v6158 = vadd.f32 %v6025, %v6157
    %v6159 = vpop.f32.mrb[0].mxu0
    %v6160 = vpop.f32.mrb[0].mxu0
    %v6161 = vpop.f32.mrb[0].mxu0
    %6162 = vdwg.mxu0
    %v6163 = vrot.slane %v6158, 4
    %v6164 = vmax.f32 %v6158, %v6163
    %v6165 = vrot.slane %v6164, 2
    %v6166 = vmax.f32 %v6164, %v6165
    %v6167 = vrot.slane %v6166, 1
    %v6168 = vmax.f32 %v6166, %v6167
    %v6169 = vsub.f32 %v6158, %v6168
    %v6170 = vmul.f32 %v6169, 1.442695
    %v6171 = vpow.pop %v6170
    %v6172 = vrot.slane %v6171, 4
    %v6173 = vadd.f32 %v6171, %v6172
    %v6174 = vrot.slane %v6173, 2
    %v6175 = vadd.f32 %v6173, %v6174
    %v6176 = vrot.slane %v6175, 1
    %v6177 = vadd.f32 %v6175, %v6176
    %v6178 = vrcp.pop %v6177
    %v6179 = vmul.f32 %v6171, %v6178
    %6180 = vst [vmem:[#allocation20] sm:$0xff] %v6179
    // Predicated region
    $region90: #{tpu_custom_call.1} parent=1 // pred_check
      _
    $region91: #{tpu_custom_call.1} parent=1 // pred_check_branch
      %6182 = sbr.rel (0) target = $region93
    $region92: #{tpu_custom_call.1} parent=1 // pred_region
      %s6184 = ssub.s32 128, 128
      %6185 = vsyncadd [#allocation4], %s6184
      %s6187 = sshll.u32 [#allocation20], 4
      %s6188 = int_to_ptr.vmem [resolvable:$true] %s6187
      %6190 = dma.vmem_to_hbm [thread:$0]  %s6188, 128, %s11, [#allocation4]
    $region93: #{tpu_custom_call.1} parent=1 // pred_fallthru
      _
    // Predicated region
    $region94: #{tpu_custom_call.1} parent=1 // pred_check
      _
    $region95: #{tpu_custom_call.1} parent=1 // pred_check_branch
      %6192 = sbr.rel (0) target = $region97
    $region96: #{tpu_custom_call.1} parent=1 // pred_region
      %6193 = dma.done [#allocation4], 128
    $region97: #{tpu_custom_call.1} parent=1 // pred_fallthru
      _
    %6194 = vsyncpa [#allocation3], 1
    %6195 = vsyncpa [#allocation6], 1
    %6196 = vsyncpa [#allocation9], 1
    %6197 = vsyncpa [#allocation12], 1
    %6198 = vsyncpa [#allocation15], 1
    %6199 = vsyncpa [#allocation18], 1
    %6200 = vsyncpa [#allocation4], 1

</llo_original>
